<compile_context>
chip_gen: v6e
topology: v6e:2x2x1
jax: 0.10.0
libtpu: 0.0.40
codegen_flags: <defaults>
</compile_context>

<pallas_src>
import functools

import jax
import jax.numpy as jnp
from jax import lax
from jax.experimental import pallas as pl
from jax.experimental.pallas import tpu as pltpu

BN_EPS = 1e-5

_R0 = 8        # sublane-aligned row offset of the tile interior in the scratch
_C0 = 128      # lane-aligned column offset of the tile interior in the scratch
_W_STRIP = 512 # in-kernel W strip width (keeps per-strip accumulators in vregs)


def _conv_bn_relu_kernel(w_ref, bias_ref, x_ref, xt_ref, xb_ref, o_ref,
                         xpad_ref, *, k):
    """Fused same-padded KxK conv + folded BatchNorm + ReLU for one H strip.

    w_ref    : (Cin*K*K*Cout,) f32 SMEM  BN-scale-folded weights, (ci,dy,dx,co)
    bias_ref : (Cout,)         f32 SMEM  beta + (conv_b - mean) * scale
    x_ref    : (1, Cin, tile_h, W) VMEM  main input strip (rows i*tile_h ..)
    xt_ref   : (1, Cin, subh,  W)  VMEM  block just above the strip (clamped)
    xb_ref   : (1, Cin, subh,  W)  VMEM  block just below the strip (clamped)
    o_ref    : (1, Cout, tile_h, W) VMEM output strip
    xpad_ref : (Cin, _R0+tile_h+pad, _C0+W+pad) f32 VMEM halo scratch
    """
    _, cin, th, w = x_ref.shape
    _, cout, _, _ = o_ref.shape
    subh = xt_ref.shape[2]
    pad = k // 2
    i = pl.program_id(1)
    n_h = pl.num_programs(1)

    r_lo, r_hi = _R0 - pad, _R0 + th + pad    # used row window in scratch
    c_lo = _C0 - pad                          # used col window starts here

    # ---- halo-only zeroing: just the pad-wide column strips (re-done every
    # step so it is megacore-safe; do NOT turn this into a one-time init). ----
    for ci in range(cin):
        xpad_ref[ci, r_lo:r_hi, c_lo:_C0] = jnp.zeros(
            (th + 2 * pad, pad), jnp.float32)
        xpad_ref[ci, r_lo:r_hi, _C0 + w:_C0 + w + pad] = jnp.zeros(
            (th + 2 * pad, pad), jnp.float32)

    # ---- stage the strip interior at an (8,128)-aligned offset (plain
    # aligned stores; see header note on why staging beats masking here). ----
    for ci in range(cin):
        xpad_ref[ci, _R0:_R0 + th, _C0:_C0 + w] = (
            x_ref[0, ci].astype(jnp.float32))

    # ---- top halo rows: neighbour data, or zeros at the sample boundary ----
    @pl.when(i == 0)
    def _():
        for ci in range(cin):
            xpad_ref[ci, r_lo:_R0, _C0:_C0 + w] = jnp.zeros((pad, w),
                                                            jnp.float32)

    @pl.when(i > 0)
    def _():
        for ci in range(cin):
            xpad_ref[ci, r_lo:_R0, _C0:_C0 + w] = (
                xt_ref[0, ci, subh - pad:subh, :].astype(jnp.float32))

    # ---- bottom halo rows ----
    @pl.when(i == n_h - 1)
    def _():
        for ci in range(cin):
            xpad_ref[ci, _R0 + th:r_hi, _C0:_C0 + w] = jnp.zeros(
                (pad, w), jnp.float32)

    @pl.when(i < n_h - 1)
    def _():
        for ci in range(cin):
            xpad_ref[ci, _R0 + th:r_hi, _C0:_C0 + w] = (
                xb_ref[0, ci, 0:pad, :].astype(jnp.float32))

    # ---- direct conv as VPU broadcast-FMAs, strip-tiled along W so the
    # per-strip accumulators (cout x (th, sw) f32) stay in the vreg file.
    # Each (ci,dy,dx) tap patch is loaded once and reused for every co. ----
    for c0 in range(0, w, _W_STRIP):
        sw = min(_W_STRIP, w - c0)
        accs = [jnp.zeros((th, sw), jnp.float32) for _ in range(cout)]
        for ci in range(cin):
            for dy in range(k):
                row0 = r_lo + dy
                for dx in range(k):
                    col0 = c_lo + dx + c0
                    patch = xpad_ref[ci, row0:row0 + th, col0:col0 + sw]
                    base = ((ci * k + dy) * k + dx) * cout
                    for co in range(cout):
                        accs[co] = accs[co] + w_ref[base + co] * patch
        # Folded-BN bias + ReLU epilogue (scale already folded into weights).
        for co in range(cout):
            o_ref[0, co, :, c0:c0 + sw] = jnp.maximum(
                accs[co] + bias_ref[co], 0.0).astype(o_ref.dtype)


def conv_bn_relu(x_nchw, layer_params, k):
    """One Conv2d(k, stride=1, pad=k//2) + BN(eval) + ReLU block via Pallas."""
    assert k % 2 == 1, "DenseTFC same-padding conv assumes odd kernel size"
    n, cin, h, w = x_nchw.shape
    cout = layer_params["bias"].shape[0]
    pad = k // 2

    # H tiling: 8-row strips when H allows it, else one whole-H tile.
    if h % 8 == 0:
        tile_h, subh = 8, 8
    else:
        tile_h, subh = h, h
    assert pad <= subh and pad <= _R0 and pad <= _C0
    n_h = h // tile_h
    n_sub = h // subh
    r = tile_h // subh           # halo sub-blocks per tile (== 1 here)

    kernel = functools.partial(_conv_bn_relu_kernel, k=k)

    def smem_spec(arr):
        return pl.BlockSpec(arr.shape, lambda b, i: (0,) * arr.ndim,
                            memory_space=pltpu.MemorySpace.SMEM)

    x_spec = pl.BlockSpec((1, cin, tile_h, w), lambda b, i: (b, 0, i, 0))
    # Halo carriers: the 8-row block just above / below the strip; the index
    # is clamped at the sample boundary (the kernel substitutes zeros there).
    top_spec = pl.BlockSpec(
        (1, cin, subh, w),
        lambda b, i: (b, 0, jnp.maximum(i * r - 1, 0), 0))
    bot_spec = pl.BlockSpec(
        (1, cin, subh, w),
        lambda b, i: (b, 0, jnp.minimum((i + 1) * r, n_sub - 1), 0))
    out_spec = pl.BlockSpec((1, cout, tile_h, w), lambda b, i: (b, 0, i, 0))

    # Per-step VMEM budget: double-buffered blocks + scratch.  Sized against
    # the 32 MiB scoped limit so the same tiling also fits v7x (64 MiB phys).
    itm = x_nchw.dtype.itemsize
    blk_bytes = itm * (cin * tile_h * w + 2 * cin * subh * w
                       + cout * tile_h * w)
    scratch_bytes = 4 * cin * (_R0 + tile_h + pad) * (_C0 + w + pad)
    vmem_limit = 32 * 1024 * 1024
    assert 2 * blk_bytes + scratch_bytes < vmem_limit - (4 << 20), (
        "H tile too large for the VMEM budget; shrink tile_h")

    return pl.pallas_call(
        kernel,
        out_shape=jax.ShapeDtypeStruct((n, cout, h, w), x_nchw.dtype),
        grid=(n, n_h),
        in_specs=[
            smem_spec(layer_params["w_flat"]),
            smem_spec(layer_params["bias"]),
            x_spec, top_spec, bot_spec,
        ],
        out_specs=out_spec,
        scratch_shapes=[
            pltpu.VMEM((cin, _R0 + tile_h + pad, _C0 + w + pad), jnp.float32),
        ],
        compiler_params=pltpu.CompilerParams(
            dimension_semantics=("parallel", "parallel"),
            vmem_limit_bytes=vmem_limit),
    )(layer_params["w_flat"], layer_params["bias"], x_nchw, x_nchw, x_nchw)


def prepare_layer_params(p):
    """One-time param prep: fold conv bias + BatchNorm(eval) into the conv.

    scale = gamma / sqrt(var + eps) is folded INTO the weights, so the kernel
    epilogue is only add-bias + ReLU.  Weights are flattened to a
    (ci, dy, dx, co) SMEM scalar table."""
    inv_std = 1.0 / jnp.sqrt(p["var"] + BN_EPS)
    scale = p["gamma"] * inv_std                              # (Cout,)
    bias = p["beta"] + (p["conv_b"] - p["mean"]) * scale      # (Cout,)
    w_scaled = p["w_oihw"] * scale[:, None, None, None]       # OIHW * scale_o
    w_flat = jnp.transpose(w_scaled, (1, 2, 3, 0)).reshape(-1)
    return {"w_flat": w_flat.astype(jnp.float32),
            "bias": bias.astype(jnp.float32)}


def init_dense_tfc_params(key, c, l, k):
    """Mirror DenseTFC.__init__: l x [Conv2d(c->c, k) + BatchNorm2d(c)]."""
    params = []
    for _ in range(l):
        key, kw, kb, kg, kbe, km, kv = jax.random.split(key, 7)
        params.append(dict(
            w_oihw=0.1 * jax.random.normal(kw, (c, c, k, k), jnp.float32),
            conv_b=0.1 * jax.random.normal(kb, (c,), jnp.float32),
            gamma=1.0 + 0.1 * jax.random.normal(kg, (c,), jnp.float32),
            beta=0.1 * jax.random.normal(kbe, (c,), jnp.float32),
            mean=0.1 * jax.random.normal(km, (c,), jnp.float32),
            var=1.0 + 0.1 * jnp.abs(jax.random.normal(kv, (c,), jnp.float32)),
        ))
    return params


def dense_tfc_forward(x_nchw, prepped_params, k):
    """DenseTFC.forward (NCHW, same as PyTorch):
    for layer in conv[:-1]: x = cat([layer(x), x], dim=1); return conv[-1](x)."""
    x = x_nchw
    for lp in prepped_params[:-1]:
        y = conv_bn_relu(x, lp, k)
        # TODO(synk): for l > 1, write y straight into a preallocated
        # (Cout+Cin)-channel buffer (channel-offset out index_map +
        # input_output_aliases for the passthrough channels) instead of this
        # concat; kept as plain-JAX glue since DenseTFC's fixed in_channels=c
        # makes l > 1 shape-inconsistent in the original PyTorch module anyway.
        x = jnp.concatenate([y, x], axis=1)
    return conv_bn_relu(x, prepped_params[-1], k)


def dense_tfc_reference(x_nchw, params, k):
    """Pure-JAX reference (lax.conv) for correctness checking."""
    pad = k // 2

    def apply_layer(x, p):
        y = lax.conv_general_dilated(
            x, p["w_oihw"], window_strides=(1, 1),
            padding=[(pad, pad), (pad, pad)],
            dimension_numbers=("NCHW", "OIHW", "NCHW"))
        y = y + p["conv_b"][None, :, None, None]
        y = (y - p["mean"][None, :, None, None]) / jnp.sqrt(
            p["var"][None, :, None, None] + BN_EPS)
        y = y * p["gamma"][None, :, None, None] + p["beta"][None, :, None, None]
        return jnp.maximum(y, 0.0)

    x = x_nchw
    for p in params[:-1]:
        x = jnp.concatenate([apply_layer(x, p), x], axis=1)
    return apply_layer(x, params[-1])


if __name__ == "__main__":
    # NOTE: the original DenseTFC fixes every conv at in_channels=c, so its
    # dense-concat forward is only shape-consistent for l == 1 (for l > 1 the
    # second conv would receive 2*c channels and PyTorch itself would error).
    # The demo therefore uses l=1; the concat loop is still implemented.
    N, C, H, W = 2, 4, 16, 16
    L, K = 1, 3

    key = jax.random.PRNGKey(0)
    key, kx = jax.random.split(key)
    x = jax.random.normal(kx, (N, C, H, W), jnp.float32)
    params = init_dense_tfc_params(key, C, L, K)
    prepped = [prepare_layer_params(p) for p in params]   # prep ONCE, offline

    out = jax.block_until_ready(dense_tfc_forward(x, prepped, K))
    ref = jax.block_until_ready(dense_tfc_reference(x, params, K))

    assert out.shape == (N, C, H, W), out.shape
    max_err = float(jnp.max(jnp.abs(out - ref)))
    assert jnp.allclose(out, ref, atol=1e-4, rtol=1e-4), max_err
    print("KERNEL_OK")
</pallas_src>

<mosaic_0001>
module attributes {stable_mosaic.version = 11 : i64} {
  func.func @_conv_bn_relu_kernel(%arg0: i32, %arg1: i32, %arg2: memref<144xf32, #tpu.memory_space<smem>>, %arg3: memref<4xf32, #tpu.memory_space<smem>>, %arg4: memref<1x4x8x16xf32, #tpu.memory_space<vmem>>, %arg5: memref<1x4x8x16xf32, #tpu.memory_space<vmem>>, %arg6: memref<1x4x8x16xf32, #tpu.memory_space<vmem>>, %arg7: memref<1x4x8x16xf32, #tpu.memory_space<vmem>>, %arg8: memref<4x17x145xf32, #tpu.memory_space<vmem>>) attributes {dimension_semantics = [#tpu.dimension_semantics<parallel>, #tpu.dimension_semantics<parallel>], iteration_bounds = array<i64: 2, 2>, scalar_prefetch = 0 : i64, scratch_operands = 1 : i64, tpu.core_type = #tpu.core_type<tc>, window_params = [{transform_indices = @transform_0, window_bounds = array<i64: 144>}, {transform_indices = @transform_1, window_bounds = array<i64: 4>}, {transform_indices = @transform_2, window_bounds = array<i64: 1, 4, 8, 16>}, {transform_indices = @transform_3, window_bounds = array<i64: 1, 4, 8, 16>}, {transform_indices = @transform_4, window_bounds = array<i64: 1, 4, 8, 16>}, {transform_indices = @transform_5, window_bounds = array<i64: 1, 4, 8, 16>}]} {
    %cst = arith.constant 0.000000e+00 : f32
    %0 = vector.broadcast %cst : f32 to vector<10x1xf32>
    %c0 = arith.constant 0 : index
    %c7 = arith.constant 7 : index
    %c127 = arith.constant 127 : index
    %1 = vector.load %arg8[%c0, %c7, %c127] : memref<4x17x145xf32, #tpu.memory_space<vmem>>, vector<1x10x1xf32>
    %2 = vector.shape_cast %1 : vector<1x10x1xf32> to vector<10x1xf32>
    %3 = vector.shape_cast %0 : vector<10x1xf32> to vector<1x10x1xf32>
    tpu.vector_store %arg8[%c0, %c7, %c127], %3 {strides = array<i32>} : memref<4x17x145xf32, #tpu.memory_space<vmem>>, vector<1x10x1xf32>,
    %cst_0 = arith.constant 0.000000e+00 : f32
    %4 = vector.broadcast %cst_0 : f32 to vector<10x1xf32>
    %c0_1 = arith.constant 0 : index
    %c7_2 = arith.constant 7 : index
    %c144 = arith.constant 144 : index
    %5 = vector.load %arg8[%c0_1, %c7_2, %c144] : memref<4x17x145xf32, #tpu.memory_space<vmem>>, vector<1x10x1xf32>
    %6 = vector.shape_cast %5 : vector<1x10x1xf32> to vector<10x1xf32>
    %7 = vector.shape_cast %4 : vector<10x1xf32> to vector<1x10x1xf32>
    tpu.vector_store %arg8[%c0_1, %c7_2, %c144], %7 {strides = array<i32>} : memref<4x17x145xf32, #tpu.memory_space<vmem>>, vector<1x10x1xf32>,
    %cst_3 = arith.constant 0.000000e+00 : f32
    %8 = vector.broadcast %cst_3 : f32 to vector<10x1xf32>
    %c1 = arith.constant 1 : index
    %c7_4 = arith.constant 7 : index
    %c127_5 = arith.constant 127 : index
    %9 = vector.load %arg8[%c1, %c7_4, %c127_5] : memref<4x17x145xf32, #tpu.memory_space<vmem>>, vector<1x10x1xf32>
    %10 = vector.shape_cast %9 : vector<1x10x1xf32> to vector<10x1xf32>
    %11 = vector.shape_cast %8 : vector<10x1xf32> to vector<1x10x1xf32>
    tpu.vector_store %arg8[%c1, %c7_4, %c127_5], %11 {strides = array<i32>} : memref<4x17x145xf32, #tpu.memory_space<vmem>>, vector<1x10x1xf32>,
    %cst_6 = arith.constant 0.000000e+00 : f32
    %12 = vector.broadcast %cst_6 : f32 to vector<10x1xf32>
    %c1_7 = arith.constant 1 : index
    %c7_8 = arith.constant 7 : index
    %c144_9 = arith.constant 144 : index
    %13 = vector.load %arg8[%c1_7, %c7_8, %c144_9] : memref<4x17x145xf32, #tpu.memory_space<vmem>>, vector<1x10x1xf32>
    %14 = vector.shape_cast %13 : vector<1x10x1xf32> to vector<10x1xf32>
    %15 = vector.shape_cast %12 : vector<10x1xf32> to vector<1x10x1xf32>
    tpu.vector_store %arg8[%c1_7, %c7_8, %c144_9], %15 {strides = array<i32>} : memref<4x17x145xf32, #tpu.memory_space<vmem>>, vector<1x10x1xf32>,
    %cst_10 = arith.constant 0.000000e+00 : f32
    %16 = vector.broadcast %cst_10 : f32 to vector<10x1xf32>
    %c2 = arith.constant 2 : index
    %c7_11 = arith.constant 7 : index
    %c127_12 = arith.constant 127 : index
    %17 = vector.load %arg8[%c2, %c7_11, %c127_12] : memref<4x17x145xf32, #tpu.memory_space<vmem>>, vector<1x10x1xf32>
    %18 = vector.shape_cast %17 : vector<1x10x1xf32> to vector<10x1xf32>
    %19 = vector.shape_cast %16 : vector<10x1xf32> to vector<1x10x1xf32>
    tpu.vector_store %arg8[%c2, %c7_11, %c127_12], %19 {strides = array<i32>} : memref<4x17x145xf32, #tpu.memory_space<vmem>>, vector<1x10x1xf32>,
    %cst_13 = arith.constant 0.000000e+00 : f32
    %20 = vector.broadcast %cst_13 : f32 to vector<10x1xf32>
    %c2_14 = arith.constant 2 : index
    %c7_15 = arith.constant 7 : index
    %c144_16 = arith.constant 144 : index
    %21 = vector.load %arg8[%c2_14, %c7_15, %c144_16] : memref<4x17x145xf32, #tpu.memory_space<vmem>>, vector<1x10x1xf32>
    %22 = vector.shape_cast %21 : vector<1x10x1xf32> to vector<10x1xf32>
    %23 = vector.shape_cast %20 : vector<10x1xf32> to vector<1x10x1xf32>
    tpu.vector_store %arg8[%c2_14, %c7_15, %c144_16], %23 {strides = array<i32>} : memref<4x17x145xf32, #tpu.memory_space<vmem>>, vector<1x10x1xf32>,
    %cst_17 = arith.constant 0.000000e+00 : f32
    %24 = vector.broadcast %cst_17 : f32 to vector<10x1xf32>
    %c3 = arith.constant 3 : index
    %c7_18 = arith.constant 7 : index
    %c127_19 = arith.constant 127 : index
    %25 = vector.load %arg8[%c3, %c7_18, %c127_19] : memref<4x17x145xf32, #tpu.memory_space<vmem>>, vector<1x10x1xf32>
    %26 = vector.shape_cast %25 : vector<1x10x1xf32> to vector<10x1xf32>
    %27 = vector.shape_cast %24 : vector<10x1xf32> to vector<1x10x1xf32>
    tpu.vector_store %arg8[%c3, %c7_18, %c127_19], %27 {strides = array<i32>} : memref<4x17x145xf32, #tpu.memory_space<vmem>>, vector<1x10x1xf32>,
    %cst_20 = arith.constant 0.000000e+00 : f32
    %28 = vector.broadcast %cst_20 : f32 to vector<10x1xf32>
    %c3_21 = arith.constant 3 : index
    %c7_22 = arith.constant 7 : index
    %c144_23 = arith.constant 144 : index
    %29 = vector.load %arg8[%c3_21, %c7_22, %c144_23] : memref<4x17x145xf32, #tpu.memory_space<vmem>>, vector<1x10x1xf32>
    %30 = vector.shape_cast %29 : vector<1x10x1xf32> to vector<10x1xf32>
    %31 = vector.shape_cast %28 : vector<10x1xf32> to vector<1x10x1xf32>
    tpu.vector_store %arg8[%c3_21, %c7_22, %c144_23], %31 {strides = array<i32>} : memref<4x17x145xf32, #tpu.memory_space<vmem>>, vector<1x10x1xf32>,
    %c0_24 = arith.constant 0 : index
    %c0_25 = arith.constant 0 : index
    %c0_26 = arith.constant 0 : index
    %c0_27 = arith.constant 0 : index
    %32 = vector.load %arg4[%c0_24, %c0_25, %c0_26, %c0_27] : memref<1x4x8x16xf32, #tpu.memory_space<vmem>>, vector<1x1x8x16xf32>
    %33 = vector.shape_cast %32 : vector<1x1x8x16xf32> to vector<8x16xf32>
    %c0_28 = arith.constant 0 : index
    %c8 = arith.constant 8 : index
    %c128 = arith.constant 128 : index
    %34 = vector.load %arg8[%c0_28, %c8, %c128] : memref<4x17x145xf32, #tpu.memory_space<vmem>>, vector<1x8x16xf32>
    %35 = vector.shape_cast %34 : vector<1x8x16xf32> to vector<8x16xf32>
    %36 = vector.shape_cast %33 : vector<8x16xf32> to vector<1x8x16xf32>
    tpu.vector_store %arg8[%c0_28, %c8, %c128], %36 {strides = array<i32>} : memref<4x17x145xf32, #tpu.memory_space<vmem>>, vector<1x8x16xf32>,
    %c0_29 = arith.constant 0 : index
    %c1_30 = arith.constant 1 : index
    %c0_31 = arith.constant 0 : index
    %c0_32 = arith.constant 0 : index
    %37 = vector.load %arg4[%c0_29, %c1_30, %c0_31, %c0_32] : memref<1x4x8x16xf32, #tpu.memory_space<vmem>>, vector<1x1x8x16xf32>
    %38 = vector.shape_cast %37 : vector<1x1x8x16xf32> to vector<8x16xf32>
    %c1_33 = arith.constant 1 : index
    %c8_34 = arith.constant 8 : index
    %c128_35 = arith.constant 128 : index
    %39 = vector.load %arg8[%c1_33, %c8_34, %c128_35] : memref<4x17x145xf32, #tpu.memory_space<vmem>>, vector<1x8x16xf32>
    %40 = vector.shape_cast %39 : vector<1x8x16xf32> to vector<8x16xf32>
    %41 = vector.shape_cast %38 : vector<8x16xf32> to vector<1x8x16xf32>
    tpu.vector_store %arg8[%c1_33, %c8_34, %c128_35], %41 {strides = array<i32>} : memref<4x17x145xf32, #tpu.memory_space<vmem>>, vector<1x8x16xf32>,
    %c0_36 = arith.constant 0 : index
    %c2_37 = arith.constant 2 : index
    %c0_38 = arith.constant 0 : index
    %c0_39 = arith.constant 0 : index
    %42 = vector.load %arg4[%c0_36, %c2_37, %c0_38, %c0_39] : memref<1x4x8x16xf32, #tpu.memory_space<vmem>>, vector<1x1x8x16xf32>
    %43 = vector.shape_cast %42 : vector<1x1x8x16xf32> to vector<8x16xf32>
    %c2_40 = arith.constant 2 : index
    %c8_41 = arith.constant 8 : index
    %c128_42 = arith.constant 128 : index
    %44 = vector.load %arg8[%c2_40, %c8_41, %c128_42] : memref<4x17x145xf32, #tpu.memory_space<vmem>>, vector<1x8x16xf32>
    %45 = vector.shape_cast %44 : vector<1x8x16xf32> to vector<8x16xf32>
    %46 = vector.shape_cast %43 : vector<8x16xf32> to vector<1x8x16xf32>
    tpu.vector_store %arg8[%c2_40, %c8_41, %c128_42], %46 {strides = array<i32>} : memref<4x17x145xf32, #tpu.memory_space<vmem>>, vector<1x8x16xf32>,
    %c0_43 = arith.constant 0 : index
    %c3_44 = arith.constant 3 : index
    %c0_45 = arith.constant 0 : index
    %c0_46 = arith.constant 0 : index
    %47 = vector.load %arg4[%c0_43, %c3_44, %c0_45, %c0_46] : memref<1x4x8x16xf32, #tpu.memory_space<vmem>>, vector<1x1x8x16xf32>
    %48 = vector.shape_cast %47 : vector<1x1x8x16xf32> to vector<8x16xf32>
    %c3_47 = arith.constant 3 : index
    %c8_48 = arith.constant 8 : index
    %c128_49 = arith.constant 128 : index
    %49 = vector.load %arg8[%c3_47, %c8_48, %c128_49] : memref<4x17x145xf32, #tpu.memory_space<vmem>>, vector<1x8x16xf32>
    %50 = vector.shape_cast %49 : vector<1x8x16xf32> to vector<8x16xf32>
    %51 = vector.shape_cast %48 : vector<8x16xf32> to vector<1x8x16xf32>
    tpu.vector_store %arg8[%c3_47, %c8_48, %c128_49], %51 {strides = array<i32>} : memref<4x17x145xf32, #tpu.memory_space<vmem>>, vector<1x8x16xf32>,
    %c0_i32 = arith.constant 0 : i32
    %52 = arith.cmpi eq, %arg1, %c0_i32 : i32
    %53 = arith.extui %52 : i1 to i32
    %c0_i32_50 = arith.constant 0 : i32
    %54 = arith.cmpi ne, %53, %c0_i32_50 : i32
    scf.if %54 {
      %cst_200 = arith.constant 0.000000e+00 : f32
      %748 = vector.broadcast %cst_200 : f32 to vector<1x16xf32>
      %c0_201 = arith.constant 0 : index
      %c7_202 = arith.constant 7 : index
      %c128_203 = arith.constant 128 : index
      %749 = vector.load %arg8[%c0_201, %c7_202, %c128_203] : memref<4x17x145xf32, #tpu.memory_space<vmem>>, vector<1x1x16xf32>
      %750 = vector.shape_cast %749 : vector<1x1x16xf32> to vector<1x16xf32>
      %751 = vector.shape_cast %748 : vector<1x16xf32> to vector<1x1x16xf32>
      tpu.vector_store %arg8[%c0_201, %c7_202, %c128_203], %751 {strides = array<i32>} : memref<4x17x145xf32, #tpu.memory_space<vmem>>, vector<1x1x16xf32>,
      %cst_204 = arith.constant 0.000000e+00 : f32
      %752 = vector.broadcast %cst_204 : f32 to vector<1x16xf32>
      %c1_205 = arith.constant 1 : index
      %c7_206 = arith.constant 7 : index
      %c128_207 = arith.constant 128 : index
      %753 = vector.load %arg8[%c1_205, %c7_206, %c128_207] : memref<4x17x145xf32, #tpu.memory_space<vmem>>, vector<1x1x16xf32>
      %754 = vector.shape_cast %753 : vector<1x1x16xf32> to vector<1x16xf32>
      %755 = vector.shape_cast %752 : vector<1x16xf32> to vector<1x1x16xf32>
      tpu.vector_store %arg8[%c1_205, %c7_206, %c128_207], %755 {strides = array<i32>} : memref<4x17x145xf32, #tpu.memory_space<vmem>>, vector<1x1x16xf32>,
      %cst_208 = arith.constant 0.000000e+00 : f32
      %756 = vector.broadcast %cst_208 : f32 to vector<1x16xf32>
      %c2_209 = arith.constant 2 : index
      %c7_210 = arith.constant 7 : index
      %c128_211 = arith.constant 128 : index
      %757 = vector.load %arg8[%c2_209, %c7_210, %c128_211] : memref<4x17x145xf32, #tpu.memory_space<vmem>>, vector<1x1x16xf32>
      %758 = vector.shape_cast %757 : vector<1x1x16xf32> to vector<1x16xf32>
      %759 = vector.shape_cast %756 : vector<1x16xf32> to vector<1x1x16xf32>
      tpu.vector_store %arg8[%c2_209, %c7_210, %c128_211], %759 {strides = array<i32>} : memref<4x17x145xf32, #tpu.memory_space<vmem>>, vector<1x1x16xf32>,
      %cst_212 = arith.constant 0.000000e+00 : f32
      %760 = vector.broadcast %cst_212 : f32 to vector<1x16xf32>
      %c3_213 = arith.constant 3 : index
      %c7_214 = arith.constant 7 : index
      %c128_215 = arith.constant 128 : index
      %761 = vector.load %arg8[%c3_213, %c7_214, %c128_215] : memref<4x17x145xf32, #tpu.memory_space<vmem>>, vector<1x1x16xf32>
      %762 = vector.shape_cast %761 : vector<1x1x16xf32> to vector<1x16xf32>
      %763 = vector.shape_cast %760 : vector<1x16xf32> to vector<1x1x16xf32>
      tpu.vector_store %arg8[%c3_213, %c7_214, %c128_215], %763 {strides = array<i32>} : memref<4x17x145xf32, #tpu.memory_space<vmem>>, vector<1x1x16xf32>,
    } else {
    }
    %c0_i32_51 = arith.constant 0 : i32
    %55 = arith.cmpi sgt, %arg1, %c0_i32_51 : i32
    %56 = arith.extui %55 : i1 to i32
    %c0_i32_52 = arith.constant 0 : i32
    %57 = arith.cmpi ne, %56, %c0_i32_52 : i32
    scf.if %57 {
      %c0_200 = arith.constant 0 : index
      %c0_201 = arith.constant 0 : index
      %c7_202 = arith.constant 7 : index
      %c0_203 = arith.constant 0 : index
      %748 = vector.load %arg5[%c0_200, %c0_201, %c7_202, %c0_203] : memref<1x4x8x16xf32, #tpu.memory_space<vmem>>, vector<1x1x1x16xf32>
      %749 = vector.shape_cast %748 : vector<1x1x1x16xf32> to vector<1x16xf32>
      %c0_204 = arith.constant 0 : index
      %c7_205 = arith.constant 7 : index
      %c128_206 = arith.constant 128 : index
      %750 = vector.load %arg8[%c0_204, %c7_205, %c128_206] : memref<4x17x145xf32, #tpu.memory_space<vmem>>, vector<1x1x16xf32>
      %751 = vector.shape_cast %750 : vector<1x1x16xf32> to vector<1x16xf32>
      %752 = vector.shape_cast %749 : vector<1x16xf32> to vector<1x1x16xf32>
      tpu.vector_store %arg8[%c0_204, %c7_205, %c128_206], %752 {strides = array<i32>} : memref<4x17x145xf32, #tpu.memory_space<vmem>>, vector<1x1x16xf32>,
      %c0_207 = arith.constant 0 : index
      %c1_208 = arith.constant 1 : index
      %c7_209 = arith.constant 7 : index
      %c0_210 = arith.constant 0 : index
      %753 = vector.load %arg5[%c0_207, %c1_208, %c7_209, %c0_210] : memref<1x4x8x16xf32, #tpu.memory_space<vmem>>, vector<1x1x1x16xf32>
      %754 = vector.shape_cast %753 : vector<1x1x1x16xf32> to vector<1x16xf32>
      %c1_211 = arith.constant 1 : index
      %c7_212 = arith.constant 7 : index
      %c128_213 = arith.constant 128 : index
      %755 = vector.load %arg8[%c1_211, %c7_212, %c128_213] : memref<4x17x145xf32, #tpu.memory_space<vmem>>, vector<1x1x16xf32>
      %756 = vector.shape_cast %755 : vector<1x1x16xf32> to vector<1x16xf32>
      %757 = vector.shape_cast %754 : vector<1x16xf32> to vector<1x1x16xf32>
      tpu.vector_store %arg8[%c1_211, %c7_212, %c128_213], %757 {strides = array<i32>} : memref<4x17x145xf32, #tpu.memory_space<vmem>>, vector<1x1x16xf32>,
      %c0_214 = arith.constant 0 : index
      %c2_215 = arith.constant 2 : index
      %c7_216 = arith.constant 7 : index
      %c0_217 = arith.constant 0 : index
      %758 = vector.load %arg5[%c0_214, %c2_215, %c7_216, %c0_217] : memref<1x4x8x16xf32, #tpu.memory_space<vmem>>, vector<1x1x1x16xf32>
      %759 = vector.shape_cast %758 : vector<1x1x1x16xf32> to vector<1x16xf32>
      %c2_218 = arith.constant 2 : index
      %c7_219 = arith.constant 7 : index
      %c128_220 = arith.constant 128 : index
      %760 = vector.load %arg8[%c2_218, %c7_219, %c128_220] : memref<4x17x145xf32, #tpu.memory_space<vmem>>, vector<1x1x16xf32>
      %761 = vector.shape_cast %760 : vector<1x1x16xf32> to vector<1x16xf32>
      %762 = vector.shape_cast %759 : vector<1x16xf32> to vector<1x1x16xf32>
      tpu.vector_store %arg8[%c2_218, %c7_219, %c128_220], %762 {strides = array<i32>} : memref<4x17x145xf32, #tpu.memory_space<vmem>>, vector<1x1x16xf32>,
      %c0_221 = arith.constant 0 : index
      %c3_222 = arith.constant 3 : index
      %c7_223 = arith.constant 7 : index
      %c0_224 = arith.constant 0 : index
      %763 = vector.load %arg5[%c0_221, %c3_222, %c7_223, %c0_224] : memref<1x4x8x16xf32, #tpu.memory_space<vmem>>, vector<1x1x1x16xf32>
      %764 = vector.shape_cast %763 : vector<1x1x1x16xf32> to vector<1x16xf32>
      %c3_225 = arith.constant 3 : index
      %c7_226 = arith.constant 7 : index
      %c128_227 = arith.constant 128 : index
      %765 = vector.load %arg8[%c3_225, %c7_226, %c128_227] : memref<4x17x145xf32, #tpu.memory_space<vmem>>, vector<1x1x16xf32>
      %766 = vector.shape_cast %765 : vector<1x1x16xf32> to vector<1x16xf32>
      %767 = vector.shape_cast %764 : vector<1x16xf32> to vector<1x1x16xf32>
      tpu.vector_store %arg8[%c3_225, %c7_226, %c128_227], %767 {strides = array<i32>} : memref<4x17x145xf32, #tpu.memory_space<vmem>>, vector<1x1x16xf32>,
    } else {
    }
    %c1_i32 = arith.constant 1 : i32
    %58 = arith.cmpi eq, %arg1, %c1_i32 : i32
    %59 = arith.extui %58 : i1 to i32
    %c0_i32_53 = arith.constant 0 : i32
    %60 = arith.cmpi ne, %59, %c0_i32_53 : i32
    scf.if %60 {
      %cst_200 = arith.constant 0.000000e+00 : f32
      %748 = vector.broadcast %cst_200 : f32 to vector<1x16xf32>
      %c0_201 = arith.constant 0 : index
      %c16_202 = arith.constant 16 : index
      %c128_203 = arith.constant 128 : index
      %749 = vector.load %arg8[%c0_201, %c16_202, %c128_203] : memref<4x17x145xf32, #tpu.memory_space<vmem>>, vector<1x1x16xf32>
      %750 = vector.shape_cast %749 : vector<1x1x16xf32> to vector<1x16xf32>
      %751 = vector.shape_cast %748 : vector<1x16xf32> to vector<1x1x16xf32>
      tpu.vector_store %arg8[%c0_201, %c16_202, %c128_203], %751 {strides = array<i32>} : memref<4x17x145xf32, #tpu.memory_space<vmem>>, vector<1x1x16xf32>,
      %cst_204 = arith.constant 0.000000e+00 : f32
      %752 = vector.broadcast %cst_204 : f32 to vector<1x16xf32>
      %c1_205 = arith.constant 1 : index
      %c16_206 = arith.constant 16 : index
      %c128_207 = arith.constant 128 : index
      %753 = vector.load %arg8[%c1_205, %c16_206, %c128_207] : memref<4x17x145xf32, #tpu.memory_space<vmem>>, vector<1x1x16xf32>
      %754 = vector.shape_cast %753 : vector<1x1x16xf32> to vector<1x16xf32>
      %755 = vector.shape_cast %752 : vector<1x16xf32> to vector<1x1x16xf32>
      tpu.vector_store %arg8[%c1_205, %c16_206, %c128_207], %755 {strides = array<i32>} : memref<4x17x145xf32, #tpu.memory_space<vmem>>, vector<1x1x16xf32>,
      %cst_208 = arith.constant 0.000000e+00 : f32
      %756 = vector.broadcast %cst_208 : f32 to vector<1x16xf32>
      %c2_209 = arith.constant 2 : index
      %c16_210 = arith.constant 16 : index
      %c128_211 = arith.constant 128 : index
      %757 = vector.load %arg8[%c2_209, %c16_210, %c128_211] : memref<4x17x145xf32, #tpu.memory_space<vmem>>, vector<1x1x16xf32>
      %758 = vector.shape_cast %757 : vector<1x1x16xf32> to vector<1x16xf32>
      %759 = vector.shape_cast %756 : vector<1x16xf32> to vector<1x1x16xf32>
      tpu.vector_store %arg8[%c2_209, %c16_210, %c128_211], %759 {strides = array<i32>} : memref<4x17x145xf32, #tpu.memory_space<vmem>>, vector<1x1x16xf32>,
      %cst_212 = arith.constant 0.000000e+00 : f32
      %760 = vector.broadcast %cst_212 : f32 to vector<1x16xf32>
      %c3_213 = arith.constant 3 : index
      %c16_214 = arith.constant 16 : index
      %c128_215 = arith.constant 128 : index
      %761 = vector.load %arg8[%c3_213, %c16_214, %c128_215] : memref<4x17x145xf32, #tpu.memory_space<vmem>>, vector<1x1x16xf32>
      %762 = vector.shape_cast %761 : vector<1x1x16xf32> to vector<1x16xf32>
      %763 = vector.shape_cast %760 : vector<1x16xf32> to vector<1x1x16xf32>
      tpu.vector_store %arg8[%c3_213, %c16_214, %c128_215], %763 {strides = array<i32>} : memref<4x17x145xf32, #tpu.memory_space<vmem>>, vector<1x1x16xf32>,
    } else {
    }
    %c1_i32_54 = arith.constant 1 : i32
    %61 = arith.cmpi slt, %arg1, %c1_i32_54 : i32
    %62 = arith.extui %61 : i1 to i32
    %c0_i32_55 = arith.constant 0 : i32
    %63 = arith.cmpi ne, %62, %c0_i32_55 : i32
    scf.if %63 {
      %c0_200 = arith.constant 0 : index
      %c0_201 = arith.constant 0 : index
      %c0_202 = arith.constant 0 : index
      %c0_203 = arith.constant 0 : index
      %748 = vector.load %arg6[%c0_200, %c0_201, %c0_202, %c0_203] : memref<1x4x8x16xf32, #tpu.memory_space<vmem>>, vector<1x1x1x16xf32>
      %749 = vector.shape_cast %748 : vector<1x1x1x16xf32> to vector<1x16xf32>
      %c0_204 = arith.constant 0 : index
      %c16_205 = arith.constant 16 : index
      %c128_206 = arith.constant 128 : index
      %750 = vector.load %arg8[%c0_204, %c16_205, %c128_206] : memref<4x17x145xf32, #tpu.memory_space<vmem>>, vector<1x1x16xf32>
      %751 = vector.shape_cast %750 : vector<1x1x16xf32> to vector<1x16xf32>
      %752 = vector.shape_cast %749 : vector<1x16xf32> to vector<1x1x16xf32>
      tpu.vector_store %arg8[%c0_204, %c16_205, %c128_206], %752 {strides = array<i32>} : memref<4x17x145xf32, #tpu.memory_space<vmem>>, vector<1x1x16xf32>,
      %c0_207 = arith.constant 0 : index
      %c1_208 = arith.constant 1 : index
      %c0_209 = arith.constant 0 : index
      %c0_210 = arith.constant 0 : index
      %753 = vector.load %arg6[%c0_207, %c1_208, %c0_209, %c0_210] : memref<1x4x8x16xf32, #tpu.memory_space<vmem>>, vector<1x1x1x16xf32>
      %754 = vector.shape_cast %753 : vector<1x1x1x16xf32> to vector<1x16xf32>
      %c1_211 = arith.constant 1 : index
      %c16_212 = arith.constant 16 : index
      %c128_213 = arith.constant 128 : index
      %755 = vector.load %arg8[%c1_211, %c16_212, %c128_213] : memref<4x17x145xf32, #tpu.memory_space<vmem>>, vector<1x1x16xf32>
      %756 = vector.shape_cast %755 : vector<1x1x16xf32> to vector<1x16xf32>
      %757 = vector.shape_cast %754 : vector<1x16xf32> to vector<1x1x16xf32>
      tpu.vector_store %arg8[%c1_211, %c16_212, %c128_213], %757 {strides = array<i32>} : memref<4x17x145xf32, #tpu.memory_space<vmem>>, vector<1x1x16xf32>,
      %c0_214 = arith.constant 0 : index
      %c2_215 = arith.constant 2 : index
      %c0_216 = arith.constant 0 : index
      %c0_217 = arith.constant 0 : index
      %758 = vector.load %arg6[%c0_214, %c2_215, %c0_216, %c0_217] : memref<1x4x8x16xf32, #tpu.memory_space<vmem>>, vector<1x1x1x16xf32>
      %759 = vector.shape_cast %758 : vector<1x1x1x16xf32> to vector<1x16xf32>
      %c2_218 = arith.constant 2 : index
      %c16_219 = arith.constant 16 : index
      %c128_220 = arith.constant 128 : index
      %760 = vector.load %arg8[%c2_218, %c16_219, %c128_220] : memref<4x17x145xf32, #tpu.memory_space<vmem>>, vector<1x1x16xf32>
      %761 = vector.shape_cast %760 : vector<1x1x16xf32> to vector<1x16xf32>
      %762 = vector.shape_cast %759 : vector<1x16xf32> to vector<1x1x16xf32>
      tpu.vector_store %arg8[%c2_218, %c16_219, %c128_220], %762 {strides = array<i32>} : memref<4x17x145xf32, #tpu.memory_space<vmem>>, vector<1x1x16xf32>,
      %c0_221 = arith.constant 0 : index
      %c3_222 = arith.constant 3 : index
      %c0_223 = arith.constant 0 : index
      %c0_224 = arith.constant 0 : index
      %763 = vector.load %arg6[%c0_221, %c3_222, %c0_223, %c0_224] : memref<1x4x8x16xf32, #tpu.memory_space<vmem>>, vector<1x1x1x16xf32>
      %764 = vector.shape_cast %763 : vector<1x1x1x16xf32> to vector<1x16xf32>
      %c3_225 = arith.constant 3 : index
      %c16_226 = arith.constant 16 : index
      %c128_227 = arith.constant 128 : index
      %765 = vector.load %arg8[%c3_225, %c16_226, %c128_227] : memref<4x17x145xf32, #tpu.memory_space<vmem>>, vector<1x1x16xf32>
      %766 = vector.shape_cast %765 : vector<1x1x16xf32> to vector<1x16xf32>
      %767 = vector.shape_cast %764 : vector<1x16xf32> to vector<1x1x16xf32>
      tpu.vector_store %arg8[%c3_225, %c16_226, %c128_227], %767 {strides = array<i32>} : memref<4x17x145xf32, #tpu.memory_space<vmem>>, vector<1x1x16xf32>,
    } else {
    }
    %cst_56 = arith.constant 0.000000e+00 : f32
    %64 = vector.broadcast %cst_56 : f32 to vector<8x16xf32>
    %cst_57 = arith.constant 0.000000e+00 : f32
    %65 = vector.broadcast %cst_57 : f32 to vector<8x16xf32>
    %cst_58 = arith.constant 0.000000e+00 : f32
    %66 = vector.broadcast %cst_58 : f32 to vector<8x16xf32>
    %cst_59 = arith.constant 0.000000e+00 : f32
    %67 = vector.broadcast %cst_59 : f32 to vector<8x16xf32>
    %c0_60 = arith.constant 0 : index
    %c7_61 = arith.constant 7 : index
    %c127_62 = arith.constant 127 : index
    %68 = vector.load %arg8[%c0_60, %c7_61, %c127_62] : memref<4x17x145xf32, #tpu.memory_space<vmem>>, vector<1x8x16xf32>
    %69 = vector.shape_cast %68 : vector<1x8x16xf32> to vector<8x16xf32>
    %c0_63 = arith.constant 0 : index
    %70 = memref.load %arg2[%c0_63] : memref<144xf32, #tpu.memory_space<smem>>
    %71 = vector.broadcast %70 : f32 to vector<8x16xf32>
    %72 = arith.mulf %71, %69 : vector<8x16xf32>
    %73 = arith.addf %64, %72 : vector<8x16xf32>
    %c1_64 = arith.constant 1 : index
    %74 = memref.load %arg2[%c1_64] : memref<144xf32, #tpu.memory_space<smem>>
    %75 = vector.broadcast %74 : f32 to vector<8x16xf32>
    %76 = arith.mulf %75, %69 : vector<8x16xf32>
    %77 = arith.addf %65, %76 : vector<8x16xf32>
    %c2_65 = arith.constant 2 : index
    %78 = memref.load %arg2[%c2_65] : memref<144xf32, #tpu.memory_space<smem>>
    %79 = vector.broadcast %78 : f32 to vector<8x16xf32>
    %80 = arith.mulf %79, %69 : vector<8x16xf32>
    %81 = arith.addf %66, %80 : vector<8x16xf32>
    %c3_66 = arith.constant 3 : index
    %82 = memref.load %arg2[%c3_66] : memref<144xf32, #tpu.memory_space<smem>>
    %83 = vector.broadcast %82 : f32 to vector<8x16xf32>
    %84 = arith.mulf %83, %69 : vector<8x16xf32>
    %85 = arith.addf %67, %84 : vector<8x16xf32>
    %c0_67 = arith.constant 0 : index
    %c7_68 = arith.constant 7 : index
    %c128_69 = arith.constant 128 : index
    %86 = vector.load %arg8[%c0_67, %c7_68, %c128_69] : memref<4x17x145xf32, #tpu.memory_space<vmem>>, vector<1x8x16xf32>
    %87 = vector.shape_cast %86 : vector<1x8x16xf32> to vector<8x16xf32>
    %c4 = arith.constant 4 : index
    %88 = memref.load %arg2[%c4] : memref<144xf32, #tpu.memory_space<smem>>
    %89 = vector.broadcast %88 : f32 to vector<8x16xf32>
    %90 = arith.mulf %89, %87 : vector<8x16xf32>
    %91 = arith.addf %73, %90 : vector<8x16xf32>
    %c5 = arith.constant 5 : index
    %92 = memref.load %arg2[%c5] : memref<144xf32, #tpu.memory_space<smem>>
    %93 = vector.broadcast %92 : f32 to vector<8x16xf32>
    %94 = arith.mulf %93, %87 : vector<8x16xf32>
    %95 = arith.addf %77, %94 : vector<8x16xf32>
    %c6 = arith.constant 6 : index
    %96 = memref.load %arg2[%c6] : memref<144xf32, #tpu.memory_space<smem>>
    %97 = vector.broadcast %96 : f32 to vector<8x16xf32>
    %98 = arith.mulf %97, %87 : vector<8x16xf32>
    %99 = arith.addf %81, %98 : vector<8x16xf32>
    %c7_70 = arith.constant 7 : index
    %100 = memref.load %arg2[%c7_70] : memref<144xf32, #tpu.memory_space<smem>>
    %101 = vector.broadcast %100 : f32 to vector<8x16xf32>
    %102 = arith.mulf %101, %87 : vector<8x16xf32>
    %103 = arith.addf %85, %102 : vector<8x16xf32>
    %c0_71 = arith.constant 0 : index
    %c7_72 = arith.constant 7 : index
    %c129 = arith.constant 129 : index
    %104 = vector.load %arg8[%c0_71, %c7_72, %c129] : memref<4x17x145xf32, #tpu.memory_space<vmem>>, vector<1x8x16xf32>
    %105 = vector.shape_cast %104 : vector<1x8x16xf32> to vector<8x16xf32>
    %c8_73 = arith.constant 8 : index
    %106 = memref.load %arg2[%c8_73] : memref<144xf32, #tpu.memory_space<smem>>
    %107 = vector.broadcast %106 : f32 to vector<8x16xf32>
    %108 = arith.mulf %107, %105 : vector<8x16xf32>
    %109 = arith.addf %91, %108 : vector<8x16xf32>
    %c9 = arith.constant 9 : index
    %110 = memref.load %arg2[%c9] : memref<144xf32, #tpu.memory_space<smem>>
    %111 = vector.broadcast %110 : f32 to vector<8x16xf32>
    %112 = arith.mulf %111, %105 : vector<8x16xf32>
    %113 = arith.addf %95, %112 : vector<8x16xf32>
    %c10 = arith.constant 10 : index
    %114 = memref.load %arg2[%c10] : memref<144xf32, #tpu.memory_space<smem>>
    %115 = vector.broadcast %114 : f32 to vector<8x16xf32>
    %116 = arith.mulf %115, %105 : vector<8x16xf32>
    %117 = arith.addf %99, %116 : vector<8x16xf32>
    %c11 = arith.constant 11 : index
    %118 = memref.load %arg2[%c11] : memref<144xf32, #tpu.memory_space<smem>>
    %119 = vector.broadcast %118 : f32 to vector<8x16xf32>
    %120 = arith.mulf %119, %105 : vector<8x16xf32>
    %121 = arith.addf %103, %120 : vector<8x16xf32>
    %c0_74 = arith.constant 0 : index
    %c8_75 = arith.constant 8 : index
    %c127_76 = arith.constant 127 : index
    %122 = vector.load %arg8[%c0_74, %c8_75, %c127_76] : memref<4x17x145xf32, #tpu.memory_space<vmem>>, vector<1x8x16xf32>
    %123 = vector.shape_cast %122 : vector<1x8x16xf32> to vector<8x16xf32>
    %c12 = arith.constant 12 : index
    %124 = memref.load %arg2[%c12] : memref<144xf32, #tpu.memory_space<smem>>
    %125 = vector.broadcast %124 : f32 to vector<8x16xf32>
    %126 = arith.mulf %125, %123 : vector<8x16xf32>
    %127 = arith.addf %109, %126 : vector<8x16xf32>
    %c13 = arith.constant 13 : index
    %128 = memref.load %arg2[%c13] : memref<144xf32, #tpu.memory_space<smem>>
    %129 = vector.broadcast %128 : f32 to vector<8x16xf32>
    %130 = arith.mulf %129, %123 : vector<8x16xf32>
    %131 = arith.addf %113, %130 : vector<8x16xf32>
    %c14 = arith.constant 14 : index
    %132 = memref.load %arg2[%c14] : memref<144xf32, #tpu.memory_space<smem>>
    %133 = vector.broadcast %132 : f32 to vector<8x16xf32>
    %134 = arith.mulf %133, %123 : vector<8x16xf32>
    %135 = arith.addf %117, %134 : vector<8x16xf32>
    %c15 = arith.constant 15 : index
    %136 = memref.load %arg2[%c15] : memref<144xf32, #tpu.memory_space<smem>>
    %137 = vector.broadcast %136 : f32 to vector<8x16xf32>
    %138 = arith.mulf %137, %123 : vector<8x16xf32>
    %139 = arith.addf %121, %138 : vector<8x16xf32>
    %c0_77 = arith.constant 0 : index
    %c8_78 = arith.constant 8 : index
    %c128_79 = arith.constant 128 : index
    %140 = vector.load %arg8[%c0_77, %c8_78, %c128_79] : memref<4x17x145xf32, #tpu.memory_space<vmem>>, vector<1x8x16xf32>
    %141 = vector.shape_cast %140 : vector<1x8x16xf32> to vector<8x16xf32>
    %c16 = arith.constant 16 : index
    %142 = memref.load %arg2[%c16] : memref<144xf32, #tpu.memory_space<smem>>
    %143 = vector.broadcast %142 : f32 to vector<8x16xf32>
    %144 = arith.mulf %143, %141 : vector<8x16xf32>
    %145 = arith.addf %127, %144 : vector<8x16xf32>
    %c17 = arith.constant 17 : index
    %146 = memref.load %arg2[%c17] : memref<144xf32, #tpu.memory_space<smem>>
    %147 = vector.broadcast %146 : f32 to vector<8x16xf32>
    %148 = arith.mulf %147, %141 : vector<8x16xf32>
    %149 = arith.addf %131, %148 : vector<8x16xf32>
    %c18 = arith.constant 18 : index
    %150 = memref.load %arg2[%c18] : memref<144xf32, #tpu.memory_space<smem>>
    %151 = vector.broadcast %150 : f32 to vector<8x16xf32>
    %152 = arith.mulf %151, %141 : vector<8x16xf32>
    %153 = arith.addf %135, %152 : vector<8x16xf32>
    %c19 = arith.constant 19 : index
    %154 = memref.load %arg2[%c19] : memref<144xf32, #tpu.memory_space<smem>>
    %155 = vector.broadcast %154 : f32 to vector<8x16xf32>
    %156 = arith.mulf %155, %141 : vector<8x16xf32>
    %157 = arith.addf %139, %156 : vector<8x16xf32>
    %c0_80 = arith.constant 0 : index
    %c8_81 = arith.constant 8 : index
    %c129_82 = arith.constant 129 : index
    %158 = vector.load %arg8[%c0_80, %c8_81, %c129_82] : memref<4x17x145xf32, #tpu.memory_space<vmem>>, vector<1x8x16xf32>
    %159 = vector.shape_cast %158 : vector<1x8x16xf32> to vector<8x16xf32>
    %c20 = arith.constant 20 : index
    %160 = memref.load %arg2[%c20] : memref<144xf32, #tpu.memory_space<smem>>
    %161 = vector.broadcast %160 : f32 to vector<8x16xf32>
    %162 = arith.mulf %161, %159 : vector<8x16xf32>
    %163 = arith.addf %145, %162 : vector<8x16xf32>
    %c21 = arith.constant 21 : index
    %164 = memref.load %arg2[%c21] : memref<144xf32, #tpu.memory_space<smem>>
    %165 = vector.broadcast %164 : f32 to vector<8x16xf32>
    %166 = arith.mulf %165, %159 : vector<8x16xf32>
    %167 = arith.addf %149, %166 : vector<8x16xf32>
    %c22 = arith.constant 22 : index
    %168 = memref.load %arg2[%c22] : memref<144xf32, #tpu.memory_space<smem>>
    %169 = vector.broadcast %168 : f32 to vector<8x16xf32>
    %170 = arith.mulf %169, %159 : vector<8x16xf32>
    %171 = arith.addf %153, %170 : vector<8x16xf32>
    %c23 = arith.constant 23 : index
    %172 = memref.load %arg2[%c23] : memref<144xf32, #tpu.memory_space<smem>>
    %173 = vector.broadcast %172 : f32 to vector<8x16xf32>
    %174 = arith.mulf %173, %159 : vector<8x16xf32>
    %175 = arith.addf %157, %174 : vector<8x16xf32>
    %c0_83 = arith.constant 0 : index
    %c9_84 = arith.constant 9 : index
    %c127_85 = arith.constant 127 : index
    %176 = vector.load %arg8[%c0_83, %c9_84, %c127_85] : memref<4x17x145xf32, #tpu.memory_space<vmem>>, vector<1x8x16xf32>
    %177 = vector.shape_cast %176 : vector<1x8x16xf32> to vector<8x16xf32>
    %c24 = arith.constant 24 : index
    %178 = memref.load %arg2[%c24] : memref<144xf32, #tpu.memory_space<smem>>
    %179 = vector.broadcast %178 : f32 to vector<8x16xf32>
    %180 = arith.mulf %179, %177 : vector<8x16xf32>
    %181 = arith.addf %163, %180 : vector<8x16xf32>
    %c25 = arith.constant 25 : index
    %182 = memref.load %arg2[%c25] : memref<144xf32, #tpu.memory_space<smem>>
    %183 = vector.broadcast %182 : f32 to vector<8x16xf32>
    %184 = arith.mulf %183, %177 : vector<8x16xf32>
    %185 = arith.addf %167, %184 : vector<8x16xf32>
    %c26 = arith.constant 26 : index
    %186 = memref.load %arg2[%c26] : memref<144xf32, #tpu.memory_space<smem>>
    %187 = vector.broadcast %186 : f32 to vector<8x16xf32>
    %188 = arith.mulf %187, %177 : vector<8x16xf32>
    %189 = arith.addf %171, %188 : vector<8x16xf32>
    %c27 = arith.constant 27 : index
    %190 = memref.load %arg2[%c27] : memref<144xf32, #tpu.memory_space<smem>>
    %191 = vector.broadcast %190 : f32 to vector<8x16xf32>
    %192 = arith.mulf %191, %177 : vector<8x16xf32>
    %193 = arith.addf %175, %192 : vector<8x16xf32>
    %c0_86 = arith.constant 0 : index
    %c9_87 = arith.constant 9 : index
    %c128_88 = arith.constant 128 : index
    %194 = vector.load %arg8[%c0_86, %c9_87, %c128_88] : memref<4x17x145xf32, #tpu.memory_space<vmem>>, vector<1x8x16xf32>
    %195 = vector.shape_cast %194 : vector<1x8x16xf32> to vector<8x16xf32>
    %c28 = arith.constant 28 : index
    %196 = memref.load %arg2[%c28] : memref<144xf32, #tpu.memory_space<smem>>
    %197 = vector.broadcast %196 : f32 to vector<8x16xf32>
    %198 = arith.mulf %197, %195 : vector<8x16xf32>
    %199 = arith.addf %181, %198 : vector<8x16xf32>
    %c29 = arith.constant 29 : index
    %200 = memref.load %arg2[%c29] : memref<144xf32, #tpu.memory_space<smem>>
    %201 = vector.broadcast %200 : f32 to vector<8x16xf32>
    %202 = arith.mulf %201, %195 : vector<8x16xf32>
    %203 = arith.addf %185, %202 : vector<8x16xf32>
    %c30 = arith.constant 30 : index
    %204 = memref.load %arg2[%c30] : memref<144xf32, #tpu.memory_space<smem>>
    %205 = vector.broadcast %204 : f32 to vector<8x16xf32>
    %206 = arith.mulf %205, %195 : vector<8x16xf32>
    %207 = arith.addf %189, %206 : vector<8x16xf32>
    %c31 = arith.constant 31 : index
    %208 = memref.load %arg2[%c31] : memref<144xf32, #tpu.memory_space<smem>>
    %209 = vector.broadcast %208 : f32 to vector<8x16xf32>
    %210 = arith.mulf %209, %195 : vector<8x16xf32>
    %211 = arith.addf %193, %210 : vector<8x16xf32>
    %c0_89 = arith.constant 0 : index
    %c9_90 = arith.constant 9 : index
    %c129_91 = arith.constant 129 : index
    %212 = vector.load %arg8[%c0_89, %c9_90, %c129_91] : memref<4x17x145xf32, #tpu.memory_space<vmem>>, vector<1x8x16xf32>
    %213 = vector.shape_cast %212 : vector<1x8x16xf32> to vector<8x16xf32>
    %c32 = arith.constant 32 : index
    %214 = memref.load %arg2[%c32] : memref<144xf32, #tpu.memory_space<smem>>
    %215 = vector.broadcast %214 : f32 to vector<8x16xf32>
    %216 = arith.mulf %215, %213 : vector<8x16xf32>
    %217 = arith.addf %199, %216 : vector<8x16xf32>
    %c33 = arith.constant 33 : index
    %218 = memref.load %arg2[%c33] : memref<144xf32, #tpu.memory_space<smem>>
    %219 = vector.broadcast %218 : f32 to vector<8x16xf32>
    %220 = arith.mulf %219, %213 : vector<8x16xf32>
    %221 = arith.addf %203, %220 : vector<8x16xf32>
    %c34 = arith.constant 34 : index
    %222 = memref.load %arg2[%c34] : memref<144xf32, #tpu.memory_space<smem>>
    %223 = vector.broadcast %222 : f32 to vector<8x16xf32>
    %224 = arith.mulf %223, %213 : vector<8x16xf32>
    %225 = arith.addf %207, %224 : vector<8x16xf32>
    %c35 = arith.constant 35 : index
    %226 = memref.load %arg2[%c35] : memref<144xf32, #tpu.memory_space<smem>>
    %227 = vector.broadcast %226 : f32 to vector<8x16xf32>
    %228 = arith.mulf %227, %213 : vector<8x16xf32>
    %229 = arith.addf %211, %228 : vector<8x16xf32>
    %c1_92 = arith.constant 1 : index
    %c7_93 = arith.constant 7 : index
    %c127_94 = arith.constant 127 : index
    %230 = vector.load %arg8[%c1_92, %c7_93, %c127_94] : memref<4x17x145xf32, #tpu.memory_space<vmem>>, vector<1x8x16xf32>
    %231 = vector.shape_cast %230 : vector<1x8x16xf32> to vector<8x16xf32>
    %c36 = arith.constant 36 : index
    %232 = memref.load %arg2[%c36] : memref<144xf32, #tpu.memory_space<smem>>
    %233 = vector.broadcast %232 : f32 to vector<8x16xf32>
    %234 = arith.mulf %233, %231 : vector<8x16xf32>
    %235 = arith.addf %217, %234 : vector<8x16xf32>
    %c37 = arith.constant 37 : index
    %236 = memref.load %arg2[%c37] : memref<144xf32, #tpu.memory_space<smem>>
    %237 = vector.broadcast %236 : f32 to vector<8x16xf32>
    %238 = arith.mulf %237, %231 : vector<8x16xf32>
    %239 = arith.addf %221, %238 : vector<8x16xf32>
    %c38 = arith.constant 38 : index
    %240 = memref.load %arg2[%c38] : memref<144xf32, #tpu.memory_space<smem>>
    %241 = vector.broadcast %240 : f32 to vector<8x16xf32>
    %242 = arith.mulf %241, %231 : vector<8x16xf32>
    %243 = arith.addf %225, %242 : vector<8x16xf32>
    %c39 = arith.constant 39 : index
    %244 = memref.load %arg2[%c39] : memref<144xf32, #tpu.memory_space<smem>>
    %245 = vector.broadcast %244 : f32 to vector<8x16xf32>
    %246 = arith.mulf %245, %231 : vector<8x16xf32>
    %247 = arith.addf %229, %246 : vector<8x16xf32>
    %c1_95 = arith.constant 1 : index
    %c7_96 = arith.constant 7 : index
    %c128_97 = arith.constant 128 : index
    %248 = vector.load %arg8[%c1_95, %c7_96, %c128_97] : memref<4x17x145xf32, #tpu.memory_space<vmem>>, vector<1x8x16xf32>
    %249 = vector.shape_cast %248 : vector<1x8x16xf32> to vector<8x16xf32>
    %c40 = arith.constant 40 : index
    %250 = memref.load %arg2[%c40] : memref<144xf32, #tpu.memory_space<smem>>
    %251 = vector.broadcast %250 : f32 to vector<8x16xf32>
    %252 = arith.mulf %251, %249 : vector<8x16xf32>
    %253 = arith.addf %235, %252 : vector<8x16xf32>
    %c41 = arith.constant 41 : index
    %254 = memref.load %arg2[%c41] : memref<144xf32, #tpu.memory_space<smem>>
    %255 = vector.broadcast %254 : f32 to vector<8x16xf32>
    %256 = arith.mulf %255, %249 : vector<8x16xf32>
    %257 = arith.addf %239, %256 : vector<8x16xf32>
    %c42 = arith.constant 42 : index
    %258 = memref.load %arg2[%c42] : memref<144xf32, #tpu.memory_space<smem>>
    %259 = vector.broadcast %258 : f32 to vector<8x16xf32>
    %260 = arith.mulf %259, %249 : vector<8x16xf32>
    %261 = arith.addf %243, %260 : vector<8x16xf32>
    %c43 = arith.constant 43 : index
    %262 = memref.load %arg2[%c43] : memref<144xf32, #tpu.memory_space<smem>>
    %263 = vector.broadcast %262 : f32 to vector<8x16xf32>
    %264 = arith.mulf %263, %249 : vector<8x16xf32>
    %265 = arith.addf %247, %264 : vector<8x16xf32>
    %c1_98 = arith.constant 1 : index
    %c7_99 = arith.constant 7 : index
    %c129_100 = arith.constant 129 : index
    %266 = vector.load %arg8[%c1_98, %c7_99, %c129_100] : memref<4x17x145xf32, #tpu.memory_space<vmem>>, vector<1x8x16xf32>
    %267 = vector.shape_cast %266 : vector<1x8x16xf32> to vector<8x16xf32>
    %c44 = arith.constant 44 : index
    %268 = memref.load %arg2[%c44] : memref<144xf32, #tpu.memory_space<smem>>
    %269 = vector.broadcast %268 : f32 to vector<8x16xf32>
    %270 = arith.mulf %269, %267 : vector<8x16xf32>
    %271 = arith.addf %253, %270 : vector<8x16xf32>
    %c45 = arith.constant 45 : index
    %272 = memref.load %arg2[%c45] : memref<144xf32, #tpu.memory_space<smem>>
    %273 = vector.broadcast %272 : f32 to vector<8x16xf32>
    %274 = arith.mulf %273, %267 : vector<8x16xf32>
    %275 = arith.addf %257, %274 : vector<8x16xf32>
    %c46 = arith.constant 46 : index
    %276 = memref.load %arg2[%c46] : memref<144xf32, #tpu.memory_space<smem>>
    %277 = vector.broadcast %276 : f32 to vector<8x16xf32>
    %278 = arith.mulf %277, %267 : vector<8x16xf32>
    %279 = arith.addf %261, %278 : vector<8x16xf32>
    %c47 = arith.constant 47 : index
    %280 = memref.load %arg2[%c47] : memref<144xf32, #tpu.memory_space<smem>>
    %281 = vector.broadcast %280 : f32 to vector<8x16xf32>
    %282 = arith.mulf %281, %267 : vector<8x16xf32>
    %283 = arith.addf %265, %282 : vector<8x16xf32>
    %c1_101 = arith.constant 1 : index
    %c8_102 = arith.constant 8 : index
    %c127_103 = arith.constant 127 : index
    %284 = vector.load %arg8[%c1_101, %c8_102, %c127_103] : memref<4x17x145xf32, #tpu.memory_space<vmem>>, vector<1x8x16xf32>
    %285 = vector.shape_cast %284 : vector<1x8x16xf32> to vector<8x16xf32>
    %c48 = arith.constant 48 : index
    %286 = memref.load %arg2[%c48] : memref<144xf32, #tpu.memory_space<smem>>
    %287 = vector.broadcast %286 : f32 to vector<8x16xf32>
    %288 = arith.mulf %287, %285 : vector<8x16xf32>
    %289 = arith.addf %271, %288 : vector<8x16xf32>
    %c49 = arith.constant 49 : index
    %290 = memref.load %arg2[%c49] : memref<144xf32, #tpu.memory_space<smem>>
    %291 = vector.broadcast %290 : f32 to vector<8x16xf32>
    %292 = arith.mulf %291, %285 : vector<8x16xf32>
    %293 = arith.addf %275, %292 : vector<8x16xf32>
    %c50 = arith.constant 50 : index
    %294 = memref.load %arg2[%c50] : memref<144xf32, #tpu.memory_space<smem>>
    %295 = vector.broadcast %294 : f32 to vector<8x16xf32>
    %296 = arith.mulf %295, %285 : vector<8x16xf32>
    %297 = arith.addf %279, %296 : vector<8x16xf32>
    %c51 = arith.constant 51 : index
    %298 = memref.load %arg2[%c51] : memref<144xf32, #tpu.memory_space<smem>>
    %299 = vector.broadcast %298 : f32 to vector<8x16xf32>
    %300 = arith.mulf %299, %285 : vector<8x16xf32>
    %301 = arith.addf %283, %300 : vector<8x16xf32>
    %c1_104 = arith.constant 1 : index
    %c8_105 = arith.constant 8 : index
    %c128_106 = arith.constant 128 : index
    %302 = vector.load %arg8[%c1_104, %c8_105, %c128_106] : memref<4x17x145xf32, #tpu.memory_space<vmem>>, vector<1x8x16xf32>
    %303 = vector.shape_cast %302 : vector<1x8x16xf32> to vector<8x16xf32>
    %c52 = arith.constant 52 : index
    %304 = memref.load %arg2[%c52] : memref<144xf32, #tpu.memory_space<smem>>
    %305 = vector.broadcast %304 : f32 to vector<8x16xf32>
    %306 = arith.mulf %305, %303 : vector<8x16xf32>
    %307 = arith.addf %289, %306 : vector<8x16xf32>
    %c53 = arith.constant 53 : index
    %308 = memref.load %arg2[%c53] : memref<144xf32, #tpu.memory_space<smem>>
    %309 = vector.broadcast %308 : f32 to vector<8x16xf32>
    %310 = arith.mulf %309, %303 : vector<8x16xf32>
    %311 = arith.addf %293, %310 : vector<8x16xf32>
    %c54 = arith.constant 54 : index
    %312 = memref.load %arg2[%c54] : memref<144xf32, #tpu.memory_space<smem>>
    %313 = vector.broadcast %312 : f32 to vector<8x16xf32>
    %314 = arith.mulf %313, %303 : vector<8x16xf32>
    %315 = arith.addf %297, %314 : vector<8x16xf32>
    %c55 = arith.constant 55 : index
    %316 = memref.load %arg2[%c55] : memref<144xf32, #tpu.memory_space<smem>>
    %317 = vector.broadcast %316 : f32 to vector<8x16xf32>
    %318 = arith.mulf %317, %303 : vector<8x16xf32>
    %319 = arith.addf %301, %318 : vector<8x16xf32>
    %c1_107 = arith.constant 1 : index
    %c8_108 = arith.constant 8 : index
    %c129_109 = arith.constant 129 : index
    %320 = vector.load %arg8[%c1_107, %c8_108, %c129_109] : memref<4x17x145xf32, #tpu.memory_space<vmem>>, vector<1x8x16xf32>
    %321 = vector.shape_cast %320 : vector<1x8x16xf32> to vector<8x16xf32>
    %c56 = arith.constant 56 : index
    %322 = memref.load %arg2[%c56] : memref<144xf32, #tpu.memory_space<smem>>
    %323 = vector.broadcast %322 : f32 to vector<8x16xf32>
    %324 = arith.mulf %323, %321 : vector<8x16xf32>
    %325 = arith.addf %307, %324 : vector<8x16xf32>
    %c57 = arith.constant 57 : index
    %326 = memref.load %arg2[%c57] : memref<144xf32, #tpu.memory_space<smem>>
    %327 = vector.broadcast %326 : f32 to vector<8x16xf32>
    %328 = arith.mulf %327, %321 : vector<8x16xf32>
    %329 = arith.addf %311, %328 : vector<8x16xf32>
    %c58 = arith.constant 58 : index
    %330 = memref.load %arg2[%c58] : memref<144xf32, #tpu.memory_space<smem>>
    %331 = vector.broadcast %330 : f32 to vector<8x16xf32>
    %332 = arith.mulf %331, %321 : vector<8x16xf32>
    %333 = arith.addf %315, %332 : vector<8x16xf32>
    %c59 = arith.constant 59 : index
    %334 = memref.load %arg2[%c59] : memref<144xf32, #tpu.memory_space<smem>>
    %335 = vector.broadcast %334 : f32 to vector<8x16xf32>
    %336 = arith.mulf %335, %321 : vector<8x16xf32>
    %337 = arith.addf %319, %336 : vector<8x16xf32>
    %c1_110 = arith.constant 1 : index
    %c9_111 = arith.constant 9 : index
    %c127_112 = arith.constant 127 : index
    %338 = vector.load %arg8[%c1_110, %c9_111, %c127_112] : memref<4x17x145xf32, #tpu.memory_space<vmem>>, vector<1x8x16xf32>
    %339 = vector.shape_cast %338 : vector<1x8x16xf32> to vector<8x16xf32>
    %c60 = arith.constant 60 : index
    %340 = memref.load %arg2[%c60] : memref<144xf32, #tpu.memory_space<smem>>
    %341 = vector.broadcast %340 : f32 to vector<8x16xf32>
    %342 = arith.mulf %341, %339 : vector<8x16xf32>
    %343 = arith.addf %325, %342 : vector<8x16xf32>
    %c61 = arith.constant 61 : index
    %344 = memref.load %arg2[%c61] : memref<144xf32, #tpu.memory_space<smem>>
    %345 = vector.broadcast %344 : f32 to vector<8x16xf32>
    %346 = arith.mulf %345, %339 : vector<8x16xf32>
    %347 = arith.addf %329, %346 : vector<8x16xf32>
    %c62 = arith.constant 62 : index
    %348 = memref.load %arg2[%c62] : memref<144xf32, #tpu.memory_space<smem>>
    %349 = vector.broadcast %348 : f32 to vector<8x16xf32>
    %350 = arith.mulf %349, %339 : vector<8x16xf32>
    %351 = arith.addf %333, %350 : vector<8x16xf32>
    %c63 = arith.constant 63 : index
    %352 = memref.load %arg2[%c63] : memref<144xf32, #tpu.memory_space<smem>>
    %353 = vector.broadcast %352 : f32 to vector<8x16xf32>
    %354 = arith.mulf %353, %339 : vector<8x16xf32>
    %355 = arith.addf %337, %354 : vector<8x16xf32>
    %c1_113 = arith.constant 1 : index
    %c9_114 = arith.constant 9 : index
    %c128_115 = arith.constant 128 : index
    %356 = vector.load %arg8[%c1_113, %c9_114, %c128_115] : memref<4x17x145xf32, #tpu.memory_space<vmem>>, vector<1x8x16xf32>
    %357 = vector.shape_cast %356 : vector<1x8x16xf32> to vector<8x16xf32>
    %c64 = arith.constant 64 : index
    %358 = memref.load %arg2[%c64] : memref<144xf32, #tpu.memory_space<smem>>
    %359 = vector.broadcast %358 : f32 to vector<8x16xf32>
    %360 = arith.mulf %359, %357 : vector<8x16xf32>
    %361 = arith.addf %343, %360 : vector<8x16xf32>
    %c65 = arith.constant 65 : index
    %362 = memref.load %arg2[%c65] : memref<144xf32, #tpu.memory_space<smem>>
    %363 = vector.broadcast %362 : f32 to vector<8x16xf32>
    %364 = arith.mulf %363, %357 : vector<8x16xf32>
    %365 = arith.addf %347, %364 : vector<8x16xf32>
    %c66 = arith.constant 66 : index
    %366 = memref.load %arg2[%c66] : memref<144xf32, #tpu.memory_space<smem>>
    %367 = vector.broadcast %366 : f32 to vector<8x16xf32>
    %368 = arith.mulf %367, %357 : vector<8x16xf32>
    %369 = arith.addf %351, %368 : vector<8x16xf32>
    %c67 = arith.constant 67 : index
    %370 = memref.load %arg2[%c67] : memref<144xf32, #tpu.memory_space<smem>>
    %371 = vector.broadcast %370 : f32 to vector<8x16xf32>
    %372 = arith.mulf %371, %357 : vector<8x16xf32>
    %373 = arith.addf %355, %372 : vector<8x16xf32>
    %c1_116 = arith.constant 1 : index
    %c9_117 = arith.constant 9 : index
    %c129_118 = arith.constant 129 : index
    %374 = vector.load %arg8[%c1_116, %c9_117, %c129_118] : memref<4x17x145xf32, #tpu.memory_space<vmem>>, vector<1x8x16xf32>
    %375 = vector.shape_cast %374 : vector<1x8x16xf32> to vector<8x16xf32>
    %c68 = arith.constant 68 : index
    %376 = memref.load %arg2[%c68] : memref<144xf32, #tpu.memory_space<smem>>
    %377 = vector.broadcast %376 : f32 to vector<8x16xf32>
    %378 = arith.mulf %377, %375 : vector<8x16xf32>
    %379 = arith.addf %361, %378 : vector<8x16xf32>
    %c69 = arith.constant 69 : index
    %380 = memref.load %arg2[%c69] : memref<144xf32, #tpu.memory_space<smem>>
    %381 = vector.broadcast %380 : f32 to vector<8x16xf32>
    %382 = arith.mulf %381, %375 : vector<8x16xf32>
    %383 = arith.addf %365, %382 : vector<8x16xf32>
    %c70 = arith.constant 70 : index
    %384 = memref.load %arg2[%c70] : memref<144xf32, #tpu.memory_space<smem>>
    %385 = vector.broadcast %384 : f32 to vector<8x16xf32>
    %386 = arith.mulf %385, %375 : vector<8x16xf32>
    %387 = arith.addf %369, %386 : vector<8x16xf32>
    %c71 = arith.constant 71 : index
    %388 = memref.load %arg2[%c71] : memref<144xf32, #tpu.memory_space<smem>>
    %389 = vector.broadcast %388 : f32 to vector<8x16xf32>
    %390 = arith.mulf %389, %375 : vector<8x16xf32>
    %391 = arith.addf %373, %390 : vector<8x16xf32>
    %c2_119 = arith.constant 2 : index
    %c7_120 = arith.constant 7 : index
    %c127_121 = arith.constant 127 : index
    %392 = vector.load %arg8[%c2_119, %c7_120, %c127_121] : memref<4x17x145xf32, #tpu.memory_space<vmem>>, vector<1x8x16xf32>
    %393 = vector.shape_cast %392 : vector<1x8x16xf32> to vector<8x16xf32>
    %c72 = arith.constant 72 : index
    %394 = memref.load %arg2[%c72] : memref<144xf32, #tpu.memory_space<smem>>
    %395 = vector.broadcast %394 : f32 to vector<8x16xf32>
    %396 = arith.mulf %395, %393 : vector<8x16xf32>
    %397 = arith.addf %379, %396 : vector<8x16xf32>
    %c73 = arith.constant 73 : index
    %398 = memref.load %arg2[%c73] : memref<144xf32, #tpu.memory_space<smem>>
    %399 = vector.broadcast %398 : f32 to vector<8x16xf32>
    %400 = arith.mulf %399, %393 : vector<8x16xf32>
    %401 = arith.addf %383, %400 : vector<8x16xf32>
    %c74 = arith.constant 74 : index
    %402 = memref.load %arg2[%c74] : memref<144xf32, #tpu.memory_space<smem>>
    %403 = vector.broadcast %402 : f32 to vector<8x16xf32>
    %404 = arith.mulf %403, %393 : vector<8x16xf32>
    %405 = arith.addf %387, %404 : vector<8x16xf32>
    %c75 = arith.constant 75 : index
    %406 = memref.load %arg2[%c75] : memref<144xf32, #tpu.memory_space<smem>>
    %407 = vector.broadcast %406 : f32 to vector<8x16xf32>
    %408 = arith.mulf %407, %393 : vector<8x16xf32>
    %409 = arith.addf %391, %408 : vector<8x16xf32>
    %c2_122 = arith.constant 2 : index
    %c7_123 = arith.constant 7 : index
    %c128_124 = arith.constant 128 : index
    %410 = vector.load %arg8[%c2_122, %c7_123, %c128_124] : memref<4x17x145xf32, #tpu.memory_space<vmem>>, vector<1x8x16xf32>
    %411 = vector.shape_cast %410 : vector<1x8x16xf32> to vector<8x16xf32>
    %c76 = arith.constant 76 : index
    %412 = memref.load %arg2[%c76] : memref<144xf32, #tpu.memory_space<smem>>
    %413 = vector.broadcast %412 : f32 to vector<8x16xf32>
    %414 = arith.mulf %413, %411 : vector<8x16xf32>
    %415 = arith.addf %397, %414 : vector<8x16xf32>
    %c77 = arith.constant 77 : index
    %416 = memref.load %arg2[%c77] : memref<144xf32, #tpu.memory_space<smem>>
    %417 = vector.broadcast %416 : f32 to vector<8x16xf32>
    %418 = arith.mulf %417, %411 : vector<8x16xf32>
    %419 = arith.addf %401, %418 : vector<8x16xf32>
    %c78 = arith.constant 78 : index
    %420 = memref.load %arg2[%c78] : memref<144xf32, #tpu.memory_space<smem>>
    %421 = vector.broadcast %420 : f32 to vector<8x16xf32>
    %422 = arith.mulf %421, %411 : vector<8x16xf32>
    %423 = arith.addf %405, %422 : vector<8x16xf32>
    %c79 = arith.constant 79 : index
    %424 = memref.load %arg2[%c79] : memref<144xf32, #tpu.memory_space<smem>>
    %425 = vector.broadcast %424 : f32 to vector<8x16xf32>
    %426 = arith.mulf %425, %411 : vector<8x16xf32>
    %427 = arith.addf %409, %426 : vector<8x16xf32>
    %c2_125 = arith.constant 2 : index
    %c7_126 = arith.constant 7 : index
    %c129_127 = arith.constant 129 : index
    %428 = vector.load %arg8[%c2_125, %c7_126, %c129_127] : memref<4x17x145xf32, #tpu.memory_space<vmem>>, vector<1x8x16xf32>
    %429 = vector.shape_cast %428 : vector<1x8x16xf32> to vector<8x16xf32>
    %c80 = arith.constant 80 : index
    %430 = memref.load %arg2[%c80] : memref<144xf32, #tpu.memory_space<smem>>
    %431 = vector.broadcast %430 : f32 to vector<8x16xf32>
    %432 = arith.mulf %431, %429 : vector<8x16xf32>
    %433 = arith.addf %415, %432 : vector<8x16xf32>
    %c81 = arith.constant 81 : index
    %434 = memref.load %arg2[%c81] : memref<144xf32, #tpu.memory_space<smem>>
    %435 = vector.broadcast %434 : f32 to vector<8x16xf32>
    %436 = arith.mulf %435, %429 : vector<8x16xf32>
    %437 = arith.addf %419, %436 : vector<8x16xf32>
    %c82 = arith.constant 82 : index
    %438 = memref.load %arg2[%c82] : memref<144xf32, #tpu.memory_space<smem>>
    %439 = vector.broadcast %438 : f32 to vector<8x16xf32>
    %440 = arith.mulf %439, %429 : vector<8x16xf32>
    %441 = arith.addf %423, %440 : vector<8x16xf32>
    %c83 = arith.constant 83 : index
    %442 = memref.load %arg2[%c83] : memref<144xf32, #tpu.memory_space<smem>>
    %443 = vector.broadcast %442 : f32 to vector<8x16xf32>
    %444 = arith.mulf %443, %429 : vector<8x16xf32>
    %445 = arith.addf %427, %444 : vector<8x16xf32>
    %c2_128 = arith.constant 2 : index
    %c8_129 = arith.constant 8 : index
    %c127_130 = arith.constant 127 : index
    %446 = vector.load %arg8[%c2_128, %c8_129, %c127_130] : memref<4x17x145xf32, #tpu.memory_space<vmem>>, vector<1x8x16xf32>
    %447 = vector.shape_cast %446 : vector<1x8x16xf32> to vector<8x16xf32>
    %c84 = arith.constant 84 : index
    %448 = memref.load %arg2[%c84] : memref<144xf32, #tpu.memory_space<smem>>
    %449 = vector.broadcast %448 : f32 to vector<8x16xf32>
    %450 = arith.mulf %449, %447 : vector<8x16xf32>
    %451 = arith.addf %433, %450 : vector<8x16xf32>
    %c85 = arith.constant 85 : index
    %452 = memref.load %arg2[%c85] : memref<144xf32, #tpu.memory_space<smem>>
    %453 = vector.broadcast %452 : f32 to vector<8x16xf32>
    %454 = arith.mulf %453, %447 : vector<8x16xf32>
    %455 = arith.addf %437, %454 : vector<8x16xf32>
    %c86 = arith.constant 86 : index
    %456 = memref.load %arg2[%c86] : memref<144xf32, #tpu.memory_space<smem>>
    %457 = vector.broadcast %456 : f32 to vector<8x16xf32>
    %458 = arith.mulf %457, %447 : vector<8x16xf32>
    %459 = arith.addf %441, %458 : vector<8x16xf32>
    %c87 = arith.constant 87 : index
    %460 = memref.load %arg2[%c87] : memref<144xf32, #tpu.memory_space<smem>>
    %461 = vector.broadcast %460 : f32 to vector<8x16xf32>
    %462 = arith.mulf %461, %447 : vector<8x16xf32>
    %463 = arith.addf %445, %462 : vector<8x16xf32>
    %c2_131 = arith.constant 2 : index
    %c8_132 = arith.constant 8 : index
    %c128_133 = arith.constant 128 : index
    %464 = vector.load %arg8[%c2_131, %c8_132, %c128_133] : memref<4x17x145xf32, #tpu.memory_space<vmem>>, vector<1x8x16xf32>
    %465 = vector.shape_cast %464 : vector<1x8x16xf32> to vector<8x16xf32>
    %c88 = arith.constant 88 : index
    %466 = memref.load %arg2[%c88] : memref<144xf32, #tpu.memory_space<smem>>
    %467 = vector.broadcast %466 : f32 to vector<8x16xf32>
    %468 = arith.mulf %467, %465 : vector<8x16xf32>
    %469 = arith.addf %451, %468 : vector<8x16xf32>
    %c89 = arith.constant 89 : index
    %470 = memref.load %arg2[%c89] : memref<144xf32, #tpu.memory_space<smem>>
    %471 = vector.broadcast %470 : f32 to vector<8x16xf32>
    %472 = arith.mulf %471, %465 : vector<8x16xf32>
    %473 = arith.addf %455, %472 : vector<8x16xf32>
    %c90 = arith.constant 90 : index
    %474 = memref.load %arg2[%c90] : memref<144xf32, #tpu.memory_space<smem>>
    %475 = vector.broadcast %474 : f32 to vector<8x16xf32>
    %476 = arith.mulf %475, %465 : vector<8x16xf32>
    %477 = arith.addf %459, %476 : vector<8x16xf32>
    %c91 = arith.constant 91 : index
    %478 = memref.load %arg2[%c91] : memref<144xf32, #tpu.memory_space<smem>>
    %479 = vector.broadcast %478 : f32 to vector<8x16xf32>
    %480 = arith.mulf %479, %465 : vector<8x16xf32>
    %481 = arith.addf %463, %480 : vector<8x16xf32>
    %c2_134 = arith.constant 2 : index
    %c8_135 = arith.constant 8 : index
    %c129_136 = arith.constant 129 : index
    %482 = vector.load %arg8[%c2_134, %c8_135, %c129_136] : memref<4x17x145xf32, #tpu.memory_space<vmem>>, vector<1x8x16xf32>
    %483 = vector.shape_cast %482 : vector<1x8x16xf32> to vector<8x16xf32>
    %c92 = arith.constant 92 : index
    %484 = memref.load %arg2[%c92] : memref<144xf32, #tpu.memory_space<smem>>
    %485 = vector.broadcast %484 : f32 to vector<8x16xf32>
    %486 = arith.mulf %485, %483 : vector<8x16xf32>
    %487 = arith.addf %469, %486 : vector<8x16xf32>
    %c93 = arith.constant 93 : index
    %488 = memref.load %arg2[%c93] : memref<144xf32, #tpu.memory_space<smem>>
    %489 = vector.broadcast %488 : f32 to vector<8x16xf32>
    %490 = arith.mulf %489, %483 : vector<8x16xf32>
    %491 = arith.addf %473, %490 : vector<8x16xf32>
    %c94 = arith.constant 94 : index
    %492 = memref.load %arg2[%c94] : memref<144xf32, #tpu.memory_space<smem>>
    %493 = vector.broadcast %492 : f32 to vector<8x16xf32>
    %494 = arith.mulf %493, %483 : vector<8x16xf32>
    %495 = arith.addf %477, %494 : vector<8x16xf32>
    %c95 = arith.constant 95 : index
    %496 = memref.load %arg2[%c95] : memref<144xf32, #tpu.memory_space<smem>>
    %497 = vector.broadcast %496 : f32 to vector<8x16xf32>
    %498 = arith.mulf %497, %483 : vector<8x16xf32>
    %499 = arith.addf %481, %498 : vector<8x16xf32>
    %c2_137 = arith.constant 2 : index
    %c9_138 = arith.constant 9 : index
    %c127_139 = arith.constant 127 : index
    %500 = vector.load %arg8[%c2_137, %c9_138, %c127_139] : memref<4x17x145xf32, #tpu.memory_space<vmem>>, vector<1x8x16xf32>
    %501 = vector.shape_cast %500 : vector<1x8x16xf32> to vector<8x16xf32>
    %c96 = arith.constant 96 : index
    %502 = memref.load %arg2[%c96] : memref<144xf32, #tpu.memory_space<smem>>
    %503 = vector.broadcast %502 : f32 to vector<8x16xf32>
    %504 = arith.mulf %503, %501 : vector<8x16xf32>
    %505 = arith.addf %487, %504 : vector<8x16xf32>
    %c97 = arith.constant 97 : index
    %506 = memref.load %arg2[%c97] : memref<144xf32, #tpu.memory_space<smem>>
    %507 = vector.broadcast %506 : f32 to vector<8x16xf32>
    %508 = arith.mulf %507, %501 : vector<8x16xf32>
    %509 = arith.addf %491, %508 : vector<8x16xf32>
    %c98 = arith.constant 98 : index
    %510 = memref.load %arg2[%c98] : memref<144xf32, #tpu.memory_space<smem>>
    %511 = vector.broadcast %510 : f32 to vector<8x16xf32>
    %512 = arith.mulf %511, %501 : vector<8x16xf32>
    %513 = arith.addf %495, %512 : vector<8x16xf32>
    %c99 = arith.constant 99 : index
    %514 = memref.load %arg2[%c99] : memref<144xf32, #tpu.memory_space<smem>>
    %515 = vector.broadcast %514 : f32 to vector<8x16xf32>
    %516 = arith.mulf %515, %501 : vector<8x16xf32>
    %517 = arith.addf %499, %516 : vector<8x16xf32>
    %c2_140 = arith.constant 2 : index
    %c9_141 = arith.constant 9 : index
    %c128_142 = arith.constant 128 : index
    %518 = vector.load %arg8[%c2_140, %c9_141, %c128_142] : memref<4x17x145xf32, #tpu.memory_space<vmem>>, vector<1x8x16xf32>
    %519 = vector.shape_cast %518 : vector<1x8x16xf32> to vector<8x16xf32>
    %c100 = arith.constant 100 : index
    %520 = memref.load %arg2[%c100] : memref<144xf32, #tpu.memory_space<smem>>
    %521 = vector.broadcast %520 : f32 to vector<8x16xf32>
    %522 = arith.mulf %521, %519 : vector<8x16xf32>
    %523 = arith.addf %505, %522 : vector<8x16xf32>
    %c101 = arith.constant 101 : index
    %524 = memref.load %arg2[%c101] : memref<144xf32, #tpu.memory_space<smem>>
    %525 = vector.broadcast %524 : f32 to vector<8x16xf32>
    %526 = arith.mulf %525, %519 : vector<8x16xf32>
    %527 = arith.addf %509, %526 : vector<8x16xf32>
    %c102 = arith.constant 102 : index
    %528 = memref.load %arg2[%c102] : memref<144xf32, #tpu.memory_space<smem>>
    %529 = vector.broadcast %528 : f32 to vector<8x16xf32>
    %530 = arith.mulf %529, %519 : vector<8x16xf32>
    %531 = arith.addf %513, %530 : vector<8x16xf32>
    %c103 = arith.constant 103 : index
    %532 = memref.load %arg2[%c103] : memref<144xf32, #tpu.memory_space<smem>>
    %533 = vector.broadcast %532 : f32 to vector<8x16xf32>
    %534 = arith.mulf %533, %519 : vector<8x16xf32>
    %535 = arith.addf %517, %534 : vector<8x16xf32>
    %c2_143 = arith.constant 2 : index
    %c9_144 = arith.constant 9 : index
    %c129_145 = arith.constant 129 : index
    %536 = vector.load %arg8[%c2_143, %c9_144, %c129_145] : memref<4x17x145xf32, #tpu.memory_space<vmem>>, vector<1x8x16xf32>
    %537 = vector.shape_cast %536 : vector<1x8x16xf32> to vector<8x16xf32>
    %c104 = arith.constant 104 : index
    %538 = memref.load %arg2[%c104] : memref<144xf32, #tpu.memory_space<smem>>
    %539 = vector.broadcast %538 : f32 to vector<8x16xf32>
    %540 = arith.mulf %539, %537 : vector<8x16xf32>
    %541 = arith.addf %523, %540 : vector<8x16xf32>
    %c105 = arith.constant 105 : index
    %542 = memref.load %arg2[%c105] : memref<144xf32, #tpu.memory_space<smem>>
    %543 = vector.broadcast %542 : f32 to vector<8x16xf32>
    %544 = arith.mulf %543, %537 : vector<8x16xf32>
    %545 = arith.addf %527, %544 : vector<8x16xf32>
    %c106 = arith.constant 106 : index
    %546 = memref.load %arg2[%c106] : memref<144xf32, #tpu.memory_space<smem>>
    %547 = vector.broadcast %546 : f32 to vector<8x16xf32>
    %548 = arith.mulf %547, %537 : vector<8x16xf32>
    %549 = arith.addf %531, %548 : vector<8x16xf32>
    %c107 = arith.constant 107 : index
    %550 = memref.load %arg2[%c107] : memref<144xf32, #tpu.memory_space<smem>>
    %551 = vector.broadcast %550 : f32 to vector<8x16xf32>
    %552 = arith.mulf %551, %537 : vector<8x16xf32>
    %553 = arith.addf %535, %552 : vector<8x16xf32>
    %c3_146 = arith.constant 3 : index
    %c7_147 = arith.constant 7 : index
    %c127_148 = arith.constant 127 : index
    %554 = vector.load %arg8[%c3_146, %c7_147, %c127_148] : memref<4x17x145xf32, #tpu.memory_space<vmem>>, vector<1x8x16xf32>
    %555 = vector.shape_cast %554 : vector<1x8x16xf32> to vector<8x16xf32>
    %c108 = arith.constant 108 : index
    %556 = memref.load %arg2[%c108] : memref<144xf32, #tpu.memory_space<smem>>
    %557 = vector.broadcast %556 : f32 to vector<8x16xf32>
    %558 = arith.mulf %557, %555 : vector<8x16xf32>
    %559 = arith.addf %541, %558 : vector<8x16xf32>
    %c109 = arith.constant 109 : index
    %560 = memref.load %arg2[%c109] : memref<144xf32, #tpu.memory_space<smem>>
    %561 = vector.broadcast %560 : f32 to vector<8x16xf32>
    %562 = arith.mulf %561, %555 : vector<8x16xf32>
    %563 = arith.addf %545, %562 : vector<8x16xf32>
    %c110 = arith.constant 110 : index
    %564 = memref.load %arg2[%c110] : memref<144xf32, #tpu.memory_space<smem>>
    %565 = vector.broadcast %564 : f32 to vector<8x16xf32>
    %566 = arith.mulf %565, %555 : vector<8x16xf32>
    %567 = arith.addf %549, %566 : vector<8x16xf32>
    %c111 = arith.constant 111 : index
    %568 = memref.load %arg2[%c111] : memref<144xf32, #tpu.memory_space<smem>>
    %569 = vector.broadcast %568 : f32 to vector<8x16xf32>
    %570 = arith.mulf %569, %555 : vector<8x16xf32>
    %571 = arith.addf %553, %570 : vector<8x16xf32>
    %c3_149 = arith.constant 3 : index
    %c7_150 = arith.constant 7 : index
    %c128_151 = arith.constant 128 : index
    %572 = vector.load %arg8[%c3_149, %c7_150, %c128_151] : memref<4x17x145xf32, #tpu.memory_space<vmem>>, vector<1x8x16xf32>
    %573 = vector.shape_cast %572 : vector<1x8x16xf32> to vector<8x16xf32>
    %c112 = arith.constant 112 : index
    %574 = memref.load %arg2[%c112] : memref<144xf32, #tpu.memory_space<smem>>
    %575 = vector.broadcast %574 : f32 to vector<8x16xf32>
    %576 = arith.mulf %575, %573 : vector<8x16xf32>
    %577 = arith.addf %559, %576 : vector<8x16xf32>
    %c113 = arith.constant 113 : index
    %578 = memref.load %arg2[%c113] : memref<144xf32, #tpu.memory_space<smem>>
    %579 = vector.broadcast %578 : f32 to vector<8x16xf32>
    %580 = arith.mulf %579, %573 : vector<8x16xf32>
    %581 = arith.addf %563, %580 : vector<8x16xf32>
    %c114 = arith.constant 114 : index
    %582 = memref.load %arg2[%c114] : memref<144xf32, #tpu.memory_space<smem>>
    %583 = vector.broadcast %582 : f32 to vector<8x16xf32>
    %584 = arith.mulf %583, %573 : vector<8x16xf32>
    %585 = arith.addf %567, %584 : vector<8x16xf32>
    %c115 = arith.constant 115 : index
    %586 = memref.load %arg2[%c115] : memref<144xf32, #tpu.memory_space<smem>>
    %587 = vector.broadcast %586 : f32 to vector<8x16xf32>
    %588 = arith.mulf %587, %573 : vector<8x16xf32>
    %589 = arith.addf %571, %588 : vector<8x16xf32>
    %c3_152 = arith.constant 3 : index
    %c7_153 = arith.constant 7 : index
    %c129_154 = arith.constant 129 : index
    %590 = vector.load %arg8[%c3_152, %c7_153, %c129_154] : memref<4x17x145xf32, #tpu.memory_space<vmem>>, vector<1x8x16xf32>
    %591 = vector.shape_cast %590 : vector<1x8x16xf32> to vector<8x16xf32>
    %c116 = arith.constant 116 : index
    %592 = memref.load %arg2[%c116] : memref<144xf32, #tpu.memory_space<smem>>
    %593 = vector.broadcast %592 : f32 to vector<8x16xf32>
    %594 = arith.mulf %593, %591 : vector<8x16xf32>
    %595 = arith.addf %577, %594 : vector<8x16xf32>
    %c117 = arith.constant 117 : index
    %596 = memref.load %arg2[%c117] : memref<144xf32, #tpu.memory_space<smem>>
    %597 = vector.broadcast %596 : f32 to vector<8x16xf32>
    %598 = arith.mulf %597, %591 : vector<8x16xf32>
    %599 = arith.addf %581, %598 : vector<8x16xf32>
    %c118 = arith.constant 118 : index
    %600 = memref.load %arg2[%c118] : memref<144xf32, #tpu.memory_space<smem>>
    %601 = vector.broadcast %600 : f32 to vector<8x16xf32>
    %602 = arith.mulf %601, %591 : vector<8x16xf32>
    %603 = arith.addf %585, %602 : vector<8x16xf32>
    %c119 = arith.constant 119 : index
    %604 = memref.load %arg2[%c119] : memref<144xf32, #tpu.memory_space<smem>>
    %605 = vector.broadcast %604 : f32 to vector<8x16xf32>
    %606 = arith.mulf %605, %591 : vector<8x16xf32>
    %607 = arith.addf %589, %606 : vector<8x16xf32>
    %c3_155 = arith.constant 3 : index
    %c8_156 = arith.constant 8 : index
    %c127_157 = arith.constant 127 : index
    %608 = vector.load %arg8[%c3_155, %c8_156, %c127_157] : memref<4x17x145xf32, #tpu.memory_space<vmem>>, vector<1x8x16xf32>
    %609 = vector.shape_cast %608 : vector<1x8x16xf32> to vector<8x16xf32>
    %c120 = arith.constant 120 : index
    %610 = memref.load %arg2[%c120] : memref<144xf32, #tpu.memory_space<smem>>
    %611 = vector.broadcast %610 : f32 to vector<8x16xf32>
    %612 = arith.mulf %611, %609 : vector<8x16xf32>
    %613 = arith.addf %595, %612 : vector<8x16xf32>
    %c121 = arith.constant 121 : index
    %614 = memref.load %arg2[%c121] : memref<144xf32, #tpu.memory_space<smem>>
    %615 = vector.broadcast %614 : f32 to vector<8x16xf32>
    %616 = arith.mulf %615, %609 : vector<8x16xf32>
    %617 = arith.addf %599, %616 : vector<8x16xf32>
    %c122 = arith.constant 122 : index
    %618 = memref.load %arg2[%c122] : memref<144xf32, #tpu.memory_space<smem>>
    %619 = vector.broadcast %618 : f32 to vector<8x16xf32>
    %620 = arith.mulf %619, %609 : vector<8x16xf32>
    %621 = arith.addf %603, %620 : vector<8x16xf32>
    %c123 = arith.constant 123 : index
    %622 = memref.load %arg2[%c123] : memref<144xf32, #tpu.memory_space<smem>>
    %623 = vector.broadcast %622 : f32 to vector<8x16xf32>
    %624 = arith.mulf %623, %609 : vector<8x16xf32>
    %625 = arith.addf %607, %624 : vector<8x16xf32>
    %c3_158 = arith.constant 3 : index
    %c8_159 = arith.constant 8 : index
    %c128_160 = arith.constant 128 : index
    %626 = vector.load %arg8[%c3_158, %c8_159, %c128_160] : memref<4x17x145xf32, #tpu.memory_space<vmem>>, vector<1x8x16xf32>
    %627 = vector.shape_cast %626 : vector<1x8x16xf32> to vector<8x16xf32>
    %c124 = arith.constant 124 : index
    %628 = memref.load %arg2[%c124] : memref<144xf32, #tpu.memory_space<smem>>
    %629 = vector.broadcast %628 : f32 to vector<8x16xf32>
    %630 = arith.mulf %629, %627 : vector<8x16xf32>
    %631 = arith.addf %613, %630 : vector<8x16xf32>
    %c125 = arith.constant 125 : index
    %632 = memref.load %arg2[%c125] : memref<144xf32, #tpu.memory_space<smem>>
    %633 = vector.broadcast %632 : f32 to vector<8x16xf32>
    %634 = arith.mulf %633, %627 : vector<8x16xf32>
    %635 = arith.addf %617, %634 : vector<8x16xf32>
    %c126 = arith.constant 126 : index
    %636 = memref.load %arg2[%c126] : memref<144xf32, #tpu.memory_space<smem>>
    %637 = vector.broadcast %636 : f32 to vector<8x16xf32>
    %638 = arith.mulf %637, %627 : vector<8x16xf32>
    %639 = arith.addf %621, %638 : vector<8x16xf32>
    %c127_161 = arith.constant 127 : index
    %640 = memref.load %arg2[%c127_161] : memref<144xf32, #tpu.memory_space<smem>>
    %641 = vector.broadcast %640 : f32 to vector<8x16xf32>
    %642 = arith.mulf %641, %627 : vector<8x16xf32>
    %643 = arith.addf %625, %642 : vector<8x16xf32>
    %c3_162 = arith.constant 3 : index
    %c8_163 = arith.constant 8 : index
    %c129_164 = arith.constant 129 : index
    %644 = vector.load %arg8[%c3_162, %c8_163, %c129_164] : memref<4x17x145xf32, #tpu.memory_space<vmem>>, vector<1x8x16xf32>
    %645 = vector.shape_cast %644 : vector<1x8x16xf32> to vector<8x16xf32>
    %c128_165 = arith.constant 128 : index
    %646 = memref.load %arg2[%c128_165] : memref<144xf32, #tpu.memory_space<smem>>
    %647 = vector.broadcast %646 : f32 to vector<8x16xf32>
    %648 = arith.mulf %647, %645 : vector<8x16xf32>
    %649 = arith.addf %631, %648 : vector<8x16xf32>
    %c129_166 = arith.constant 129 : index
    %650 = memref.load %arg2[%c129_166] : memref<144xf32, #tpu.memory_space<smem>>
    %651 = vector.broadcast %650 : f32 to vector<8x16xf32>
    %652 = arith.mulf %651, %645 : vector<8x16xf32>
    %653 = arith.addf %635, %652 : vector<8x16xf32>
    %c130 = arith.constant 130 : index
    %654 = memref.load %arg2[%c130] : memref<144xf32, #tpu.memory_space<smem>>
    %655 = vector.broadcast %654 : f32 to vector<8x16xf32>
    %656 = arith.mulf %655, %645 : vector<8x16xf32>
    %657 = arith.addf %639, %656 : vector<8x16xf32>
    %c131 = arith.constant 131 : index
    %658 = memref.load %arg2[%c131] : memref<144xf32, #tpu.memory_space<smem>>
    %659 = vector.broadcast %658 : f32 to vector<8x16xf32>
    %660 = arith.mulf %659, %645 : vector<8x16xf32>
    %661 = arith.addf %643, %660 : vector<8x16xf32>
    %c3_167 = arith.constant 3 : index
    %c9_168 = arith.constant 9 : index
    %c127_169 = arith.constant 127 : index
    %662 = vector.load %arg8[%c3_167, %c9_168, %c127_169] : memref<4x17x145xf32, #tpu.memory_space<vmem>>, vector<1x8x16xf32>
    %663 = vector.shape_cast %662 : vector<1x8x16xf32> to vector<8x16xf32>
    %c132 = arith.constant 132 : index
    %664 = memref.load %arg2[%c132] : memref<144xf32, #tpu.memory_space<smem>>
    %665 = vector.broadcast %664 : f32 to vector<8x16xf32>
    %666 = arith.mulf %665, %663 : vector<8x16xf32>
    %667 = arith.addf %649, %666 : vector<8x16xf32>
    %c133 = arith.constant 133 : index
    %668 = memref.load %arg2[%c133] : memref<144xf32, #tpu.memory_space<smem>>
    %669 = vector.broadcast %668 : f32 to vector<8x16xf32>
    %670 = arith.mulf %669, %663 : vector<8x16xf32>
    %671 = arith.addf %653, %670 : vector<8x16xf32>
    %c134 = arith.constant 134 : index
    %672 = memref.load %arg2[%c134] : memref<144xf32, #tpu.memory_space<smem>>
    %673 = vector.broadcast %672 : f32 to vector<8x16xf32>
    %674 = arith.mulf %673, %663 : vector<8x16xf32>
    %675 = arith.addf %657, %674 : vector<8x16xf32>
    %c135 = arith.constant 135 : index
    %676 = memref.load %arg2[%c135] : memref<144xf32, #tpu.memory_space<smem>>
    %677 = vector.broadcast %676 : f32 to vector<8x16xf32>
    %678 = arith.mulf %677, %663 : vector<8x16xf32>
    %679 = arith.addf %661, %678 : vector<8x16xf32>
    %c3_170 = arith.constant 3 : index
    %c9_171 = arith.constant 9 : index
    %c128_172 = arith.constant 128 : index
    %680 = vector.load %arg8[%c3_170, %c9_171, %c128_172] : memref<4x17x145xf32, #tpu.memory_space<vmem>>, vector<1x8x16xf32>
    %681 = vector.shape_cast %680 : vector<1x8x16xf32> to vector<8x16xf32>
    %c136 = arith.constant 136 : index
    %682 = memref.load %arg2[%c136] : memref<144xf32, #tpu.memory_space<smem>>
    %683 = vector.broadcast %682 : f32 to vector<8x16xf32>
    %684 = arith.mulf %683, %681 : vector<8x16xf32>
    %685 = arith.addf %667, %684 : vector<8x16xf32>
    %c137 = arith.constant 137 : index
    %686 = memref.load %arg2[%c137] : memref<144xf32, #tpu.memory_space<smem>>
    %687 = vector.broadcast %686 : f32 to vector<8x16xf32>
    %688 = arith.mulf %687, %681 : vector<8x16xf32>
    %689 = arith.addf %671, %688 : vector<8x16xf32>
    %c138 = arith.constant 138 : index
    %690 = memref.load %arg2[%c138] : memref<144xf32, #tpu.memory_space<smem>>
    %691 = vector.broadcast %690 : f32 to vector<8x16xf32>
    %692 = arith.mulf %691, %681 : vector<8x16xf32>
    %693 = arith.addf %675, %692 : vector<8x16xf32>
    %c139 = arith.constant 139 : index
    %694 = memref.load %arg2[%c139] : memref<144xf32, #tpu.memory_space<smem>>
    %695 = vector.broadcast %694 : f32 to vector<8x16xf32>
    %696 = arith.mulf %695, %681 : vector<8x16xf32>
    %697 = arith.addf %679, %696 : vector<8x16xf32>
    %c3_173 = arith.constant 3 : index
    %c9_174 = arith.constant 9 : index
    %c129_175 = arith.constant 129 : index
    %698 = vector.load %arg8[%c3_173, %c9_174, %c129_175] : memref<4x17x145xf32, #tpu.memory_space<vmem>>, vector<1x8x16xf32>
    %699 = vector.shape_cast %698 : vector<1x8x16xf32> to vector<8x16xf32>
    %c140 = arith.constant 140 : index
    %700 = memref.load %arg2[%c140] : memref<144xf32, #tpu.memory_space<smem>>
    %701 = vector.broadcast %700 : f32 to vector<8x16xf32>
    %702 = arith.mulf %701, %699 : vector<8x16xf32>
    %703 = arith.addf %685, %702 : vector<8x16xf32>
    %c141 = arith.constant 141 : index
    %704 = memref.load %arg2[%c141] : memref<144xf32, #tpu.memory_space<smem>>
    %705 = vector.broadcast %704 : f32 to vector<8x16xf32>
    %706 = arith.mulf %705, %699 : vector<8x16xf32>
    %707 = arith.addf %689, %706 : vector<8x16xf32>
    %c142 = arith.constant 142 : index
    %708 = memref.load %arg2[%c142] : memref<144xf32, #tpu.memory_space<smem>>
    %709 = vector.broadcast %708 : f32 to vector<8x16xf32>
    %710 = arith.mulf %709, %699 : vector<8x16xf32>
    %711 = arith.addf %693, %710 : vector<8x16xf32>
    %c143 = arith.constant 143 : index
    %712 = memref.load %arg2[%c143] : memref<144xf32, #tpu.memory_space<smem>>
    %713 = vector.broadcast %712 : f32 to vector<8x16xf32>
    %714 = arith.mulf %713, %699 : vector<8x16xf32>
    %715 = arith.addf %697, %714 : vector<8x16xf32>
    %c0_176 = arith.constant 0 : index
    %716 = memref.load %arg3[%c0_176] : memref<4xf32, #tpu.memory_space<smem>>
    %717 = vector.broadcast %716 : f32 to vector<8x16xf32>
    %718 = arith.addf %703, %717 : vector<8x16xf32>
    %cst_177 = arith.constant 0.000000e+00 : f32
    %719 = vector.broadcast %cst_177 : f32 to vector<8x16xf32>
    %720 = arith.maximumf %718, %719 : vector<8x16xf32>
    %c0_178 = arith.constant 0 : index
    %c0_179 = arith.constant 0 : index
    %c0_180 = arith.constant 0 : index
    %c0_181 = arith.constant 0 : index
    %721 = vector.load %arg7[%c0_178, %c0_179, %c0_180, %c0_181] : memref<1x4x8x16xf32, #tpu.memory_space<vmem>>, vector<1x1x8x16xf32>
    %722 = vector.shape_cast %721 : vector<1x1x8x16xf32> to vector<8x16xf32>
    %723 = vector.shape_cast %720 : vector<8x16xf32> to vector<1x1x8x16xf32>
    tpu.vector_store %arg7[%c0_178, %c0_179, %c0_180, %c0_181], %723 {strides = array<i32>} : memref<1x4x8x16xf32, #tpu.memory_space<vmem>>, vector<1x1x8x16xf32>,
    %c1_182 = arith.constant 1 : index
    %724 = memref.load %arg3[%c1_182] : memref<4xf32, #tpu.memory_space<smem>>
    %725 = vector.broadcast %724 : f32 to vector<8x16xf32>
    %726 = arith.addf %707, %725 : vector<8x16xf32>
    %cst_183 = arith.constant 0.000000e+00 : f32
    %727 = vector.broadcast %cst_183 : f32 to vector<8x16xf32>
    %728 = arith.maximumf %726, %727 : vector<8x16xf32>
    %c0_184 = arith.constant 0 : index
    %c1_185 = arith.constant 1 : index
    %c0_186 = arith.constant 0 : index
    %c0_187 = arith.constant 0 : index
    %729 = vector.load %arg7[%c0_184, %c1_185, %c0_186, %c0_187] : memref<1x4x8x16xf32, #tpu.memory_space<vmem>>, vector<1x1x8x16xf32>
    %730 = vector.shape_cast %729 : vector<1x1x8x16xf32> to vector<8x16xf32>
    %731 = vector.shape_cast %728 : vector<8x16xf32> to vector<1x1x8x16xf32>
    tpu.vector_store %arg7[%c0_184, %c1_185, %c0_186, %c0_187], %731 {strides = array<i32>} : memref<1x4x8x16xf32, #tpu.memory_space<vmem>>, vector<1x1x8x16xf32>,
    %c2_188 = arith.constant 2 : index
    %732 = memref.load %arg3[%c2_188] : memref<4xf32, #tpu.memory_space<smem>>
    %733 = vector.broadcast %732 : f32 to vector<8x16xf32>
    %734 = arith.addf %711, %733 : vector<8x16xf32>
    %cst_189 = arith.constant 0.000000e+00 : f32
    %735 = vector.broadcast %cst_189 : f32 to vector<8x16xf32>
    %736 = arith.maximumf %734, %735 : vector<8x16xf32>
    %c0_190 = arith.constant 0 : index
    %c2_191 = arith.constant 2 : index
    %c0_192 = arith.constant 0 : index
    %c0_193 = arith.constant 0 : index
    %737 = vector.load %arg7[%c0_190, %c2_191, %c0_192, %c0_193] : memref<1x4x8x16xf32, #tpu.memory_space<vmem>>, vector<1x1x8x16xf32>
    %738 = vector.shape_cast %737 : vector<1x1x8x16xf32> to vector<8x16xf32>
    %739 = vector.shape_cast %736 : vector<8x16xf32> to vector<1x1x8x16xf32>
    tpu.vector_store %arg7[%c0_190, %c2_191, %c0_192, %c0_193], %739 {strides = array<i32>} : memref<1x4x8x16xf32, #tpu.memory_space<vmem>>, vector<1x1x8x16xf32>,
    %c3_194 = arith.constant 3 : index
    %740 = memref.load %arg3[%c3_194] : memref<4xf32, #tpu.memory_space<smem>>
    %741 = vector.broadcast %740 : f32 to vector<8x16xf32>
    %742 = arith.addf %715, %741 : vector<8x16xf32>
    %cst_195 = arith.constant 0.000000e+00 : f32
    %743 = vector.broadcast %cst_195 : f32 to vector<8x16xf32>
    %744 = arith.maximumf %742, %743 : vector<8x16xf32>
    %c0_196 = arith.constant 0 : index
    %c3_197 = arith.constant 3 : index
    %c0_198 = arith.constant 0 : index
    %c0_199 = arith.constant 0 : index
    %745 = vector.load %arg7[%c0_196, %c3_197, %c0_198, %c0_199] : memref<1x4x8x16xf32, #tpu.memory_space<vmem>>, vector<1x1x8x16xf32>
    %746 = vector.shape_cast %745 : vector<1x1x8x16xf32> to vector<8x16xf32>
    %747 = vector.shape_cast %744 : vector<8x16xf32> to vector<1x1x8x16xf32>
    tpu.vector_store %arg7[%c0_196, %c3_197, %c0_198, %c0_199], %747 {strides = array<i32>} : memref<1x4x8x16xf32, #tpu.memory_space<vmem>>, vector<1x1x8x16xf32>,
    return
  }
  func.func @transform_0(%arg0: i32, %arg1: i32) -> i32 {
    %c0_i32 = arith.constant 0 : i32
    %c0_i32_0 = arith.constant 0 : i32
    return %c0_i32 : i32
  }
  func.func @transform_1(%arg0: i32, %arg1: i32) -> i32 {
    %c0_i32 = arith.constant 0 : i32
    %c0_i32_0 = arith.constant 0 : i32
    return %c0_i32 : i32
  }
  func.func @transform_2(%arg0: i32, %arg1: i32) -> (i32, i32, i32, i32) {
    %c0_i32 = arith.constant 0 : i32
    %c0_i32_0 = arith.constant 0 : i32
    %c0_i32_1 = arith.constant 0 : i32
    return %arg0, %c0_i32, %arg1, %c0_i32_0 : i32, i32, i32, i32
  }
  func.func @transform_3(%arg0: i32, %arg1: i32) -> (i32, i32, i32, i32) {
    %c1_i32 = arith.constant 1 : i32
    %0 = arith.muli %arg1, %c1_i32 : i32
    %c1_i32_0 = arith.constant 1 : i32
    %1 = arith.subi %0, %c1_i32_0 : i32
    %c0_i32 = arith.constant 0 : i32
    %2 = arith.maxsi %1, %c0_i32 : i32
    %c0_i32_1 = arith.constant 0 : i32
    %c0_i32_2 = arith.constant 0 : i32
    %c0_i32_3 = arith.constant 0 : i32
    return %arg0, %c0_i32_1, %2, %c0_i32_2 : i32, i32, i32, i32
  }
  func.func @transform_4(%arg0: i32, %arg1: i32) -> (i32, i32, i32, i32) {
    %c1_i32 = arith.constant 1 : i32
    %0 = arith.addi %arg1, %c1_i32 : i32
    %c1_i32_0 = arith.constant 1 : i32
    %1 = arith.muli %0, %c1_i32_0 : i32
    %c1_i32_1 = arith.constant 1 : i32
    %2 = arith.minsi %1, %c1_i32_1 : i32
    %c0_i32 = arith.constant 0 : i32
    %c0_i32_2 = arith.constant 0 : i32
    %c0_i32_3 = arith.constant 0 : i32
    return %arg0, %c0_i32, %2, %c0_i32_2 : i32, i32, i32, i32
  }
  func.func @transform_5(%arg0: i32, %arg1: i32) -> (i32, i32, i32, i32) {
    %c0_i32 = arith.constant 0 : i32
    %c0_i32_0 = arith.constant 0 : i32
    %c0_i32_1 = arith.constant 0 : i32
    return %arg0, %c0_i32, %arg1, %c0_i32_0 : i32, i32, i32, i32
  }
}

</mosaic_0001>

<llo_original>
// kernel: tpu_custom_call.1
$region0: #{tpu_custom_call.1}
  #allocation0 [shape = 'u32[]', space=smem, size = 0x4, offset = 0x4, fixed_abs, tag = 'smem constant byte address 0x4 - core index']
  #allocation1 [shape = 'u32[144,128]{1,0:T(1,128)}', space=vmem, size = 0x12000, scoped, tag = 'internal scratch']
  #allocation2 [shape = 'f32[4,17,145]{2,1,0:T(8,128)}', space=vmem, size = 0x18000, scoped, tag = 'scratch operand']
  %s0 = inlined_call_operand.hbm [shape: f32[144], index: 0, kind: input, shape index: {}]
  %s1 = inlined_call_operand.vmem [shape: f32[4], index: 1, kind: input, shape index: {}]
  %s2 = inlined_call_operand.hbm [shape: f32[2,4,16,16], index: 2, kind: input, shape index: {}]
  %s3 = inlined_call_operand.hbm [shape: f32[2,4,16,16], index: 3, kind: input, shape index: {}]
  %s4 = inlined_call_operand.hbm [shape: f32[2,4,16,16], index: 4, kind: input, shape index: {}]
  %s5 = inlined_call_operand.hbm [shape: f32[2,4,16,16], index: 5, kind: output, shape index: {}]
  %s6 = sld [smem:[#allocation0]]
  $region89: #{tpu_custom_call.1} parent=0
    _
  %s8 = ssub.s32 1, %s6
  %s9 = scalar_select 0, %s8, %s6
  $region1: #{tpu_custom_call.1} parent=0
    #allocation3 [shape = 'u8[1024]{0}', space=smem, size = 0x400, scoped, tag = 'input window, operand 0, single buffered']
    #allocation4 [shape = 's32[2]{0}', space=sflag, size = 0x8, scoped, tag = 'scoped memory for tpu_custom_call.1']
    #allocation5 [shape = 's32[2]{0}', space=sflag, size = 0x8, scoped, tag = 'scoped memory for tpu_custom_call.1']
    #allocation6 [shape = 's32[2]{0}', space=sflag, size = 0x8, scoped, tag = 'scoped memory for tpu_custom_call.1']
    #allocation7 [shape = 's32[2]{0}', space=sflag, size = 0x8, scoped, tag = 'scoped memory for tpu_custom_call.1']
    #allocation8 [shape = 'u8[512]{0}', space=smem, size = 0x200, scoped, tag = 'input window, operand 1, single buffered']
    #allocation9 [shape = 'u8[32768]{0}', space=vmem, size = 0x8000, scoped, tag = 'input window, operand 2']
    #allocation10 [shape = 'u8[32768]{0}', space=vmem, size = 0x8000, scoped, tag = 'input window, operand 3']
    #allocation11 [shape = 's32[2]{0}', space=sflag, size = 0x8, scoped, tag = 'scoped memory for tpu_custom_call.1']
    #allocation12 [shape = 'u8[32768]{0}', space=vmem, size = 0x8000, scoped, tag = 'input window, operand 4']
    #allocation13 [shape = 'u8[32768]{0}', space=vmem, size = 0x8000, scoped, tag = 'output window, operand 0']
    %10 = vsyncpa [#allocation6], 0
    %11 = vsyncpa [#allocation7], 0
    %12 = vsyncpa [#allocation4], 0
    %s13 = scalar_lea.sflag [#allocation4], 1
    %14 = vsyncpa %s13, 0
    %15 = vsyncpa [#allocation11], 0
    %s16 = scalar_lea.sflag [#allocation11], 1
    %17 = vsyncpa %s16, 0
    %18 = vsyncpa [#allocation5], 0
    %s19 = scalar_lea.sflag [#allocation5], 1
    %20 = vsyncpa %s19, 0
    loop: start=0, step=1, limit=6
    $region2: #{tpu_custom_call.1} parent=1 // loop_pre_header
      _
    $region3: #{tpu_custom_call.1} parent=1 // loop_header
      %s22 = sphi 0, %s26
      %p23 = scmp.ge.s32.totalorder %s22, 6
      %s29 = sphi 0, %s41
      %s30 = sphi 0, %s37
      %s31 = sphi 0, %s29
      %s32 = sphi 0, %s30
      %s33 = sphi 0, %s31
      %s34 = sphi 0, %s32
      %s42 = sphi 0, %s42
      %s44 = sphi 0, %s42
      %s45 = sphi 0, %s44
      %s59 = sphi 0, %s45
      %s63 = sphi 0, %s63
      %s65 = sphi 0, %s63
      %s66 = sphi 0, %s65
      %s80 = sphi 0, %s66
      %s88 = sphi 0, %s90
      %s91 = sphi 0, %s88
      %s92 = sphi 0, %s91
      %s108 = sphi 0, %s92
      %s122 = sphi 0, %s124
      %s125 = sphi 0, %s122
      %s126 = sphi 0, %s125
      %s142 = sphi 0, %s126
      %s156 = sphi 0, %s158
      %s159 = sphi 0, %s156
      %s160 = sphi 0, %s159
      %s176 = sphi 0, %s160
      %s184 = sphi 0, %s186
      %s187 = sphi 0, %s184
      %s188 = sphi 0, %s187
      %s204 = sphi 0, %s188
    $region4: #{tpu_custom_call.1} parent=1 // loop_header_branch
      %25 = sbr.rel (%p23) target = $region8
    $region5: #{tpu_custom_call.1} parent=1 // loop_body
      %s27 = ssub.s32 %s22, 1
      %s28 = ssub.s32 %s22, 2
      %s35 = sadd.s32 1, %s30
      %p36 = scmp.ge.s32.totalorder %s35, 2
      %s37 = scalar_select %p36, 0, %s35
      %s38 = sadd.s32 1, %s29
      %s39 = scalar_select %p36, %s38, %s29
      %p40 = scmp.ge.s32.totalorder %s39, 2
      %s41 = scalar_select %p40, 0, %s39
      %s43 = sadd.s32 %s42, 1
      %p46 = scmp.eq.s32.totalorder %s22, 3
      %p47 = scmp.ne.s32.totalorder %s42, %s44
      %p48 = scmp.eq.s32.totalorder %s22, 0
      %p49 = por %p47, %p48
      %p50 = scmp.ne.s32.totalorder %s42, %s44
      %p51 = scmp.eq.s32.totalorder %s27, 3
      %p52 = por %p50, %p51
      %p53 = scmp.ne.s32.totalorder %s44, %s45
      %p54 = scmp.eq.s32.totalorder %s27, 0
      %p55 = por %p53, %p54
      %p56 = scmp.ne.s32.totalorder %s44, %s45
      %p57 = scmp.eq.s32.totalorder %s28, 3
      %p58 = por %p56, %p57
      %p60 = scmp.ne.s32.totalorder %s45, %s59
      %p61 = scmp.eq.s32.totalorder %s28, 0
      %p62 = por %p60, %p61
      %s64 = sadd.s32 %s63, 1
      %p67 = scmp.eq.s32.totalorder %s22, 3
      %p68 = scmp.ne.s32.totalorder %s63, %s65
      %p69 = scmp.eq.s32.totalorder %s22, 0
      %p70 = por %p68, %p69
      %p71 = scmp.ne.s32.totalorder %s63, %s65
      %p72 = scmp.eq.s32.totalorder %s27, 3
      %p73 = por %p71, %p72
      %p74 = scmp.ne.s32.totalorder %s65, %s66
      %p75 = scmp.eq.s32.totalorder %s27, 0
      %p76 = por %p74, %p75
      %p77 = scmp.ne.s32.totalorder %s65, %s66
      %p78 = scmp.eq.s32.totalorder %s28, 3
      %p79 = por %p77, %p78
      %p81 = scmp.ne.s32.totalorder %s66, %s80
      %p82 = scmp.eq.s32.totalorder %s28, 0
      %p83 = por %p81, %p82
      %s84 = ssub.s32 %s29, %s41
      %s85 = ssub.s32 %s30, %s37
      %s86 = sor.u32 %s84, %s85
      %p87 = scmp.eq.s32.totalorder %s86, 0
      %s89 = sadd.s32 %s88, 1
      %s90 = scalar_select %p87, %s88, %s89
      %p93 = pneg %p87
      %p94 = scmp.eq.s32.totalorder %s22, 3
      %p95 = por %p93, %p94
      %p96 = scmp.ne.s32.totalorder %s88, %s91
      %p97 = scmp.eq.s32.totalorder %s22, 0
      %p98 = por %p96, %p97
      %p99 = scmp.ne.s32.totalorder %s88, %s91
      %p100 = scmp.eq.s32.totalorder %s27, 3
      %p101 = por %p99, %p100
      %p102 = scmp.ne.s32.totalorder %s91, %s92
      %p103 = scmp.eq.s32.totalorder %s27, 0
      %p104 = por %p102, %p103
      %p105 = scmp.ne.s32.totalorder %s91, %s92
      %p106 = scmp.eq.s32.totalorder %s28, 3
      %p107 = por %p105, %p106
      %p109 = scmp.ne.s32.totalorder %s92, %s108
      %p110 = scmp.eq.s32.totalorder %s28, 0
      %p111 = por %p109, %p110
      %s112 = ssub.s32 %s30, 1
      %p113 = scmp.gt.s32.totalorder %s112, 0
      %s114 = scalar_select %p113, %s112, 0
      %s115 = ssub.s32 %s37, 1
      %p116 = scmp.gt.s32.totalorder %s115, 0
      %s117 = scalar_select %p116, %s115, 0
      %s118 = ssub.s32 %s29, %s41
      %s119 = ssub.s32 %s114, %s117
      %s120 = sor.u32 %s118, %s119
      %p121 = scmp.eq.s32.totalorder %s120, 0
      %s123 = sadd.s32 %s122, 1
      %s124 = scalar_select %p121, %s122, %s123
      %p127 = pneg %p121
      %p128 = scmp.eq.s32.totalorder %s22, 3
      %p129 = por %p127, %p128
      %p130 = scmp.ne.s32.totalorder %s122, %s125
      %p131 = scmp.eq.s32.totalorder %s22, 0
      %p132 = por %p130, %p131
      %p133 = scmp.ne.s32.totalorder %s122, %s125
      %p134 = scmp.eq.s32.totalorder %s27, 3
      %p135 = por %p133, %p134
      %p136 = scmp.ne.s32.totalorder %s125, %s126
      %p137 = scmp.eq.s32.totalorder %s27, 0
      %p138 = por %p136, %p137
      %p139 = scmp.ne.s32.totalorder %s125, %s126
      %p140 = scmp.eq.s32.totalorder %s28, 3
      %p141 = por %p139, %p140
      %p143 = scmp.ne.s32.totalorder %s126, %s142
      %p144 = scmp.eq.s32.totalorder %s28, 0
      %p145 = por %p143, %p144
      %s146 = sadd.s32 %s30, 1
      %p147 = scmp.lt.s32.totalorder %s146, 1
      %s148 = scalar_select %p147, %s146, 1
      %s149 = sadd.s32 %s37, 1
      %p150 = scmp.lt.s32.totalorder %s149, 1
      %s151 = scalar_select %p150, %s149, 1
      %s152 = ssub.s32 %s29, %s41
      %s153 = ssub.s32 %s148, %s151
      %s154 = sor.u32 %s152, %s153
      %p155 = scmp.eq.s32.totalorder %s154, 0
      %s157 = sadd.s32 %s156, 1
      %s158 = scalar_select %p155, %s156, %s157
      %p161 = pneg %p155
      %p162 = scmp.eq.s32.totalorder %s22, 3
      %p163 = por %p161, %p162
      %p164 = scmp.ne.s32.totalorder %s156, %s159
      %p165 = scmp.eq.s32.totalorder %s22, 0
      %p166 = por %p164, %p165
      %p167 = scmp.ne.s32.totalorder %s156, %s159
      %p168 = scmp.eq.s32.totalorder %s27, 3
      %p169 = por %p167, %p168
      %p170 = scmp.ne.s32.totalorder %s159, %s160
      %p171 = scmp.eq.s32.totalorder %s27, 0
      %p172 = por %p170, %p171
      %p173 = scmp.ne.s32.totalorder %s159, %s160
      %p174 = scmp.eq.s32.totalorder %s28, 3
      %p175 = por %p173, %p174
      %p177 = scmp.ne.s32.totalorder %s160, %s176
      %p178 = scmp.eq.s32.totalorder %s28, 0
      %p179 = por %p177, %p178
      %s180 = ssub.s32 %s29, %s41
      %s181 = ssub.s32 %s30, %s37
      %s182 = sor.u32 %s180, %s181
      %p183 = scmp.eq.s32.totalorder %s182, 0
      %s185 = sadd.s32 %s184, 1
      %s186 = scalar_select %p183, %s184, %s185
      %p189 = pneg %p183
      %p190 = scmp.eq.s32.totalorder %s22, 3
      %p191 = por %p189, %p190
      %p192 = scmp.ne.s32.totalorder %s184, %s187
      %p193 = scmp.eq.s32.totalorder %s22, 0
      %p194 = por %p192, %p193
      %p195 = scmp.ne.s32.totalorder %s184, %s187
      %p196 = scmp.eq.s32.totalorder %s27, 3
      %p197 = por %p195, %p196
      %p198 = scmp.ne.s32.totalorder %s187, %s188
      %p199 = scmp.eq.s32.totalorder %s27, 0
      %p200 = por %p198, %p199
      %p201 = scmp.ne.s32.totalorder %s187, %s188
      %p202 = scmp.eq.s32.totalorder %s28, 3
      %p203 = por %p201, %p202
      %p205 = scmp.ne.s32.totalorder %s188, %s204
      %p206 = scmp.eq.s32.totalorder %s28, 0
      %p207 = por %p205, %p206
      %p208 = scmp.le.s32.totalorder 1, %s22
      %p209 = scmp.lt.s32.totalorder %s22, 5
      %p210 = pnand %p208, %p209
      %p211 = pneg %p210
      // Predicated region
      $region9: #{tpu_custom_call.1} parent=5 // pred_check
        _
      $region10: #{tpu_custom_call.1} parent=5 // pred_check_branch
        %213 = sbr.rel (%p210) target = $region12
      $region11: #{tpu_custom_call.1} parent=5 // pred_region
        %s214 = ssub.s32 %s22, 1
        // Predicated region
        $region13: #{tpu_custom_call.1} parent=11 // pred_check
          %p215 = pneg %p55
        $region14: #{tpu_custom_call.1} parent=11 // pred_check_branch
          %217 = sbr.rel (%p215) target = $region16
        $region15: #{tpu_custom_call.1} parent=11 // pred_region
          %s219 = ssub.s32 32, 32
          %220 = vsyncadd [#allocation6], %s219
          %223 = dma.hbm_to_smem %s0, 32, [#allocation3], [#allocation6]
        $region16: #{tpu_custom_call.1} parent=11 // pred_fallthru
          _
        // Predicated region
        $region17: #{tpu_custom_call.1} parent=11 // pred_check
          %p224 = pneg %p76
        $region18: #{tpu_custom_call.1} parent=11 // pred_check_branch
          %226 = sbr.rel (%p224) target = $region20
        $region19: #{tpu_custom_call.1} parent=11 // pred_region
          %s228 = ssub.s32 16, 16
          %229 = vsyncadd [#allocation7], %s228
          %s231 = sshll.u32 %s1, 4
          %s232 = int_to_ptr.vmem [resolvable:$true] %s231
          %234 = dma.vmem_to_smem %s232, 16, [#allocation8], [#allocation7]
        $region20: #{tpu_custom_call.1} parent=11 // pred_fallthru
          _
      $region12: #{tpu_custom_call.1} parent=5 // pred_fallthru
        _
      %p235 = scmp.lt.s32.totalorder %s22, 4
      // Predicated region
      $region21: #{tpu_custom_call.1} parent=5 // pred_check
        %p236 = pneg %p235
      $region22: #{tpu_custom_call.1} parent=5 // pred_check_branch
        %238 = sbr.rel (%p236) target = $region24
      $region23: #{tpu_custom_call.1} parent=5 // pred_region
        // Predicated region
        $region25: #{tpu_custom_call.1} parent=23 // pred_check
          %p239 = pneg %p98
        $region26: #{tpu_custom_call.1} parent=23 // pred_check_branch
          %241 = sbr.rel (%p239) target = $region28
        $region27: #{tpu_custom_call.1} parent=23 // pred_region
          %s242 = sand.u32 %s88, 1
          %s243 = scalar_lea.sflag [#allocation4], %s242
          %s244 = sand.u32 %s88, 1
          %s245 = smul.addr %s244, 32
          %s246 = scalar_lea.vmem [#allocation9], %s245
          %s248 = ssub.s32 512, 512
          %249 = vsyncadd %s243, %s248
          %s250 = smul.addr %s29, 8
          %s251 = sadd.s32 %s30, %s250
          %s252 = smul.addr %s251, 128
          %s253 = scalar_lea.hbm %s2, %s252
          %s254 = sshll.u32 %s246, 4
          %s255 = int_to_ptr.vmem [resolvable:$true] %s254
          %260 = dma.hbm_to_vmem [thread:$0]  %s253, 512, %s255, %s243, 256, 128, 8
        $region28: #{tpu_custom_call.1} parent=23 // pred_fallthru
          _
        // Predicated region
        $region29: #{tpu_custom_call.1} parent=23 // pred_check
          %p261 = pneg %p132
        $region30: #{tpu_custom_call.1} parent=23 // pred_check_branch
          %263 = sbr.rel (%p261) target = $region32
        $region31: #{tpu_custom_call.1} parent=23 // pred_region
          %s264 = sand.u32 %s22, 1
          %s265 = scalar_lea.sflag [#allocation11], %s264
          %s266 = sand.u32 %s122, 1
          %s267 = smul.addr %s266, 32
          %s268 = scalar_lea.vmem [#allocation10], %s267
          %s269 = ssub.s32 %s30, 1
          %p270 = scmp.gt.s32.totalorder %s269, 0
          %s271 = scalar_select %p270, %s269, 0
          %s273 = ssub.s32 512, 512
          %274 = vsyncadd %s265, %s273
          %s275 = smul.addr %s29, 8
          %s276 = sadd.s32 %s271, %s275
          %s277 = smul.addr %s276, 128
          %s278 = scalar_lea.hbm %s3, %s277
          %s279 = sshll.u32 %s268, 4
          %s280 = int_to_ptr.vmem [resolvable:$true] %s279
          %285 = dma.hbm_to_vmem [thread:$0]  %s278, 512, %s280, %s265, 256, 128, 8
        $region32: #{tpu_custom_call.1} parent=23 // pred_fallthru
          _
        // Predicated region
        $region33: #{tpu_custom_call.1} parent=23 // pred_check
          %p286 = pneg %p166
        $region34: #{tpu_custom_call.1} parent=23 // pred_check_branch
          %288 = sbr.rel (%p286) target = $region36
        $region35: #{tpu_custom_call.1} parent=23 // pred_region
          %s289 = sand.u32 %s22, 1
          %s290 = scalar_lea.sflag [#allocation11], %s289
          %s291 = sand.u32 %s156, 1
          %s292 = smul.addr %s291, 32
          %s293 = scalar_lea.vmem [#allocation12], %s292
          %s294 = sadd.s32 %s30, 1
          %p295 = scmp.lt.s32.totalorder %s294, 1
          %s296 = scalar_select %p295, %s294, 1
          %s298 = ssub.s32 512, 512
          %299 = vsyncadd %s290, %s298
          %s300 = smul.addr %s29, 8
          %s301 = sadd.s32 %s296, %s300
          %s302 = smul.addr %s301, 128
          %s303 = scalar_lea.hbm %s4, %s302
          %s304 = sshll.u32 %s293, 4
          %s305 = int_to_ptr.vmem [resolvable:$true] %s304
          %310 = dma.hbm_to_vmem [thread:$0]  %s303, 512, %s305, %s290, 256, 128, 8
        $region36: #{tpu_custom_call.1} parent=23 // pred_fallthru
          _
      $region24: #{tpu_custom_call.1} parent=5 // pred_fallthru
        _
      %p311 = scmp.le.s32.totalorder 1, %s22
      %p312 = scmp.lt.s32.totalorder %s22, 5
      %p313 = pnand %p311, %p312
      %p314 = pneg %p313
      // Predicated region
      $region37: #{tpu_custom_call.1} parent=5 // pred_check
        _
      $region38: #{tpu_custom_call.1} parent=5 // pred_check_branch
        %316 = sbr.rel (%p313) target = $region40
      $region39: #{tpu_custom_call.1} parent=5 // pred_region
        %s317 = ssub.s32 %s22, 1
        // Predicated region
        $region41: #{tpu_custom_call.1} parent=39 // pred_check
          %p318 = pneg %p55
        $region42: #{tpu_custom_call.1} parent=39 // pred_check_branch
          %320 = sbr.rel (%p318) target = $region44
        $region43: #{tpu_custom_call.1} parent=39 // pred_region
          %321 = dma.done [#allocation6], 32
        $region44: #{tpu_custom_call.1} parent=39 // pred_fallthru
          _
        // Predicated region
        $region45: #{tpu_custom_call.1} parent=39 // pred_check
          %p322 = pneg %p76
        $region46: #{tpu_custom_call.1} parent=39 // pred_check_branch
          %324 = sbr.rel (%p322) target = $region48
        $region47: #{tpu_custom_call.1} parent=39 // pred_region
          %325 = dma.done [#allocation7], 16
        $region48: #{tpu_custom_call.1} parent=39 // pred_fallthru
          _
        %s326 = sand.u32 %s91, 1
        %s327 = scalar_lea.sflag [#allocation4], %s326
        %s328 = sand.u32 %s91, 1
        %s329 = smul.addr %s328, 32
        %s330 = scalar_lea.vmem [#allocation9], %s329
        // Predicated region
        $region49: #{tpu_custom_call.1} parent=39 // pred_check
          %p331 = pneg %p104
        $region50: #{tpu_custom_call.1} parent=39 // pred_check_branch
          %333 = sbr.rel (%p331) target = $region52
        $region51: #{tpu_custom_call.1} parent=39 // pred_region
          %334 = dma.done %s327, 512
        $region52: #{tpu_custom_call.1} parent=39 // pred_fallthru
          _
        %s335 = sand.u32 %s27, 1
        %s336 = scalar_lea.sflag [#allocation11], %s335
        %s337 = sand.u32 %s125, 1
        %s338 = smul.addr %s337, 32
        %s339 = scalar_lea.vmem [#allocation10], %s338
        // Predicated region
        $region53: #{tpu_custom_call.1} parent=39 // pred_check
          %p340 = pneg %p138
        $region54: #{tpu_custom_call.1} parent=39 // pred_check_branch
          %342 = sbr.rel (%p340) target = $region56
        $region55: #{tpu_custom_call.1} parent=39 // pred_region
          %343 = dma.done %s336, 512
        $region56: #{tpu_custom_call.1} parent=39 // pred_fallthru
          _
        %s344 = sand.u32 %s27, 1
        %s345 = scalar_lea.sflag [#allocation11], %s344
        %s346 = sand.u32 %s159, 1
        %s347 = smul.addr %s346, 32
        %s348 = scalar_lea.vmem [#allocation12], %s347
        // Predicated region
        $region57: #{tpu_custom_call.1} parent=39 // pred_check
          %p349 = pneg %p172
        $region58: #{tpu_custom_call.1} parent=39 // pred_check_branch
          %351 = sbr.rel (%p349) target = $region60
        $region59: #{tpu_custom_call.1} parent=39 // pred_region
          %352 = dma.done %s345, 512
        $region60: #{tpu_custom_call.1} parent=39 // pred_fallthru
          _
        %353 = sfence
        %p354 = pneg %p55
        %p355 = pneg %p52
        %p356 = pneg %p76
        %p357 = pneg %p73
        %s358 = sand.u32 %s91, 1
        %s359 = scalar_lea.sflag [#allocation4], %s358
        %s360 = sand.u32 %s91, 1
        %s361 = smul.addr %s360, 32
        %s362 = scalar_lea.vmem [#allocation9], %s361
        %p363 = pneg %p104
        %p364 = pneg %p101
        %s365 = sand.u32 %s27, 1
        %s366 = scalar_lea.sflag [#allocation11], %s365
        %s367 = sand.u32 %s125, 1
        %s368 = smul.addr %s367, 32
        %s369 = scalar_lea.vmem [#allocation10], %s368
        %p370 = pneg %p138
        %p371 = pneg %p135
        %s372 = sand.u32 %s27, 1
        %s373 = scalar_lea.sflag [#allocation11], %s372
        %s374 = sand.u32 %s159, 1
        %s375 = smul.addr %s374, 32
        %s376 = scalar_lea.vmem [#allocation12], %s375
        %p377 = pneg %p172
        %p378 = pneg %p169
        %p379 = pneg %p200
        %p380 = pneg %p197
        %s381 = sand.u32 %s187, 1
        %s382 = scalar_lea.sflag [#allocation5], %s381
        %s383 = sand.u32 %s187, 1
        %s384 = smul.addr %s383, 32
        %s385 = scalar_lea.vmem [#allocation13], %s384
        %s386 = ssub.s32 %s32, 1
        %p387 = scmp.gt.s32.totalorder %s386, 0
        %s388 = scalar_select %p387, %s386, 0
        %s389 = sadd.s32 %s32, 1
        %p390 = scmp.lt.s32.totalorder %s389, 1
        %s391 = scalar_select %p390, %s389, 1
        %vm392 = vcmask 1048575
        %393 = vst.msk [vmem:[#allocation2] sm:$0x80] %vm392, 0.0
        %vm394 = vcmask 1048568
        %395 = vst.msk [vmem:[#allocation2 + $0x10] sm:$0xff] %vm394, 0.0
        %vm396 = vcmask 1041400
        %397 = vst.msk [vmem:[#allocation2 + $0x20] sm:$0x1] %vm396, 0.0
        %vm398 = vcmask 138375
        %399 = vst.msk [vmem:[#allocation2 + $0x8] sm:$0x80] %vm398, 0.0
        %vm400 = vcmask 138368
        %401 = vst.msk [vmem:[#allocation2 + $0x18] sm:$0xff] %vm400, 0.0
        %vm402 = vcmask 131200
        %403 = vst.msk [vmem:[#allocation2 + $0x28] sm:$0x1] %vm402, 0.0
        %s404 = scalar_lea.vmem [#allocation2], 48
        %405 = vst.msk [vmem:[%s404] sm:$0x80] %vm392, 0.0
        %406 = vst.msk [vmem:[%s404 + $0x10] sm:$0xff] %vm394, 0.0
        %407 = vst.msk [vmem:[%s404 + $0x20] sm:$0x1] %vm396, 0.0
        %408 = vst.msk [vmem:[%s404 + $0x8] sm:$0x80] %vm398, 0.0
        %409 = vst.msk [vmem:[%s404 + $0x18] sm:$0xff] %vm400, 0.0
        %410 = vst.msk [vmem:[%s404 + $0x28] sm:$0x1] %vm402, 0.0
        %s411 = scalar_lea.vmem [#allocation2], 96
        %412 = vst.msk [vmem:[%s411] sm:$0x80] %vm392, 0.0
        %413 = vst.msk [vmem:[%s411 + $0x10] sm:$0xff] %vm394, 0.0
        %414 = vst.msk [vmem:[%s411 + $0x20] sm:$0x1] %vm396, 0.0
        %415 = vst.msk [vmem:[%s411 + $0x8] sm:$0x80] %vm398, 0.0
        %416 = vst.msk [vmem:[%s411 + $0x18] sm:$0xff] %vm400, 0.0
        %417 = vst.msk [vmem:[%s411 + $0x28] sm:$0x1] %vm402, 0.0
        %s418 = scalar_lea.vmem [#allocation2], 144
        %419 = vst.msk [vmem:[%s418] sm:$0x80] %vm392, 0.0
        %420 = vst.msk [vmem:[%s418 + $0x10] sm:$0xff] %vm394, 0.0
        %421 = vst.msk [vmem:[%s418 + $0x20] sm:$0x1] %vm396, 0.0
        %422 = vst.msk [vmem:[%s418 + $0x8] sm:$0x80] %vm398, 0.0
        %423 = vst.msk [vmem:[%s418 + $0x18] sm:$0xff] %vm400, 0.0
        %424 = vst.msk [vmem:[%s418 + $0x28] sm:$0x1] %vm402, 0.0
        %v425 = vld [vmem:[%s330] sm:$0xff]
        %vm426 = vcmask 130048
        %427 = vst.msk [vmem:[#allocation2 + $0x18] sm:$0xff] %vm426, %v425
        %s428 = scalar_lea.vmem %s330, 8 [#allocation9]
        %v429 = vld [vmem:[%s428] sm:$0xff]
        %430 = vst.msk [vmem:[%s404 + $0x18] sm:$0xff] %vm426, %v429
        %s431 = scalar_lea.vmem %s330, 16 [#allocation9]
        %v432 = vld [vmem:[%s431] sm:$0xff]
        %433 = vst.msk [vmem:[%s411 + $0x18] sm:$0xff] %vm426, %v432
        %s434 = scalar_lea.vmem %s330, 24 [#allocation9]
        %v435 = vld [vmem:[%s434] sm:$0xff]
        %436 = vst.msk [vmem:[%s418 + $0x18] sm:$0xff] %vm426, %v435
        %p437 = scmp.eq.s32.totalorder %s32, 0
        // Predicated region
        $region61: #{tpu_custom_call.1} parent=39 // pred_check
          %p438 = pneg %p437
        $region62: #{tpu_custom_call.1} parent=39 // pred_check_branch
          %440 = sbr.rel (%p438) target = $region64
        $region63: #{tpu_custom_call.1} parent=39 // pred_region
          %vm441 = vcmask 122880
          %442 = vst.msk [vmem:[#allocation2 + $0xf] sm:$0x1] %vm441, 0.0
          %443 = vst.msk [vmem:[%s404 + $0xf] sm:$0x1] %vm441, 0.0
          %444 = vst.msk [vmem:[%s411 + $0xf] sm:$0x1] %vm441, 0.0
          %445 = vst.msk [vmem:[%s418 + $0xf] sm:$0x1] %vm441, 0.0
        $region64: #{tpu_custom_call.1} parent=39 // pred_fallthru
          _
        %p446 = scmp.gt.s32.totalorder %s32, 0
        // Predicated region
        $region65: #{tpu_custom_call.1} parent=39 // pred_check
          %p447 = pneg %p446
        $region66: #{tpu_custom_call.1} parent=39 // pred_check_branch
          %449 = sbr.rel (%p447) target = $region68
        $region67: #{tpu_custom_call.1} parent=39 // pred_region
          %v450 = vld [vmem:[%s339 + $0x7] sm:$0x1]
          %vm451 = vcmask 122880
          %452 = vst.msk [vmem:[#allocation2 + $0xf] sm:$0x1] %vm451, %v450
          %s453 = scalar_lea.vmem %s339, 8 [#allocation10]
          %v454 = vld [vmem:[%s453 + $0x7] sm:$0x1]
          %455 = vst.msk [vmem:[%s404 + $0xf] sm:$0x1] %vm451, %v454
          %s456 = scalar_lea.vmem %s339, 16 [#allocation10]
          %v457 = vld [vmem:[%s456 + $0x7] sm:$0x1]
          %458 = vst.msk [vmem:[%s411 + $0xf] sm:$0x1] %vm451, %v457
          %s459 = scalar_lea.vmem %s339, 24 [#allocation10]
          %v460 = vld [vmem:[%s459 + $0x7] sm:$0x1]
          %461 = vst.msk [vmem:[%s418 + $0xf] sm:$0x1] %vm451, %v460
        $region68: #{tpu_custom_call.1} parent=39 // pred_fallthru
          _
        %p462 = scmp.eq.s32.totalorder %s32, 1
        // Predicated region
        $region69: #{tpu_custom_call.1} parent=39 // pred_check
          %p463 = pneg %p462
        $region70: #{tpu_custom_call.1} parent=39 // pred_check_branch
          %465 = sbr.rel (%p463) target = $region72
        $region71: #{tpu_custom_call.1} parent=39 // pred_region
          %vm466 = vcmask 122880
          %467 = vst.msk [vmem:[#allocation2 + $0x28] sm:$0x1] %vm466, 0.0
          %468 = vst.msk [vmem:[%s404 + $0x28] sm:$0x1] %vm466, 0.0
          %469 = vst.msk [vmem:[%s411 + $0x28] sm:$0x1] %vm466, 0.0
          %470 = vst.msk [vmem:[%s418 + $0x28] sm:$0x1] %vm466, 0.0
        $region72: #{tpu_custom_call.1} parent=39 // pred_fallthru
          _
        %p471 = scmp.lt.s32.totalorder %s32, 1
        // Predicated region
        $region73: #{tpu_custom_call.1} parent=39 // pred_check
          %p472 = pneg %p471
        $region74: #{tpu_custom_call.1} parent=39 // pred_check_branch
          %474 = sbr.rel (%p472) target = $region76
        $region75: #{tpu_custom_call.1} parent=39 // pred_region
          %v475 = vld [vmem:[%s348] sm:$0x1]
          %vm476 = vcmask 122880
          %477 = vst.msk [vmem:[#allocation2 + $0x28] sm:$0x1] %vm476, %v475
          %s478 = scalar_lea.vmem %s348, 8 [#allocation12]
          %v479 = vld [vmem:[%s478] sm:$0x1]
          %480 = vst.msk [vmem:[%s404 + $0x28] sm:$0x1] %vm476, %v479
          %s481 = scalar_lea.vmem %s348, 16 [#allocation12]
          %v482 = vld [vmem:[%s481] sm:$0x1]
          %483 = vst.msk [vmem:[%s411 + $0x28] sm:$0x1] %vm476, %v482
          %s484 = scalar_lea.vmem %s348, 24 [#allocation12]
          %v485 = vld [vmem:[%s484] sm:$0x1]
          %486 = vst.msk [vmem:[%s418 + $0x28] sm:$0x1] %vm476, %v485
        $region76: #{tpu_custom_call.1} parent=39 // pred_fallthru
          _
        %v487 = vld [vmem:[#allocation2] sm:$0x80]
        %v488 = vld [vmem:[#allocation2 + $0x8] sm:$0x80]
        %v489 = vld [vmem:[#allocation2 + $0x10] sm:$0x7f]
        %v490 = vld [vmem:[#allocation2 + $0x18] sm:$0x7f]
        %s491 = sld [smem:[#allocation3]]
        %v492 = vstv %s491
        %v493 = vmul.f32 %v492, %v487
        %v494 = vmul.f32 %v492, %v488
        %v495 = vmul.f32 %v492, %v489
        %v496 = vmul.f32 %v492, %v490
        %v497 = vadd.f32 %v493, 0.0
        %v498 = vadd.f32 %v494, 0.0
        %v499 = vadd.f32 %v495, 0.0
        %v500 = vadd.f32 %v496, 0.0
        %s501 = sld [smem:[#allocation3 + $0x1]]
        %v502 = vstv %s501
        %v503 = vmul.f32 %v502, %v487
        %v504 = vmul.f32 %v502, %v488
        %v505 = vmul.f32 %v502, %v489
        %v506 = vmul.f32 %v502, %v490
        %v507 = vadd.f32 %v503, 0.0
        %v508 = vadd.f32 %v504, 0.0
        %v509 = vadd.f32 %v505, 0.0
        %v510 = vadd.f32 %v506, 0.0
        %s511 = sld [smem:[#allocation3 + $0x2]]
        %v512 = vstv %s511
        %v513 = vmul.f32 %v512, %v487
        %v514 = vmul.f32 %v512, %v488
        %v515 = vmul.f32 %v512, %v489
        %v516 = vmul.f32 %v512, %v490
        %v517 = vadd.f32 %v513, 0.0
        %v518 = vadd.f32 %v514, 0.0
        %v519 = vadd.f32 %v515, 0.0
        %v520 = vadd.f32 %v516, 0.0
        %s521 = sld [smem:[#allocation3 + $0x3]]
        %v522 = vstv %s521
        %v523 = vmul.f32 %v522, %v487
        %v524 = vmul.f32 %v522, %v488
        %v525 = vmul.f32 %v522, %v489
        %v526 = vmul.f32 %v522, %v490
        %v527 = vadd.f32 %v523, 0.0
        %v528 = vadd.f32 %v524, 0.0
        %v529 = vadd.f32 %v525, 0.0
        %v530 = vadd.f32 %v526, 0.0
        %s531 = sld [smem:[#allocation3 + $0x4]]
        %v532 = vstv %s531
        %v533 = vmul.f32 %v532, %v488
        %v534 = vmul.f32 %v532, %v490
        %537 = vrot.lane.b32.xlu0 %v533, 127
        %v538 = vpop.permute.xlu0 %537
        %539 = vrot.lane.b32.xlu0 %v534, 127
        %v540 = vpop.permute.xlu0 %539
        %v543 = vadd.f32 %v497, %v538
        %v544 = vadd.f32 %v498, %v538
        %v545 = vadd.f32 %v499, %v540
        %v546 = vadd.f32 %v500, %v540
        %s547 = sld [smem:[#allocation3 + $0x5]]
        %v548 = vstv %s547
        %v549 = vmul.f32 %v548, %v488
        %v550 = vmul.f32 %v548, %v490
        %553 = vrot.lane.b32.xlu0 %v549, 127
        %v554 = vpop.permute.xlu0 %553
        %555 = vrot.lane.b32.xlu0 %v550, 127
        %v556 = vpop.permute.xlu0 %555
        %v559 = vadd.f32 %v507, %v554
        %v560 = vadd.f32 %v508, %v554
        %v561 = vadd.f32 %v509, %v556
        %v562 = vadd.f32 %v510, %v556
        %s563 = sld [smem:[#allocation3 + $0x6]]
        %v564 = vstv %s563
        %v565 = vmul.f32 %v564, %v488
        %v566 = vmul.f32 %v564, %v490
        %569 = vrot.lane.b32.xlu0 %v565, 127
        %v570 = vpop.permute.xlu0 %569
        %571 = vrot.lane.b32.xlu0 %v566, 127
        %v572 = vpop.permute.xlu0 %571
        %v575 = vadd.f32 %v517, %v570
        %v576 = vadd.f32 %v518, %v570
        %v577 = vadd.f32 %v519, %v572
        %v578 = vadd.f32 %v520, %v572
        %s579 = sld [smem:[#allocation3 + $0x7]]
        %v580 = vstv %s579
        %v581 = vmul.f32 %v580, %v488
        %v582 = vmul.f32 %v580, %v490
        %585 = vrot.lane.b32.xlu0 %v581, 127
        %v586 = vpop.permute.xlu0 %585
        %587 = vrot.lane.b32.xlu0 %v582, 127
        %v588 = vpop.permute.xlu0 %587
        %v591 = vadd.f32 %v527, %v586
        %v592 = vadd.f32 %v528, %v586
        %v593 = vadd.f32 %v529, %v588
        %v594 = vadd.f32 %v530, %v588
        %s595 = sld [smem:[#allocation3 + $0x8]]
        %v596 = vstv %s595
        %v597 = vmul.f32 %v596, %v488
        %v598 = vmul.f32 %v596, %v490
        %601 = vrot.lane.b32.xlu0 %v597, 126
        %v602 = vpop.permute.xlu0 %601
        %603 = vrot.lane.b32.xlu0 %v598, 126
        %v604 = vpop.permute.xlu0 %603
        %v607 = vadd.f32 %v543, %v602
        %v608 = vadd.f32 %v544, %v602
        %v609 = vadd.f32 %v545, %v604
        %v610 = vadd.f32 %v546, %v604
        %s611 = sld [smem:[#allocation3 + $0x9]]
        %v612 = vstv %s611
        %v613 = vmul.f32 %v612, %v488
        %v614 = vmul.f32 %v612, %v490
        %617 = vrot.lane.b32.xlu0 %v613, 126
        %v618 = vpop.permute.xlu0 %617
        %619 = vrot.lane.b32.xlu0 %v614, 126
        %v620 = vpop.permute.xlu0 %619
        %v623 = vadd.f32 %v559, %v618
        %v624 = vadd.f32 %v560, %v618
        %v625 = vadd.f32 %v561, %v620
        %v626 = vadd.f32 %v562, %v620
        %s627 = sld [smem:[#allocation3 + $0xa]]
        %v628 = vstv %s627
        %v629 = vmul.f32 %v628, %v488
        %v630 = vmul.f32 %v628, %v490
        %633 = vrot.lane.b32.xlu0 %v629, 126
        %v634 = vpop.permute.xlu0 %633
        %635 = vrot.lane.b32.xlu0 %v630, 126
        %v636 = vpop.permute.xlu0 %635
        %v639 = vadd.f32 %v575, %v634
        %v640 = vadd.f32 %v576, %v634
        %v641 = vadd.f32 %v577, %v636
        %v642 = vadd.f32 %v578, %v636
        %s643 = sld [smem:[#allocation3 + $0xb]]
        %v644 = vstv %s643
        %v645 = vmul.f32 %v644, %v488
        %v646 = vmul.f32 %v644, %v490
        %649 = vrot.lane.b32.xlu0 %v645, 126
        %v650 = vpop.permute.xlu0 %649
        %651 = vrot.lane.b32.xlu0 %v646, 126
        %v652 = vpop.permute.xlu0 %651
        %v655 = vadd.f32 %v591, %v650
        %v656 = vadd.f32 %v592, %v650
        %v657 = vadd.f32 %v593, %v652
        %v658 = vadd.f32 %v594, %v652
        %v659 = vld [vmem:[#allocation2 + $0x10] sm:$0xff]
        %v660 = vld [vmem:[#allocation2 + $0x18] sm:$0xff]
        %s661 = sld [smem:[#allocation3 + $0xc]]
        %v662 = vstv %s661
        %v663 = vmul.f32 %v662, %v659
        %v664 = vmul.f32 %v662, %v660
        %v667 = vrot.slane %v663, 1
        %v668 = vrot.slane %v664, 1
        %v671 = vadd.f32 %v607, %v667
        %v672 = vadd.f32 %v608, %v668
        %v673 = vadd.f32 %v609, %v667
        %v674 = vadd.f32 %v610, %v668
        %s675 = sld [smem:[#allocation3 + $0xd]]
        %v676 = vstv %s675
        %v677 = vmul.f32 %v676, %v659
        %v678 = vmul.f32 %v676, %v660
        %v681 = vrot.slane %v677, 1
        %v682 = vrot.slane %v678, 1
        %v685 = vadd.f32 %v623, %v681
        %v686 = vadd.f32 %v624, %v682
        %v687 = vadd.f32 %v625, %v681
        %v688 = vadd.f32 %v626, %v682
        %s689 = sld [smem:[#allocation3 + $0xe]]
        %v690 = vstv %s689
        %v691 = vmul.f32 %v690, %v659
        %v692 = vmul.f32 %v690, %v660
        %v695 = vrot.slane %v691, 1
        %v696 = vrot.slane %v692, 1
        %v699 = vadd.f32 %v639, %v695
        %v700 = vadd.f32 %v640, %v696
        %v701 = vadd.f32 %v641, %v695
        %v702 = vadd.f32 %v642, %v696
        %s703 = sld [smem:[#allocation3 + $0xf]]
        %v704 = vstv %s703
        %v705 = vmul.f32 %v704, %v659
        %v706 = vmul.f32 %v704, %v660
        %v709 = vrot.slane %v705, 1
        %v710 = vrot.slane %v706, 1
        %v713 = vadd.f32 %v655, %v709
        %v714 = vadd.f32 %v656, %v710
        %v715 = vadd.f32 %v657, %v709
        %v716 = vadd.f32 %v658, %v710
        %s717 = sld [smem:[#allocation3 + $0x10]]
        %v718 = vstv %s717
        %v719 = vmul.f32 %v718, %v660
        %v721 = vrot.slane %v719, 1
        %722 = vrot.lane.b32.xlu0 %v721, 127
        %v723 = vpop.permute.xlu0 %722
        %v725 = vadd.f32 %v671, %v723
        %v726 = vadd.f32 %v672, %v723
        %v727 = vadd.f32 %v673, %v723
        %v728 = vadd.f32 %v674, %v723
        %s729 = sld [smem:[#allocation3 + $0x11]]
        %v730 = vstv %s729
        %v731 = vmul.f32 %v730, %v660
        %v733 = vrot.slane %v731, 1
        %734 = vrot.lane.b32.xlu0 %v733, 127
        %v735 = vpop.permute.xlu0 %734
        %v737 = vadd.f32 %v685, %v735
        %v738 = vadd.f32 %v686, %v735
        %v739 = vadd.f32 %v687, %v735
        %v740 = vadd.f32 %v688, %v735
        %s741 = sld [smem:[#allocation3 + $0x12]]
        %v742 = vstv %s741
        %v743 = vmul.f32 %v742, %v660
        %v745 = vrot.slane %v743, 1
        %746 = vrot.lane.b32.xlu0 %v745, 127
        %v747 = vpop.permute.xlu0 %746
        %v749 = vadd.f32 %v699, %v747
        %v750 = vadd.f32 %v700, %v747
        %v751 = vadd.f32 %v701, %v747
        %v752 = vadd.f32 %v702, %v747
        %s753 = sld [smem:[#allocation3 + $0x13]]
        %v754 = vstv %s753
        %v755 = vmul.f32 %v754, %v660
        %v757 = vrot.slane %v755, 1
        %758 = vrot.lane.b32.xlu0 %v757, 127
        %v759 = vpop.permute.xlu0 %758
        %v761 = vadd.f32 %v713, %v759
        %v762 = vadd.f32 %v714, %v759
        %v763 = vadd.f32 %v715, %v759
        %v764 = vadd.f32 %v716, %v759
        %s765 = sld [smem:[#allocation3 + $0x14]]
        %v766 = vstv %s765
        %v767 = vmul.f32 %v766, %v660
        %v769 = vrot.slane %v767, 1
        %770 = vrot.lane.b32.xlu0 %v769, 126
        %v771 = vpop.permute.xlu0 %770
        %v773 = vadd.f32 %v725, %v771
        %v774 = vadd.f32 %v726, %v771
        %v775 = vadd.f32 %v727, %v771
        %v776 = vadd.f32 %v728, %v771
        %s777 = sld [smem:[#allocation3 + $0x15]]
        %v778 = vstv %s777
        %v779 = vmul.f32 %v778, %v660
        %v781 = vrot.slane %v779, 1
        %782 = vrot.lane.b32.xlu0 %v781, 126
        %v783 = vpop.permute.xlu0 %782
        %v785 = vadd.f32 %v737, %v783
        %v786 = vadd.f32 %v738, %v783
        %v787 = vadd.f32 %v739, %v783
        %v788 = vadd.f32 %v740, %v783
        %s789 = sld [smem:[#allocation3 + $0x16]]
        %v790 = vstv %s789
        %v791 = vmul.f32 %v790, %v660
        %v793 = vrot.slane %v791, 1
        %794 = vrot.lane.b32.xlu0 %v793, 126
        %v795 = vpop.permute.xlu0 %794
        %v797 = vadd.f32 %v749, %v795
        %v798 = vadd.f32 %v750, %v795
        %v799 = vadd.f32 %v751, %v795
        %v800 = vadd.f32 %v752, %v795
        %s801 = sld [smem:[#allocation3 + $0x17]]
        %v802 = vstv %s801
        %v803 = vmul.f32 %v802, %v660
        %v805 = vrot.slane %v803, 1
        %806 = vrot.lane.b32.xlu0 %v805, 126
        %v807 = vpop.permute.xlu0 %806
        %v809 = vadd.f32 %v761, %v807
        %v810 = vadd.f32 %v762, %v807
        %v811 = vadd.f32 %v763, %v807
        %v812 = vadd.f32 %v764, %v807
        %v813 = vld [vmem:[#allocation2 + $0x10] sm:$0xfe]
        %v814 = vld [vmem:[#allocation2 + $0x18] sm:$0xfe]
        %v815 = vld [vmem:[#allocation2 + $0x20] sm:$0x1]
        %v816 = vld [vmem:[#allocation2 + $0x28] sm:$0x1]
        %s817 = sld [smem:[#allocation3 + $0x18]]
        %v818 = vstv %s817
        %v819 = vmul.f32 %v818, %v813
        %v820 = vmul.f32 %v818, %v814
        %v821 = vmul.f32 %v818, %v815
        %v822 = vmul.f32 %v818, %v816
        %vm827 = vcmask 1045504
        %v828 = vrot.slane %v819, 2
        %v829 = vrot.slane %v820, 2
        %v830 = vrot.slane %v821, 2
        %v831 = vsel %vm827, %v828, %v830
        %v832 = vrot.slane %v822, 2
        %v833 = vsel %vm827, %v829, %v832
        %v838 = vadd.f32 %v773, %v828
        %v839 = vadd.f32 %v774, %v829
        %v840 = vadd.f32 %v775, %v831
        %v841 = vadd.f32 %v776, %v833
        %s842 = sld [smem:[#allocation3 + $0x19]]
        %v843 = vstv %s842
        %v844 = vmul.f32 %v843, %v813
        %v845 = vmul.f32 %v843, %v814
        %v846 = vmul.f32 %v843, %v815
        %v847 = vmul.f32 %v843, %v816
        %v852 = vrot.slane %v844, 2
        %v853 = vrot.slane %v845, 2
        %v854 = vrot.slane %v846, 2
        %v855 = vsel %vm827, %v852, %v854
        %v856 = vrot.slane %v847, 2
        %v857 = vsel %vm827, %v853, %v856
        %v862 = vadd.f32 %v785, %v852
        %v863 = vadd.f32 %v786, %v853
        %v864 = vadd.f32 %v787, %v855
        %v865 = vadd.f32 %v788, %v857
        %s866 = sld [smem:[#allocation3 + $0x1a]]
        %v867 = vstv %s866
        %v868 = vmul.f32 %v867, %v813
        %v869 = vmul.f32 %v867, %v814
        %v870 = vmul.f32 %v867, %v815
        %v871 = vmul.f32 %v867, %v816
        %v876 = vrot.slane %v868, 2
        %v877 = vrot.slane %v869, 2
        %v878 = vrot.slane %v870, 2
        %v879 = vsel %vm827, %v876, %v878
        %v880 = vrot.slane %v871, 2
        %v881 = vsel %vm827, %v877, %v880
        %v886 = vadd.f32 %v797, %v876
        %v887 = vadd.f32 %v798, %v877
        %v888 = vadd.f32 %v799, %v879
        %v889 = vadd.f32 %v800, %v881
        %s890 = sld [smem:[#allocation3 + $0x1b]]
        %v891 = vstv %s890
        %v892 = vmul.f32 %v891, %v813
        %v893 = vmul.f32 %v891, %v814
        %v894 = vmul.f32 %v891, %v815
        %v895 = vmul.f32 %v891, %v816
        %v900 = vrot.slane %v892, 2
        %v901 = vrot.slane %v893, 2
        %v902 = vrot.slane %v894, 2
        %v903 = vsel %vm827, %v900, %v902
        %v904 = vrot.slane %v895, 2
        %v905 = vsel %vm827, %v901, %v904
        %v910 = vadd.f32 %v809, %v900
        %v911 = vadd.f32 %v810, %v901
        %v912 = vadd.f32 %v811, %v903
        %v913 = vadd.f32 %v812, %v905
        %s914 = sld [smem:[#allocation3 + $0x1c]]
        %v915 = vstv %s914
        %v916 = vmul.f32 %v915, %v814
        %v917 = vmul.f32 %v915, %v816
        %v920 = vrot.slane %v916, 2
        %v921 = vrot.slane %v917, 2
        %v922 = vsel %vm827, %v920, %v921
        %923 = vrot.lane.b32.xlu0 %v920, 127
        %v924 = vpop.permute.xlu0 %923
        %925 = vrot.lane.b32.xlu0 %v922, 127
        %v926 = vpop.permute.xlu0 %925
        %v929 = vadd.f32 %v838, %v924
        %v930 = vadd.f32 %v839, %v924
        %v931 = vadd.f32 %v840, %v926
        %v932 = vadd.f32 %v841, %v926
        %s933 = sld [smem:[#allocation3 + $0x1d]]
        %v934 = vstv %s933
        %v935 = vmul.f32 %v934, %v814
        %v936 = vmul.f32 %v934, %v816
        %v939 = vrot.slane %v935, 2
        %v940 = vrot.slane %v936, 2
        %v941 = vsel %vm827, %v939, %v940
        %942 = vrot.lane.b32.xlu0 %v939, 127
        %v943 = vpop.permute.xlu0 %942
        %944 = vrot.lane.b32.xlu0 %v941, 127
        %v945 = vpop.permute.xlu0 %944
        %v948 = vadd.f32 %v862, %v943
        %v949 = vadd.f32 %v863, %v943
        %v950 = vadd.f32 %v864, %v945
        %v951 = vadd.f32 %v865, %v945
        %s952 = sld [smem:[#allocation3 + $0x1e]]
        %v953 = vstv %s952
        %v954 = vmul.f32 %v953, %v814
        %v955 = vmul.f32 %v953, %v816
        %v958 = vrot.slane %v954, 2
        %v959 = vrot.slane %v955, 2
        %v960 = vsel %vm827, %v958, %v959
        %961 = vrot.lane.b32.xlu0 %v958, 127
        %v962 = vpop.permute.xlu0 %961
        %963 = vrot.lane.b32.xlu0 %v960, 127
        %v964 = vpop.permute.xlu0 %963
        %v967 = vadd.f32 %v886, %v962
        %v968 = vadd.f32 %v887, %v962
        %v969 = vadd.f32 %v888, %v964
        %v970 = vadd.f32 %v889, %v964
        %s971 = sld [smem:[#allocation3 + $0x1f]]
        %v972 = vstv %s971
        %v973 = vmul.f32 %v972, %v814
        %v974 = vmul.f32 %v972, %v816
        %v977 = vrot.slane %v973, 2
        %v978 = vrot.slane %v974, 2
        %v979 = vsel %vm827, %v977, %v978
        %980 = vrot.lane.b32.xlu0 %v977, 127
        %v981 = vpop.permute.xlu0 %980
        %982 = vrot.lane.b32.xlu0 %v979, 127
        %v983 = vpop.permute.xlu0 %982
        %v986 = vadd.f32 %v910, %v981
        %v987 = vadd.f32 %v911, %v981
        %v988 = vadd.f32 %v912, %v983
        %v989 = vadd.f32 %v913, %v983
        %s990 = sld [smem:[#allocation3 + $0x20]]
        %v991 = vstv %s990
        %v992 = vmul.f32 %v991, %v814
        %v993 = vmul.f32 %v991, %v816
        %v996 = vrot.slane %v992, 2
        %v997 = vrot.slane %v993, 2
        %v998 = vsel %vm827, %v996, %v997
        %999 = vrot.lane.b32.xlu0 %v996, 126
        %v1000 = vpop.permute.xlu0 %999
        %1001 = vrot.lane.b32.xlu0 %v998, 126
        %v1002 = vpop.permute.xlu0 %1001
        %v1005 = vadd.f32 %v929, %v1000
        %v1006 = vadd.f32 %v930, %v1000
        %v1007 = vadd.f32 %v931, %v1002
        %v1008 = vadd.f32 %v932, %v1002
        %s1009 = sld [smem:[#allocation3 + $0x21]]
        %v1010 = vstv %s1009
        %v1011 = vmul.f32 %v1010, %v814
        %v1012 = vmul.f32 %v1010, %v816
        %v1015 = vrot.slane %v1011, 2
        %v1016 = vrot.slane %v1012, 2
        %v1017 = vsel %vm827, %v1015, %v1016
        %1018 = vrot.lane.b32.xlu0 %v1015, 126
        %v1019 = vpop.permute.xlu0 %1018
        %1020 = vrot.lane.b32.xlu0 %v1017, 126
        %v1021 = vpop.permute.xlu0 %1020
        %v1024 = vadd.f32 %v948, %v1019
        %v1025 = vadd.f32 %v949, %v1019
        %v1026 = vadd.f32 %v950, %v1021
        %v1027 = vadd.f32 %v951, %v1021
        %s1028 = sld [smem:[#allocation3 + $0x22]]
        %v1029 = vstv %s1028
        %v1030 = vmul.f32 %v1029, %v814
        %v1031 = vmul.f32 %v1029, %v816
        %v1034 = vrot.slane %v1030, 2
        %v1035 = vrot.slane %v1031, 2
        %v1036 = vsel %vm827, %v1034, %v1035
        %1037 = vrot.lane.b32.xlu0 %v1034, 126
        %v1038 = vpop.permute.xlu0 %1037
        %1039 = vrot.lane.b32.xlu0 %v1036, 126
        %v1040 = vpop.permute.xlu0 %1039
        %v1043 = vadd.f32 %v967, %v1038
        %v1044 = vadd.f32 %v968, %v1038
        %v1045 = vadd.f32 %v969, %v1040
        %v1046 = vadd.f32 %v970, %v1040
        %s1047 = sld [smem:[#allocation3 + $0x23]]
        %v1048 = vstv %s1047
        %v1049 = vmul.f32 %v1048, %v814
        %v1050 = vmul.f32 %v1048, %v816
        %v1053 = vrot.slane %v1049, 2
        %v1054 = vrot.slane %v1050, 2
        %v1055 = vsel %vm827, %v1053, %v1054
        %1056 = vrot.lane.b32.xlu0 %v1053, 126
        %v1057 = vpop.permute.xlu0 %1056
        %1058 = vrot.lane.b32.xlu0 %v1055, 126
        %v1059 = vpop.permute.xlu0 %1058
        %v1062 = vadd.f32 %v986, %v1057
        %v1063 = vadd.f32 %v987, %v1057
        %v1064 = vadd.f32 %v988, %v1059
        %v1065 = vadd.f32 %v989, %v1059
        %v1066 = vld [vmem:[%s404] sm:$0x80]
        %v1067 = vld [vmem:[%s404 + $0x8] sm:$0x80]
        %v1068 = vld [vmem:[%s404 + $0x10] sm:$0x7f]
        %v1069 = vld [vmem:[%s404 + $0x18] sm:$0x7f]
        %s1070 = sld [smem:[#allocation3 + $0x24]]
        %v1071 = vstv %s1070
        %v1072 = vmul.f32 %v1071, %v1066
        %v1073 = vmul.f32 %v1071, %v1067
        %v1074 = vmul.f32 %v1071, %v1068
        %v1075 = vmul.f32 %v1071, %v1069
        %v1076 = vadd.f32 %v1005, %v1072
        %v1077 = vadd.f32 %v1006, %v1073
        %v1078 = vadd.f32 %v1007, %v1074
        %v1079 = vadd.f32 %v1008, %v1075
        %s1080 = sld [smem:[#allocation3 + $0x25]]
        %v1081 = vstv %s1080
        %v1082 = vmul.f32 %v1081, %v1066
        %v1083 = vmul.f32 %v1081, %v1067
        %v1084 = vmul.f32 %v1081, %v1068
        %v1085 = vmul.f32 %v1081, %v1069
        %v1086 = vadd.f32 %v1024, %v1082
        %v1087 = vadd.f32 %v1025, %v1083
        %v1088 = vadd.f32 %v1026, %v1084
        %v1089 = vadd.f32 %v1027, %v1085
        %s1090 = sld [smem:[#allocation3 + $0x26]]
        %v1091 = vstv %s1090
        %v1092 = vmul.f32 %v1091, %v1066
        %v1093 = vmul.f32 %v1091, %v1067
        %v1094 = vmul.f32 %v1091, %v1068
        %v1095 = vmul.f32 %v1091, %v1069
        %v1096 = vadd.f32 %v1043, %v1092
        %v1097 = vadd.f32 %v1044, %v1093
        %v1098 = vadd.f32 %v1045, %v1094
        %v1099 = vadd.f32 %v1046, %v1095
        %s1100 = sld [smem:[#allocation3 + $0x27]]
        %v1101 = vstv %s1100
        %v1102 = vmul.f32 %v1101, %v1066
        %v1103 = vmul.f32 %v1101, %v1067
        %v1104 = vmul.f32 %v1101, %v1068
        %v1105 = vmul.f32 %v1101, %v1069
        %v1106 = vadd.f32 %v1062, %v1102
        %v1107 = vadd.f32 %v1063, %v1103
        %v1108 = vadd.f32 %v1064, %v1104
        %v1109 = vadd.f32 %v1065, %v1105
        %s1110 = sld [smem:[#allocation3 + $0x28]]
        %v1111 = vstv %s1110
        %v1112 = vmul.f32 %v1111, %v1067
        %v1113 = vmul.f32 %v1111, %v1069
        %1116 = vrot.lane.b32.xlu0 %v1112, 127
        %v1117 = vpop.permute.xlu0 %1116
        %1118 = vrot.lane.b32.xlu0 %v1113, 127
        %v1119 = vpop.permute.xlu0 %1118
        %v1122 = vadd.f32 %v1076, %v1117
        %v1123 = vadd.f32 %v1077, %v1117
        %v1124 = vadd.f32 %v1078, %v1119
        %v1125 = vadd.f32 %v1079, %v1119
        %s1126 = sld [smem:[#allocation3 + $0x29]]
        %v1127 = vstv %s1126
        %v1128 = vmul.f32 %v1127, %v1067
        %v1129 = vmul.f32 %v1127, %v1069
        %1132 = vrot.lane.b32.xlu0 %v1128, 127
        %v1133 = vpop.permute.xlu0 %1132
        %1134 = vrot.lane.b32.xlu0 %v1129, 127
        %v1135 = vpop.permute.xlu0 %1134
        %v1138 = vadd.f32 %v1086, %v1133
        %v1139 = vadd.f32 %v1087, %v1133
        %v1140 = vadd.f32 %v1088, %v1135
        %v1141 = vadd.f32 %v1089, %v1135
        %s1142 = sld [smem:[#allocation3 + $0x2a]]
        %v1143 = vstv %s1142
        %v1144 = vmul.f32 %v1143, %v1067
        %v1145 = vmul.f32 %v1143, %v1069
        %1148 = vrot.lane.b32.xlu0 %v1144, 127
        %v1149 = vpop.permute.xlu0 %1148
        %1150 = vrot.lane.b32.xlu0 %v1145, 127
        %v1151 = vpop.permute.xlu0 %1150
        %v1154 = vadd.f32 %v1096, %v1149
        %v1155 = vadd.f32 %v1097, %v1149
        %v1156 = vadd.f32 %v1098, %v1151
        %v1157 = vadd.f32 %v1099, %v1151
        %s1158 = sld [smem:[#allocation3 + $0x2b]]
        %v1159 = vstv %s1158
        %v1160 = vmul.f32 %v1159, %v1067
        %v1161 = vmul.f32 %v1159, %v1069
        %1164 = vrot.lane.b32.xlu0 %v1160, 127
        %v1165 = vpop.permute.xlu0 %1164
        %1166 = vrot.lane.b32.xlu0 %v1161, 127
        %v1167 = vpop.permute.xlu0 %1166
        %v1170 = vadd.f32 %v1106, %v1165
        %v1171 = vadd.f32 %v1107, %v1165
        %v1172 = vadd.f32 %v1108, %v1167
        %v1173 = vadd.f32 %v1109, %v1167
        %s1174 = sld [smem:[#allocation3 + $0x2c]]
        %v1175 = vstv %s1174
        %v1176 = vmul.f32 %v1175, %v1067
        %v1177 = vmul.f32 %v1175, %v1069
        %1180 = vrot.lane.b32.xlu0 %v1176, 126
        %v1181 = vpop.permute.xlu0 %1180
        %1182 = vrot.lane.b32.xlu0 %v1177, 126
        %v1183 = vpop.permute.xlu0 %1182
        %v1186 = vadd.f32 %v1122, %v1181
        %v1187 = vadd.f32 %v1123, %v1181
        %v1188 = vadd.f32 %v1124, %v1183
        %v1189 = vadd.f32 %v1125, %v1183
        %s1190 = sld [smem:[#allocation3 + $0x2d]]
        %v1191 = vstv %s1190
        %v1192 = vmul.f32 %v1191, %v1067
        %v1193 = vmul.f32 %v1191, %v1069
        %1196 = vrot.lane.b32.xlu0 %v1192, 126
        %v1197 = vpop.permute.xlu0 %1196
        %1198 = vrot.lane.b32.xlu0 %v1193, 126
        %v1199 = vpop.permute.xlu0 %1198
        %v1202 = vadd.f32 %v1138, %v1197
        %v1203 = vadd.f32 %v1139, %v1197
        %v1204 = vadd.f32 %v1140, %v1199
        %v1205 = vadd.f32 %v1141, %v1199
        %s1206 = sld [smem:[#allocation3 + $0x2e]]
        %v1207 = vstv %s1206
        %v1208 = vmul.f32 %v1207, %v1067
        %v1209 = vmul.f32 %v1207, %v1069
        %1212 = vrot.lane.b32.xlu0 %v1208, 126
        %v1213 = vpop.permute.xlu0 %1212
        %1214 = vrot.lane.b32.xlu0 %v1209, 126
        %v1215 = vpop.permute.xlu0 %1214
        %v1218 = vadd.f32 %v1154, %v1213
        %v1219 = vadd.f32 %v1155, %v1213
        %v1220 = vadd.f32 %v1156, %v1215
        %v1221 = vadd.f32 %v1157, %v1215
        %s1222 = sld [smem:[#allocation3 + $0x2f]]
        %v1223 = vstv %s1222
        %v1224 = vmul.f32 %v1223, %v1067
        %v1225 = vmul.f32 %v1223, %v1069
        %1228 = vrot.lane.b32.xlu0 %v1224, 126
        %v1229 = vpop.permute.xlu0 %1228
        %1230 = vrot.lane.b32.xlu0 %v1225, 126
        %v1231 = vpop.permute.xlu0 %1230
        %v1234 = vadd.f32 %v1170, %v1229
        %v1235 = vadd.f32 %v1171, %v1229
        %v1236 = vadd.f32 %v1172, %v1231
        %v1237 = vadd.f32 %v1173, %v1231
        %v1238 = vld [vmem:[%s404 + $0x10] sm:$0xff]
        %v1239 = vld [vmem:[%s404 + $0x18] sm:$0xff]
        %s1240 = sld [smem:[#allocation3 + $0x30]]
        %v1241 = vstv %s1240
        %v1242 = vmul.f32 %v1241, %v1238
        %v1243 = vmul.f32 %v1241, %v1239
        %v1246 = vrot.slane %v1242, 1
        %v1247 = vrot.slane %v1243, 1
        %v1250 = vadd.f32 %v1186, %v1246
        %v1251 = vadd.f32 %v1187, %v1247
        %v1252 = vadd.f32 %v1188, %v1246
        %v1253 = vadd.f32 %v1189, %v1247
        %s1254 = sld [smem:[#allocation3 + $0x31]]
        %v1255 = vstv %s1254
        %v1256 = vmul.f32 %v1255, %v1238
        %v1257 = vmul.f32 %v1255, %v1239
        %v1260 = vrot.slane %v1256, 1
        %v1261 = vrot.slane %v1257, 1
        %v1264 = vadd.f32 %v1202, %v1260
        %v1265 = vadd.f32 %v1203, %v1261
        %v1266 = vadd.f32 %v1204, %v1260
        %v1267 = vadd.f32 %v1205, %v1261
        %s1268 = sld [smem:[#allocation3 + $0x32]]
        %v1269 = vstv %s1268
        %v1270 = vmul.f32 %v1269, %v1238
        %v1271 = vmul.f32 %v1269, %v1239
        %v1274 = vrot.slane %v1270, 1
        %v1275 = vrot.slane %v1271, 1
        %v1278 = vadd.f32 %v1218, %v1274
        %v1279 = vadd.f32 %v1219, %v1275
        %v1280 = vadd.f32 %v1220, %v1274
        %v1281 = vadd.f32 %v1221, %v1275
        %s1282 = sld [smem:[#allocation3 + $0x33]]
        %v1283 = vstv %s1282
        %v1284 = vmul.f32 %v1283, %v1238
        %v1285 = vmul.f32 %v1283, %v1239
        %v1288 = vrot.slane %v1284, 1
        %v1289 = vrot.slane %v1285, 1
        %v1292 = vadd.f32 %v1234, %v1288
        %v1293 = vadd.f32 %v1235, %v1289
        %v1294 = vadd.f32 %v1236, %v1288
        %v1295 = vadd.f32 %v1237, %v1289
        %s1296 = sld [smem:[#allocation3 + $0x34]]
        %v1297 = vstv %s1296
        %v1298 = vmul.f32 %v1297, %v1239
        %v1300 = vrot.slane %v1298, 1
        %1301 = vrot.lane.b32.xlu0 %v1300, 127
        %v1302 = vpop.permute.xlu0 %1301
        %v1304 = vadd.f32 %v1250, %v1302
        %v1305 = vadd.f32 %v1251, %v1302
        %v1306 = vadd.f32 %v1252, %v1302
        %v1307 = vadd.f32 %v1253, %v1302
        %s1308 = sld [smem:[#allocation3 + $0x35]]
        %v1309 = vstv %s1308
        %v1310 = vmul.f32 %v1309, %v1239
        %v1312 = vrot.slane %v1310, 1
        %1313 = vrot.lane.b32.xlu0 %v1312, 127
        %v1314 = vpop.permute.xlu0 %1313
        %v1316 = vadd.f32 %v1264, %v1314
        %v1317 = vadd.f32 %v1265, %v1314
        %v1318 = vadd.f32 %v1266, %v1314
        %v1319 = vadd.f32 %v1267, %v1314
        %s1320 = sld [smem:[#allocation3 + $0x36]]
        %v1321 = vstv %s1320
        %v1322 = vmul.f32 %v1321, %v1239
        %v1324 = vrot.slane %v1322, 1
        %1325 = vrot.lane.b32.xlu0 %v1324, 127
        %v1326 = vpop.permute.xlu0 %1325
        %v1328 = vadd.f32 %v1278, %v1326
        %v1329 = vadd.f32 %v1279, %v1326
        %v1330 = vadd.f32 %v1280, %v1326
        %v1331 = vadd.f32 %v1281, %v1326
        %s1332 = sld [smem:[#allocation3 + $0x37]]
        %v1333 = vstv %s1332
        %v1334 = vmul.f32 %v1333, %v1239
        %v1336 = vrot.slane %v1334, 1
        %1337 = vrot.lane.b32.xlu0 %v1336, 127
        %v1338 = vpop.permute.xlu0 %1337
        %v1340 = vadd.f32 %v1292, %v1338
        %v1341 = vadd.f32 %v1293, %v1338
        %v1342 = vadd.f32 %v1294, %v1338
        %v1343 = vadd.f32 %v1295, %v1338
        %s1344 = sld [smem:[#allocation3 + $0x38]]
        %v1345 = vstv %s1344
        %v1346 = vmul.f32 %v1345, %v1239
        %v1348 = vrot.slane %v1346, 1
        %1349 = vrot.lane.b32.xlu0 %v1348, 126
        %v1350 = vpop.permute.xlu0 %1349
        %v1352 = vadd.f32 %v1304, %v1350
        %v1353 = vadd.f32 %v1305, %v1350
        %v1354 = vadd.f32 %v1306, %v1350
        %v1355 = vadd.f32 %v1307, %v1350
        %s1356 = sld [smem:[#allocation3 + $0x39]]
        %v1357 = vstv %s1356
        %v1358 = vmul.f32 %v1357, %v1239
        %v1360 = vrot.slane %v1358, 1
        %1361 = vrot.lane.b32.xlu0 %v1360, 126
        %v1362 = vpop.permute.xlu0 %1361
        %v1364 = vadd.f32 %v1316, %v1362
        %v1365 = vadd.f32 %v1317, %v1362
        %v1366 = vadd.f32 %v1318, %v1362
        %v1367 = vadd.f32 %v1319, %v1362
        %s1368 = sld [smem:[#allocation3 + $0x3a]]
        %v1369 = vstv %s1368
        %v1370 = vmul.f32 %v1369, %v1239
        %v1372 = vrot.slane %v1370, 1
        %1373 = vrot.lane.b32.xlu0 %v1372, 126
        %v1374 = vpop.permute.xlu0 %1373
        %v1376 = vadd.f32 %v1328, %v1374
        %v1377 = vadd.f32 %v1329, %v1374
        %v1378 = vadd.f32 %v1330, %v1374
        %v1379 = vadd.f32 %v1331, %v1374
        %s1380 = sld [smem:[#allocation3 + $0x3b]]
        %v1381 = vstv %s1380
        %v1382 = vmul.f32 %v1381, %v1239
        %v1384 = vrot.slane %v1382, 1
        %1385 = vrot.lane.b32.xlu0 %v1384, 126
        %v1386 = vpop.permute.xlu0 %1385
        %v1388 = vadd.f32 %v1340, %v1386
        %v1389 = vadd.f32 %v1341, %v1386
        %v1390 = vadd.f32 %v1342, %v1386
        %v1391 = vadd.f32 %v1343, %v1386
        %v1392 = vld [vmem:[%s404 + $0x10] sm:$0xfe]
        %v1393 = vld [vmem:[%s404 + $0x18] sm:$0xfe]
        %v1394 = vld [vmem:[%s404 + $0x20] sm:$0x1]
        %v1395 = vld [vmem:[%s404 + $0x28] sm:$0x1]
        %s1396 = sld [smem:[#allocation3 + $0x3c]]
        %v1397 = vstv %s1396
        %v1398 = vmul.f32 %v1397, %v1392
        %v1399 = vmul.f32 %v1397, %v1393
        %v1400 = vmul.f32 %v1397, %v1394
        %v1401 = vmul.f32 %v1397, %v1395
        %v1406 = vrot.slane %v1398, 2
        %v1407 = vrot.slane %v1399, 2
        %v1408 = vrot.slane %v1400, 2
        %v1409 = vsel %vm827, %v1406, %v1408
        %v1410 = vrot.slane %v1401, 2
        %v1411 = vsel %vm827, %v1407, %v1410
        %v1416 = vadd.f32 %v1352, %v1406
        %v1417 = vadd.f32 %v1353, %v1407
        %v1418 = vadd.f32 %v1354, %v1409
        %v1419 = vadd.f32 %v1355, %v1411
        %s1420 = sld [smem:[#allocation3 + $0x3d]]
        %v1421 = vstv %s1420
        %v1422 = vmul.f32 %v1421, %v1392
        %v1423 = vmul.f32 %v1421, %v1393
        %v1424 = vmul.f32 %v1421, %v1394
        %v1425 = vmul.f32 %v1421, %v1395
        %v1430 = vrot.slane %v1422, 2
        %v1431 = vrot.slane %v1423, 2
        %v1432 = vrot.slane %v1424, 2
        %v1433 = vsel %vm827, %v1430, %v1432
        %v1434 = vrot.slane %v1425, 2
        %v1435 = vsel %vm827, %v1431, %v1434
        %v1440 = vadd.f32 %v1364, %v1430
        %v1441 = vadd.f32 %v1365, %v1431
        %v1442 = vadd.f32 %v1366, %v1433
        %v1443 = vadd.f32 %v1367, %v1435
        %s1444 = sld [smem:[#allocation3 + $0x3e]]
        %v1445 = vstv %s1444
        %v1446 = vmul.f32 %v1445, %v1392
        %v1447 = vmul.f32 %v1445, %v1393
        %v1448 = vmul.f32 %v1445, %v1394
        %v1449 = vmul.f32 %v1445, %v1395
        %v1454 = vrot.slane %v1446, 2
        %v1455 = vrot.slane %v1447, 2
        %v1456 = vrot.slane %v1448, 2
        %v1457 = vsel %vm827, %v1454, %v1456
        %v1458 = vrot.slane %v1449, 2
        %v1459 = vsel %vm827, %v1455, %v1458
        %v1464 = vadd.f32 %v1376, %v1454
        %v1465 = vadd.f32 %v1377, %v1455
        %v1466 = vadd.f32 %v1378, %v1457
        %v1467 = vadd.f32 %v1379, %v1459
        %s1468 = sld [smem:[#allocation3 + $0x3f]]
        %v1469 = vstv %s1468
        %v1470 = vmul.f32 %v1469, %v1392
        %v1471 = vmul.f32 %v1469, %v1393
        %v1472 = vmul.f32 %v1469, %v1394
        %v1473 = vmul.f32 %v1469, %v1395
        %v1478 = vrot.slane %v1470, 2
        %v1479 = vrot.slane %v1471, 2
        %v1480 = vrot.slane %v1472, 2
        %v1481 = vsel %vm827, %v1478, %v1480
        %v1482 = vrot.slane %v1473, 2
        %v1483 = vsel %vm827, %v1479, %v1482
        %v1488 = vadd.f32 %v1388, %v1478
        %v1489 = vadd.f32 %v1389, %v1479
        %v1490 = vadd.f32 %v1390, %v1481
        %v1491 = vadd.f32 %v1391, %v1483
        %s1492 = sld [smem:[#allocation3 + $0x40]]
        %v1493 = vstv %s1492
        %v1494 = vmul.f32 %v1493, %v1393
        %v1495 = vmul.f32 %v1493, %v1395
        %v1498 = vrot.slane %v1494, 2
        %v1499 = vrot.slane %v1495, 2
        %v1500 = vsel %vm827, %v1498, %v1499
        %1501 = vrot.lane.b32.xlu0 %v1498, 127
        %v1502 = vpop.permute.xlu0 %1501
        %1503 = vrot.lane.b32.xlu0 %v1500, 127
        %v1504 = vpop.permute.xlu0 %1503
        %v1507 = vadd.f32 %v1416, %v1502
        %v1508 = vadd.f32 %v1417, %v1502
        %v1509 = vadd.f32 %v1418, %v1504
        %v1510 = vadd.f32 %v1419, %v1504
        %s1511 = sld [smem:[#allocation3 + $0x41]]
        %v1512 = vstv %s1511
        %v1513 = vmul.f32 %v1512, %v1393
        %v1514 = vmul.f32 %v1512, %v1395
        %v1517 = vrot.slane %v1513, 2
        %v1518 = vrot.slane %v1514, 2
        %v1519 = vsel %vm827, %v1517, %v1518
        %1520 = vrot.lane.b32.xlu0 %v1517, 127
        %v1521 = vpop.permute.xlu0 %1520
        %1522 = vrot.lane.b32.xlu0 %v1519, 127
        %v1523 = vpop.permute.xlu0 %1522
        %v1526 = vadd.f32 %v1440, %v1521
        %v1527 = vadd.f32 %v1441, %v1521
        %v1528 = vadd.f32 %v1442, %v1523
        %v1529 = vadd.f32 %v1443, %v1523
        %s1530 = sld [smem:[#allocation3 + $0x42]]
        %v1531 = vstv %s1530
        %v1532 = vmul.f32 %v1531, %v1393
        %v1533 = vmul.f32 %v1531, %v1395
        %v1536 = vrot.slane %v1532, 2
        %v1537 = vrot.slane %v1533, 2
        %v1538 = vsel %vm827, %v1536, %v1537
        %1539 = vrot.lane.b32.xlu0 %v1536, 127
        %v1540 = vpop.permute.xlu0 %1539
        %1541 = vrot.lane.b32.xlu0 %v1538, 127
        %v1542 = vpop.permute.xlu0 %1541
        %v1545 = vadd.f32 %v1464, %v1540
        %v1546 = vadd.f32 %v1465, %v1540
        %v1547 = vadd.f32 %v1466, %v1542
        %v1548 = vadd.f32 %v1467, %v1542
        %s1549 = sld [smem:[#allocation3 + $0x43]]
        %v1550 = vstv %s1549
        %v1551 = vmul.f32 %v1550, %v1393
        %v1552 = vmul.f32 %v1550, %v1395
        %v1555 = vrot.slane %v1551, 2
        %v1556 = vrot.slane %v1552, 2
        %v1557 = vsel %vm827, %v1555, %v1556
        %1558 = vrot.lane.b32.xlu0 %v1555, 127
        %v1559 = vpop.permute.xlu0 %1558
        %1560 = vrot.lane.b32.xlu0 %v1557, 127
        %v1561 = vpop.permute.xlu0 %1560
        %v1564 = vadd.f32 %v1488, %v1559
        %v1565 = vadd.f32 %v1489, %v1559
        %v1566 = vadd.f32 %v1490, %v1561
        %v1567 = vadd.f32 %v1491, %v1561
        %s1568 = sld [smem:[#allocation3 + $0x44]]
        %v1569 = vstv %s1568
        %v1570 = vmul.f32 %v1569, %v1393
        %v1571 = vmul.f32 %v1569, %v1395
        %v1574 = vrot.slane %v1570, 2
        %v1575 = vrot.slane %v1571, 2
        %v1576 = vsel %vm827, %v1574, %v1575
        %1577 = vrot.lane.b32.xlu0 %v1574, 126
        %v1578 = vpop.permute.xlu0 %1577
        %1579 = vrot.lane.b32.xlu0 %v1576, 126
        %v1580 = vpop.permute.xlu0 %1579
        %v1583 = vadd.f32 %v1507, %v1578
        %v1584 = vadd.f32 %v1508, %v1578
        %v1585 = vadd.f32 %v1509, %v1580
        %v1586 = vadd.f32 %v1510, %v1580
        %s1587 = sld [smem:[#allocation3 + $0x45]]
        %v1588 = vstv %s1587
        %v1589 = vmul.f32 %v1588, %v1393
        %v1590 = vmul.f32 %v1588, %v1395
        %v1593 = vrot.slane %v1589, 2
        %v1594 = vrot.slane %v1590, 2
        %v1595 = vsel %vm827, %v1593, %v1594
        %1596 = vrot.lane.b32.xlu0 %v1593, 126
        %v1597 = vpop.permute.xlu0 %1596
        %1598 = vrot.lane.b32.xlu0 %v1595, 126
        %v1599 = vpop.permute.xlu0 %1598
        %v1602 = vadd.f32 %v1526, %v1597
        %v1603 = vadd.f32 %v1527, %v1597
        %v1604 = vadd.f32 %v1528, %v1599
        %v1605 = vadd.f32 %v1529, %v1599
        %s1606 = sld [smem:[#allocation3 + $0x46]]
        %v1607 = vstv %s1606
        %v1608 = vmul.f32 %v1607, %v1393
        %v1609 = vmul.f32 %v1607, %v1395
        %v1612 = vrot.slane %v1608, 2
        %v1613 = vrot.slane %v1609, 2
        %v1614 = vsel %vm827, %v1612, %v1613
        %1615 = vrot.lane.b32.xlu0 %v1612, 126
        %v1616 = vpop.permute.xlu0 %1615
        %1617 = vrot.lane.b32.xlu0 %v1614, 126
        %v1618 = vpop.permute.xlu0 %1617
        %v1621 = vadd.f32 %v1545, %v1616
        %v1622 = vadd.f32 %v1546, %v1616
        %v1623 = vadd.f32 %v1547, %v1618
        %v1624 = vadd.f32 %v1548, %v1618
        %s1625 = sld [smem:[#allocation3 + $0x47]]
        %v1626 = vstv %s1625
        %v1627 = vmul.f32 %v1626, %v1393
        %v1628 = vmul.f32 %v1626, %v1395
        %v1631 = vrot.slane %v1627, 2
        %v1632 = vrot.slane %v1628, 2
        %v1633 = vsel %vm827, %v1631, %v1632
        %1634 = vrot.lane.b32.xlu0 %v1631, 126
        %v1635 = vpop.permute.xlu0 %1634
        %1636 = vrot.lane.b32.xlu0 %v1633, 126
        %v1637 = vpop.permute.xlu0 %1636
        %v1640 = vadd.f32 %v1564, %v1635
        %v1641 = vadd.f32 %v1565, %v1635
        %v1642 = vadd.f32 %v1566, %v1637
        %v1643 = vadd.f32 %v1567, %v1637
        %v1644 = vld [vmem:[%s411] sm:$0x80]
        %v1645 = vld [vmem:[%s411 + $0x8] sm:$0x80]
        %v1646 = vld [vmem:[%s411 + $0x10] sm:$0x7f]
        %v1647 = vld [vmem:[%s411 + $0x18] sm:$0x7f]
        %s1648 = sld [smem:[#allocation3 + $0x48]]
        %v1649 = vstv %s1648
        %v1650 = vmul.f32 %v1649, %v1644
        %v1651 = vmul.f32 %v1649, %v1645
        %v1652 = vmul.f32 %v1649, %v1646
        %v1653 = vmul.f32 %v1649, %v1647
        %v1654 = vadd.f32 %v1583, %v1650
        %v1655 = vadd.f32 %v1584, %v1651
        %v1656 = vadd.f32 %v1585, %v1652
        %v1657 = vadd.f32 %v1586, %v1653
        %s1658 = sld [smem:[#allocation3 + $0x49]]
        %v1659 = vstv %s1658
        %v1660 = vmul.f32 %v1659, %v1644
        %v1661 = vmul.f32 %v1659, %v1645
        %v1662 = vmul.f32 %v1659, %v1646
        %v1663 = vmul.f32 %v1659, %v1647
        %v1664 = vadd.f32 %v1602, %v1660
        %v1665 = vadd.f32 %v1603, %v1661
        %v1666 = vadd.f32 %v1604, %v1662
        %v1667 = vadd.f32 %v1605, %v1663
        %s1668 = sld [smem:[#allocation3 + $0x4a]]
        %v1669 = vstv %s1668
        %v1670 = vmul.f32 %v1669, %v1644
        %v1671 = vmul.f32 %v1669, %v1645
        %v1672 = vmul.f32 %v1669, %v1646
        %v1673 = vmul.f32 %v1669, %v1647
        %v1674 = vadd.f32 %v1621, %v1670
        %v1675 = vadd.f32 %v1622, %v1671
        %v1676 = vadd.f32 %v1623, %v1672
        %v1677 = vadd.f32 %v1624, %v1673
        %s1678 = sld [smem:[#allocation3 + $0x4b]]
        %v1679 = vstv %s1678
        %v1680 = vmul.f32 %v1679, %v1644
        %v1681 = vmul.f32 %v1679, %v1645
        %v1682 = vmul.f32 %v1679, %v1646
        %v1683 = vmul.f32 %v1679, %v1647
        %v1684 = vadd.f32 %v1640, %v1680
        %v1685 = vadd.f32 %v1641, %v1681
        %v1686 = vadd.f32 %v1642, %v1682
        %v1687 = vadd.f32 %v1643, %v1683
        %s1688 = sld [smem:[#allocation3 + $0x4c]]
        %v1689 = vstv %s1688
        %v1690 = vmul.f32 %v1689, %v1645
        %v1691 = vmul.f32 %v1689, %v1647
        %1694 = vrot.lane.b32.xlu0 %v1690, 127
        %v1695 = vpop.permute.xlu0 %1694
        %1696 = vrot.lane.b32.xlu0 %v1691, 127
        %v1697 = vpop.permute.xlu0 %1696
        %v1700 = vadd.f32 %v1654, %v1695
        %v1701 = vadd.f32 %v1655, %v1695
        %v1702 = vadd.f32 %v1656, %v1697
        %v1703 = vadd.f32 %v1657, %v1697
        %s1704 = sld [smem:[#allocation3 + $0x4d]]
        %v1705 = vstv %s1704
        %v1706 = vmul.f32 %v1705, %v1645
        %v1707 = vmul.f32 %v1705, %v1647
        %1710 = vrot.lane.b32.xlu0 %v1706, 127
        %v1711 = vpop.permute.xlu0 %1710
        %1712 = vrot.lane.b32.xlu0 %v1707, 127
        %v1713 = vpop.permute.xlu0 %1712
        %v1716 = vadd.f32 %v1664, %v1711
        %v1717 = vadd.f32 %v1665, %v1711
        %v1718 = vadd.f32 %v1666, %v1713
        %v1719 = vadd.f32 %v1667, %v1713
        %s1720 = sld [smem:[#allocation3 + $0x4e]]
        %v1721 = vstv %s1720
        %v1722 = vmul.f32 %v1721, %v1645
        %v1723 = vmul.f32 %v1721, %v1647
        %1726 = vrot.lane.b32.xlu0 %v1722, 127
        %v1727 = vpop.permute.xlu0 %1726
        %1728 = vrot.lane.b32.xlu0 %v1723, 127
        %v1729 = vpop.permute.xlu0 %1728
        %v1732 = vadd.f32 %v1674, %v1727
        %v1733 = vadd.f32 %v1675, %v1727
        %v1734 = vadd.f32 %v1676, %v1729
        %v1735 = vadd.f32 %v1677, %v1729
        %s1736 = sld [smem:[#allocation3 + $0x4f]]
        %v1737 = vstv %s1736
        %v1738 = vmul.f32 %v1737, %v1645
        %v1739 = vmul.f32 %v1737, %v1647
        %1742 = vrot.lane.b32.xlu0 %v1738, 127
        %v1743 = vpop.permute.xlu0 %1742
        %1744 = vrot.lane.b32.xlu0 %v1739, 127
        %v1745 = vpop.permute.xlu0 %1744
        %v1748 = vadd.f32 %v1684, %v1743
        %v1749 = vadd.f32 %v1685, %v1743
        %v1750 = vadd.f32 %v1686, %v1745
        %v1751 = vadd.f32 %v1687, %v1745
        %s1752 = sld [smem:[#allocation3 + $0x50]]
        %v1753 = vstv %s1752
        %v1754 = vmul.f32 %v1753, %v1645
        %v1755 = vmul.f32 %v1753, %v1647
        %1758 = vrot.lane.b32.xlu0 %v1754, 126
        %v1759 = vpop.permute.xlu0 %1758
        %1760 = vrot.lane.b32.xlu0 %v1755, 126
        %v1761 = vpop.permute.xlu0 %1760
        %v1764 = vadd.f32 %v1700, %v1759
        %v1765 = vadd.f32 %v1701, %v1759
        %v1766 = vadd.f32 %v1702, %v1761
        %v1767 = vadd.f32 %v1703, %v1761
        %s1768 = sld [smem:[#allocation3 + $0x51]]
        %v1769 = vstv %s1768
        %v1770 = vmul.f32 %v1769, %v1645
        %v1771 = vmul.f32 %v1769, %v1647
        %1774 = vrot.lane.b32.xlu0 %v1770, 126
        %v1775 = vpop.permute.xlu0 %1774
        %1776 = vrot.lane.b32.xlu0 %v1771, 126
        %v1777 = vpop.permute.xlu0 %1776
        %v1780 = vadd.f32 %v1716, %v1775
        %v1781 = vadd.f32 %v1717, %v1775
        %v1782 = vadd.f32 %v1718, %v1777
        %v1783 = vadd.f32 %v1719, %v1777
        %s1784 = sld [smem:[#allocation3 + $0x52]]
        %v1785 = vstv %s1784
        %v1786 = vmul.f32 %v1785, %v1645
        %v1787 = vmul.f32 %v1785, %v1647
        %1790 = vrot.lane.b32.xlu0 %v1786, 126
        %v1791 = vpop.permute.xlu0 %1790
        %1792 = vrot.lane.b32.xlu0 %v1787, 126
        %v1793 = vpop.permute.xlu0 %1792
        %v1796 = vadd.f32 %v1732, %v1791
        %v1797 = vadd.f32 %v1733, %v1791
        %v1798 = vadd.f32 %v1734, %v1793
        %v1799 = vadd.f32 %v1735, %v1793
        %s1800 = sld [smem:[#allocation3 + $0x53]]
        %v1801 = vstv %s1800
        %v1802 = vmul.f32 %v1801, %v1645
        %v1803 = vmul.f32 %v1801, %v1647
        %1806 = vrot.lane.b32.xlu0 %v1802, 126
        %v1807 = vpop.permute.xlu0 %1806
        %1808 = vrot.lane.b32.xlu0 %v1803, 126
        %v1809 = vpop.permute.xlu0 %1808
        %v1812 = vadd.f32 %v1748, %v1807
        %v1813 = vadd.f32 %v1749, %v1807
        %v1814 = vadd.f32 %v1750, %v1809
        %v1815 = vadd.f32 %v1751, %v1809
        %v1816 = vld [vmem:[%s411 + $0x10] sm:$0xff]
        %v1817 = vld [vmem:[%s411 + $0x18] sm:$0xff]
        %s1818 = sld [smem:[#allocation3 + $0x54]]
        %v1819 = vstv %s1818
        %v1820 = vmul.f32 %v1819, %v1816
        %v1821 = vmul.f32 %v1819, %v1817
        %v1824 = vrot.slane %v1820, 1
        %v1825 = vrot.slane %v1821, 1
        %v1828 = vadd.f32 %v1764, %v1824
        %v1829 = vadd.f32 %v1765, %v1825
        %v1830 = vadd.f32 %v1766, %v1824
        %v1831 = vadd.f32 %v1767, %v1825
        %s1832 = sld [smem:[#allocation3 + $0x55]]
        %v1833 = vstv %s1832
        %v1834 = vmul.f32 %v1833, %v1816
        %v1835 = vmul.f32 %v1833, %v1817
        %v1838 = vrot.slane %v1834, 1
        %v1839 = vrot.slane %v1835, 1
        %v1842 = vadd.f32 %v1780, %v1838
        %v1843 = vadd.f32 %v1781, %v1839
        %v1844 = vadd.f32 %v1782, %v1838
        %v1845 = vadd.f32 %v1783, %v1839
        %s1846 = sld [smem:[#allocation3 + $0x56]]
        %v1847 = vstv %s1846
        %v1848 = vmul.f32 %v1847, %v1816
        %v1849 = vmul.f32 %v1847, %v1817
        %v1852 = vrot.slane %v1848, 1
        %v1853 = vrot.slane %v1849, 1
        %v1856 = vadd.f32 %v1796, %v1852
        %v1857 = vadd.f32 %v1797, %v1853
        %v1858 = vadd.f32 %v1798, %v1852
        %v1859 = vadd.f32 %v1799, %v1853
        %s1860 = sld [smem:[#allocation3 + $0x57]]
        %v1861 = vstv %s1860
        %v1862 = vmul.f32 %v1861, %v1816
        %v1863 = vmul.f32 %v1861, %v1817
        %v1866 = vrot.slane %v1862, 1
        %v1867 = vrot.slane %v1863, 1
        %v1870 = vadd.f32 %v1812, %v1866
        %v1871 = vadd.f32 %v1813, %v1867
        %v1872 = vadd.f32 %v1814, %v1866
        %v1873 = vadd.f32 %v1815, %v1867
        %s1874 = sld [smem:[#allocation3 + $0x58]]
        %v1875 = vstv %s1874
        %v1876 = vmul.f32 %v1875, %v1817
        %v1878 = vrot.slane %v1876, 1
        %1879 = vrot.lane.b32.xlu0 %v1878, 127
        %v1880 = vpop.permute.xlu0 %1879
        %v1882 = vadd.f32 %v1828, %v1880
        %v1883 = vadd.f32 %v1829, %v1880
        %v1884 = vadd.f32 %v1830, %v1880
        %v1885 = vadd.f32 %v1831, %v1880
        %s1886 = sld [smem:[#allocation3 + $0x59]]
        %v1887 = vstv %s1886
        %v1888 = vmul.f32 %v1887, %v1817
        %v1890 = vrot.slane %v1888, 1
        %1891 = vrot.lane.b32.xlu0 %v1890, 127
        %v1892 = vpop.permute.xlu0 %1891
        %v1894 = vadd.f32 %v1842, %v1892
        %v1895 = vadd.f32 %v1843, %v1892
        %v1896 = vadd.f32 %v1844, %v1892
        %v1897 = vadd.f32 %v1845, %v1892
        %s1898 = sld [smem:[#allocation3 + $0x5a]]
        %v1899 = vstv %s1898
        %v1900 = vmul.f32 %v1899, %v1817
        %v1902 = vrot.slane %v1900, 1
        %1903 = vrot.lane.b32.xlu0 %v1902, 127
        %v1904 = vpop.permute.xlu0 %1903
        %v1906 = vadd.f32 %v1856, %v1904
        %v1907 = vadd.f32 %v1857, %v1904
        %v1908 = vadd.f32 %v1858, %v1904
        %v1909 = vadd.f32 %v1859, %v1904
        %s1910 = sld [smem:[#allocation3 + $0x5b]]
        %v1911 = vstv %s1910
        %v1912 = vmul.f32 %v1911, %v1817
        %v1914 = vrot.slane %v1912, 1
        %1915 = vrot.lane.b32.xlu0 %v1914, 127
        %v1916 = vpop.permute.xlu0 %1915
        %v1918 = vadd.f32 %v1870, %v1916
        %v1919 = vadd.f32 %v1871, %v1916
        %v1920 = vadd.f32 %v1872, %v1916
        %v1921 = vadd.f32 %v1873, %v1916
        %s1922 = sld [smem:[#allocation3 + $0x5c]]
        %v1923 = vstv %s1922
        %v1924 = vmul.f32 %v1923, %v1817
        %v1926 = vrot.slane %v1924, 1
        %1927 = vrot.lane.b32.xlu0 %v1926, 126
        %v1928 = vpop.permute.xlu0 %1927
        %v1930 = vadd.f32 %v1882, %v1928
        %v1931 = vadd.f32 %v1883, %v1928
        %v1932 = vadd.f32 %v1884, %v1928
        %v1933 = vadd.f32 %v1885, %v1928
        %s1934 = sld [smem:[#allocation3 + $0x5d]]
        %v1935 = vstv %s1934
        %v1936 = vmul.f32 %v1935, %v1817
        %v1938 = vrot.slane %v1936, 1
        %1939 = vrot.lane.b32.xlu0 %v1938, 126
        %v1940 = vpop.permute.xlu0 %1939
        %v1942 = vadd.f32 %v1894, %v1940
        %v1943 = vadd.f32 %v1895, %v1940
        %v1944 = vadd.f32 %v1896, %v1940
        %v1945 = vadd.f32 %v1897, %v1940
        %s1946 = sld [smem:[#allocation3 + $0x5e]]
        %v1947 = vstv %s1946
        %v1948 = vmul.f32 %v1947, %v1817
        %v1950 = vrot.slane %v1948, 1
        %1951 = vrot.lane.b32.xlu0 %v1950, 126
        %v1952 = vpop.permute.xlu0 %1951
        %v1954 = vadd.f32 %v1906, %v1952
        %v1955 = vadd.f32 %v1907, %v1952
        %v1956 = vadd.f32 %v1908, %v1952
        %v1957 = vadd.f32 %v1909, %v1952
        %s1958 = sld [smem:[#allocation3 + $0x5f]]
        %v1959 = vstv %s1958
        %v1960 = vmul.f32 %v1959, %v1817
        %v1962 = vrot.slane %v1960, 1
        %1963 = vrot.lane.b32.xlu0 %v1962, 126
        %v1964 = vpop.permute.xlu0 %1963
        %v1966 = vadd.f32 %v1918, %v1964
        %v1967 = vadd.f32 %v1919, %v1964
        %v1968 = vadd.f32 %v1920, %v1964
        %v1969 = vadd.f32 %v1921, %v1964
        %v1970 = vld [vmem:[%s411 + $0x10] sm:$0xfe]
        %v1971 = vld [vmem:[%s411 + $0x18] sm:$0xfe]
        %v1972 = vld [vmem:[%s411 + $0x20] sm:$0x1]
        %v1973 = vld [vmem:[%s411 + $0x28] sm:$0x1]
        %s1974 = sld [smem:[#allocation3 + $0x60]]
        %v1975 = vstv %s1974
        %v1976 = vmul.f32 %v1975, %v1970
        %v1977 = vmul.f32 %v1975, %v1971
        %v1978 = vmul.f32 %v1975, %v1972
        %v1979 = vmul.f32 %v1975, %v1973
        %v1984 = vrot.slane %v1976, 2
        %v1985 = vrot.slane %v1977, 2
        %v1986 = vrot.slane %v1978, 2
        %v1987 = vsel %vm827, %v1984, %v1986
        %v1988 = vrot.slane %v1979, 2
        %v1989 = vsel %vm827, %v1985, %v1988
        %v1994 = vadd.f32 %v1930, %v1984
        %v1995 = vadd.f32 %v1931, %v1985
        %v1996 = vadd.f32 %v1932, %v1987
        %v1997 = vadd.f32 %v1933, %v1989
        %s1998 = sld [smem:[#allocation3 + $0x61]]
        %v1999 = vstv %s1998
        %v2000 = vmul.f32 %v1999, %v1970
        %v2001 = vmul.f32 %v1999, %v1971
        %v2002 = vmul.f32 %v1999, %v1972
        %v2003 = vmul.f32 %v1999, %v1973
        %v2008 = vrot.slane %v2000, 2
        %v2009 = vrot.slane %v2001, 2
        %v2010 = vrot.slane %v2002, 2
        %v2011 = vsel %vm827, %v2008, %v2010
        %v2012 = vrot.slane %v2003, 2
        %v2013 = vsel %vm827, %v2009, %v2012
        %v2018 = vadd.f32 %v1942, %v2008
        %v2019 = vadd.f32 %v1943, %v2009
        %v2020 = vadd.f32 %v1944, %v2011
        %v2021 = vadd.f32 %v1945, %v2013
        %s2022 = sld [smem:[#allocation3 + $0x62]]
        %v2023 = vstv %s2022
        %v2024 = vmul.f32 %v2023, %v1970
        %v2025 = vmul.f32 %v2023, %v1971
        %v2026 = vmul.f32 %v2023, %v1972
        %v2027 = vmul.f32 %v2023, %v1973
        %v2032 = vrot.slane %v2024, 2
        %v2033 = vrot.slane %v2025, 2
        %v2034 = vrot.slane %v2026, 2
        %v2035 = vsel %vm827, %v2032, %v2034
        %v2036 = vrot.slane %v2027, 2
        %v2037 = vsel %vm827, %v2033, %v2036
        %v2042 = vadd.f32 %v1954, %v2032
        %v2043 = vadd.f32 %v1955, %v2033
        %v2044 = vadd.f32 %v1956, %v2035
        %v2045 = vadd.f32 %v1957, %v2037
        %s2046 = sld [smem:[#allocation3 + $0x63]]
        %v2047 = vstv %s2046
        %v2048 = vmul.f32 %v2047, %v1970
        %v2049 = vmul.f32 %v2047, %v1971
        %v2050 = vmul.f32 %v2047, %v1972
        %v2051 = vmul.f32 %v2047, %v1973
        %v2056 = vrot.slane %v2048, 2
        %v2057 = vrot.slane %v2049, 2
        %v2058 = vrot.slane %v2050, 2
        %v2059 = vsel %vm827, %v2056, %v2058
        %v2060 = vrot.slane %v2051, 2
        %v2061 = vsel %vm827, %v2057, %v2060
        %v2066 = vadd.f32 %v1966, %v2056
        %v2067 = vadd.f32 %v1967, %v2057
        %v2068 = vadd.f32 %v1968, %v2059
        %v2069 = vadd.f32 %v1969, %v2061
        %s2070 = sld [smem:[#allocation3 + $0x64]]
        %v2071 = vstv %s2070
        %v2072 = vmul.f32 %v2071, %v1971
        %v2073 = vmul.f32 %v2071, %v1973
        %v2076 = vrot.slane %v2072, 2
        %v2077 = vrot.slane %v2073, 2
        %v2078 = vsel %vm827, %v2076, %v2077
        %2079 = vrot.lane.b32.xlu0 %v2076, 127
        %v2080 = vpop.permute.xlu0 %2079
        %2081 = vrot.lane.b32.xlu0 %v2078, 127
        %v2082 = vpop.permute.xlu0 %2081
        %v2085 = vadd.f32 %v1994, %v2080
        %v2086 = vadd.f32 %v1995, %v2080
        %v2087 = vadd.f32 %v1996, %v2082
        %v2088 = vadd.f32 %v1997, %v2082
        %s2089 = sld [smem:[#allocation3 + $0x65]]
        %v2090 = vstv %s2089
        %v2091 = vmul.f32 %v2090, %v1971
        %v2092 = vmul.f32 %v2090, %v1973
        %v2095 = vrot.slane %v2091, 2
        %v2096 = vrot.slane %v2092, 2
        %v2097 = vsel %vm827, %v2095, %v2096
        %2098 = vrot.lane.b32.xlu0 %v2095, 127
        %v2099 = vpop.permute.xlu0 %2098
        %2100 = vrot.lane.b32.xlu0 %v2097, 127
        %v2101 = vpop.permute.xlu0 %2100
        %v2104 = vadd.f32 %v2018, %v2099
        %v2105 = vadd.f32 %v2019, %v2099
        %v2106 = vadd.f32 %v2020, %v2101
        %v2107 = vadd.f32 %v2021, %v2101
        %s2108 = sld [smem:[#allocation3 + $0x66]]
        %v2109 = vstv %s2108
        %v2110 = vmul.f32 %v2109, %v1971
        %v2111 = vmul.f32 %v2109, %v1973
        %v2114 = vrot.slane %v2110, 2
        %v2115 = vrot.slane %v2111, 2
        %v2116 = vsel %vm827, %v2114, %v2115
        %2117 = vrot.lane.b32.xlu0 %v2114, 127
        %v2118 = vpop.permute.xlu0 %2117
        %2119 = vrot.lane.b32.xlu0 %v2116, 127
        %v2120 = vpop.permute.xlu0 %2119
        %v2123 = vadd.f32 %v2042, %v2118
        %v2124 = vadd.f32 %v2043, %v2118
        %v2125 = vadd.f32 %v2044, %v2120
        %v2126 = vadd.f32 %v2045, %v2120
        %s2127 = sld [smem:[#allocation3 + $0x67]]
        %v2128 = vstv %s2127
        %v2129 = vmul.f32 %v2128, %v1971
        %v2130 = vmul.f32 %v2128, %v1973
        %v2133 = vrot.slane %v2129, 2
        %v2134 = vrot.slane %v2130, 2
        %v2135 = vsel %vm827, %v2133, %v2134
        %2136 = vrot.lane.b32.xlu0 %v2133, 127
        %v2137 = vpop.permute.xlu0 %2136
        %2138 = vrot.lane.b32.xlu0 %v2135, 127
        %v2139 = vpop.permute.xlu0 %2138
        %v2142 = vadd.f32 %v2066, %v2137
        %v2143 = vadd.f32 %v2067, %v2137
        %v2144 = vadd.f32 %v2068, %v2139
        %v2145 = vadd.f32 %v2069, %v2139
        %s2146 = sld [smem:[#allocation3 + $0x68]]
        %v2147 = vstv %s2146
        %v2148 = vmul.f32 %v2147, %v1971
        %v2149 = vmul.f32 %v2147, %v1973
        %v2152 = vrot.slane %v2148, 2
        %v2153 = vrot.slane %v2149, 2
        %v2154 = vsel %vm827, %v2152, %v2153
        %2155 = vrot.lane.b32.xlu0 %v2152, 126
        %v2156 = vpop.permute.xlu0 %2155
        %2157 = vrot.lane.b32.xlu0 %v2154, 126
        %v2158 = vpop.permute.xlu0 %2157
        %v2161 = vadd.f32 %v2085, %v2156
        %v2162 = vadd.f32 %v2086, %v2156
        %v2163 = vadd.f32 %v2087, %v2158
        %v2164 = vadd.f32 %v2088, %v2158
        %s2165 = sld [smem:[#allocation3 + $0x69]]
        %v2166 = vstv %s2165
        %v2167 = vmul.f32 %v2166, %v1971
        %v2168 = vmul.f32 %v2166, %v1973
        %v2171 = vrot.slane %v2167, 2
        %v2172 = vrot.slane %v2168, 2
        %v2173 = vsel %vm827, %v2171, %v2172
        %2174 = vrot.lane.b32.xlu0 %v2171, 126
        %v2175 = vpop.permute.xlu0 %2174
        %2176 = vrot.lane.b32.xlu0 %v2173, 126
        %v2177 = vpop.permute.xlu0 %2176
        %v2180 = vadd.f32 %v2104, %v2175
        %v2181 = vadd.f32 %v2105, %v2175
        %v2182 = vadd.f32 %v2106, %v2177
        %v2183 = vadd.f32 %v2107, %v2177
        %s2184 = sld [smem:[#allocation3 + $0x6a]]
        %v2185 = vstv %s2184
        %v2186 = vmul.f32 %v2185, %v1971
        %v2187 = vmul.f32 %v2185, %v1973
        %v2190 = vrot.slane %v2186, 2
        %v2191 = vrot.slane %v2187, 2
        %v2192 = vsel %vm827, %v2190, %v2191
        %2193 = vrot.lane.b32.xlu0 %v2190, 126
        %v2194 = vpop.permute.xlu0 %2193
        %2195 = vrot.lane.b32.xlu0 %v2192, 126
        %v2196 = vpop.permute.xlu0 %2195
        %v2199 = vadd.f32 %v2123, %v2194
        %v2200 = vadd.f32 %v2124, %v2194
        %v2201 = vadd.f32 %v2125, %v2196
        %v2202 = vadd.f32 %v2126, %v2196
        %s2203 = sld [smem:[#allocation3 + $0x6b]]
        %v2204 = vstv %s2203
        %v2205 = vmul.f32 %v2204, %v1971
        %v2206 = vmul.f32 %v2204, %v1973
        %v2209 = vrot.slane %v2205, 2
        %v2210 = vrot.slane %v2206, 2
        %v2211 = vsel %vm827, %v2209, %v2210
        %2212 = vrot.lane.b32.xlu0 %v2209, 126
        %v2213 = vpop.permute.xlu0 %2212
        %2214 = vrot.lane.b32.xlu0 %v2211, 126
        %v2215 = vpop.permute.xlu0 %2214
        %v2218 = vadd.f32 %v2142, %v2213
        %v2219 = vadd.f32 %v2143, %v2213
        %v2220 = vadd.f32 %v2144, %v2215
        %v2221 = vadd.f32 %v2145, %v2215
        %v2222 = vld [vmem:[%s418] sm:$0x80]
        %v2223 = vld [vmem:[%s418 + $0x8] sm:$0x80]
        %v2224 = vld [vmem:[%s418 + $0x10] sm:$0x7f]
        %v2225 = vld [vmem:[%s418 + $0x18] sm:$0x7f]
        %s2226 = sld [smem:[#allocation3 + $0x6c]]
        %v2227 = vstv %s2226
        %v2228 = vmul.f32 %v2227, %v2222
        %v2229 = vmul.f32 %v2227, %v2223
        %v2230 = vmul.f32 %v2227, %v2224
        %v2231 = vmul.f32 %v2227, %v2225
        %v2232 = vadd.f32 %v2161, %v2228
        %v2233 = vadd.f32 %v2162, %v2229
        %v2234 = vadd.f32 %v2163, %v2230
        %v2235 = vadd.f32 %v2164, %v2231
        %s2236 = sld [smem:[#allocation3 + $0x6d]]
        %v2237 = vstv %s2236
        %v2238 = vmul.f32 %v2237, %v2222
        %v2239 = vmul.f32 %v2237, %v2223
        %v2240 = vmul.f32 %v2237, %v2224
        %v2241 = vmul.f32 %v2237, %v2225
        %v2242 = vadd.f32 %v2180, %v2238
        %v2243 = vadd.f32 %v2181, %v2239
        %v2244 = vadd.f32 %v2182, %v2240
        %v2245 = vadd.f32 %v2183, %v2241
        %s2246 = sld [smem:[#allocation3 + $0x6e]]
        %v2247 = vstv %s2246
        %v2248 = vmul.f32 %v2247, %v2222
        %v2249 = vmul.f32 %v2247, %v2223
        %v2250 = vmul.f32 %v2247, %v2224
        %v2251 = vmul.f32 %v2247, %v2225
        %v2252 = vadd.f32 %v2199, %v2248
        %v2253 = vadd.f32 %v2200, %v2249
        %v2254 = vadd.f32 %v2201, %v2250
        %v2255 = vadd.f32 %v2202, %v2251
        %s2256 = sld [smem:[#allocation3 + $0x6f]]
        %v2257 = vstv %s2256
        %v2258 = vmul.f32 %v2257, %v2222
        %v2259 = vmul.f32 %v2257, %v2223
        %v2260 = vmul.f32 %v2257, %v2224
        %v2261 = vmul.f32 %v2257, %v2225
        %v2262 = vadd.f32 %v2218, %v2258
        %v2263 = vadd.f32 %v2219, %v2259
        %v2264 = vadd.f32 %v2220, %v2260
        %v2265 = vadd.f32 %v2221, %v2261
        %s2266 = sld [smem:[#allocation3 + $0x70]]
        %v2267 = vstv %s2266
        %v2268 = vmul.f32 %v2267, %v2223
        %v2269 = vmul.f32 %v2267, %v2225
        %2272 = vrot.lane.b32.xlu0 %v2268, 127
        %v2273 = vpop.permute.xlu0 %2272
        %2274 = vrot.lane.b32.xlu0 %v2269, 127
        %v2275 = vpop.permute.xlu0 %2274
        %v2278 = vadd.f32 %v2232, %v2273
        %v2279 = vadd.f32 %v2233, %v2273
        %v2280 = vadd.f32 %v2234, %v2275
        %v2281 = vadd.f32 %v2235, %v2275
        %s2282 = sld [smem:[#allocation3 + $0x71]]
        %v2283 = vstv %s2282
        %v2284 = vmul.f32 %v2283, %v2223
        %v2285 = vmul.f32 %v2283, %v2225
        %2288 = vrot.lane.b32.xlu0 %v2284, 127
        %v2289 = vpop.permute.xlu0 %2288
        %2290 = vrot.lane.b32.xlu0 %v2285, 127
        %v2291 = vpop.permute.xlu0 %2290
        %v2294 = vadd.f32 %v2242, %v2289
        %v2295 = vadd.f32 %v2243, %v2289
        %v2296 = vadd.f32 %v2244, %v2291
        %v2297 = vadd.f32 %v2245, %v2291
        %s2298 = sld [smem:[#allocation3 + $0x72]]
        %v2299 = vstv %s2298
        %v2300 = vmul.f32 %v2299, %v2223
        %v2301 = vmul.f32 %v2299, %v2225
        %2304 = vrot.lane.b32.xlu0 %v2300, 127
        %v2305 = vpop.permute.xlu0 %2304
        %2306 = vrot.lane.b32.xlu0 %v2301, 127
        %v2307 = vpop.permute.xlu0 %2306
        %v2310 = vadd.f32 %v2252, %v2305
        %v2311 = vadd.f32 %v2253, %v2305
        %v2312 = vadd.f32 %v2254, %v2307
        %v2313 = vadd.f32 %v2255, %v2307
        %s2314 = sld [smem:[#allocation3 + $0x73]]
        %v2315 = vstv %s2314
        %v2316 = vmul.f32 %v2315, %v2223
        %v2317 = vmul.f32 %v2315, %v2225
        %2320 = vrot.lane.b32.xlu0 %v2316, 127
        %v2321 = vpop.permute.xlu0 %2320
        %2322 = vrot.lane.b32.xlu0 %v2317, 127
        %v2323 = vpop.permute.xlu0 %2322
        %v2326 = vadd.f32 %v2262, %v2321
        %v2327 = vadd.f32 %v2263, %v2321
        %v2328 = vadd.f32 %v2264, %v2323
        %v2329 = vadd.f32 %v2265, %v2323
        %s2330 = sld [smem:[#allocation3 + $0x74]]
        %v2331 = vstv %s2330
        %v2332 = vmul.f32 %v2331, %v2223
        %v2333 = vmul.f32 %v2331, %v2225
        %2336 = vrot.lane.b32.xlu0 %v2332, 126
        %v2337 = vpop.permute.xlu0 %2336
        %2338 = vrot.lane.b32.xlu0 %v2333, 126
        %v2339 = vpop.permute.xlu0 %2338
        %v2342 = vadd.f32 %v2278, %v2337
        %v2343 = vadd.f32 %v2279, %v2337
        %v2344 = vadd.f32 %v2280, %v2339
        %v2345 = vadd.f32 %v2281, %v2339
        %s2346 = sld [smem:[#allocation3 + $0x75]]
        %v2347 = vstv %s2346
        %v2348 = vmul.f32 %v2347, %v2223
        %v2349 = vmul.f32 %v2347, %v2225
        %2352 = vrot.lane.b32.xlu0 %v2348, 126
        %v2353 = vpop.permute.xlu0 %2352
        %2354 = vrot.lane.b32.xlu0 %v2349, 126
        %v2355 = vpop.permute.xlu0 %2354
        %v2358 = vadd.f32 %v2294, %v2353
        %v2359 = vadd.f32 %v2295, %v2353
        %v2360 = vadd.f32 %v2296, %v2355
        %v2361 = vadd.f32 %v2297, %v2355
        %s2362 = sld [smem:[#allocation3 + $0x76]]
        %v2363 = vstv %s2362
        %v2364 = vmul.f32 %v2363, %v2223
        %v2365 = vmul.f32 %v2363, %v2225
        %2368 = vrot.lane.b32.xlu0 %v2364, 126
        %v2369 = vpop.permute.xlu0 %2368
        %2370 = vrot.lane.b32.xlu0 %v2365, 126
        %v2371 = vpop.permute.xlu0 %2370
        %v2374 = vadd.f32 %v2310, %v2369
        %v2375 = vadd.f32 %v2311, %v2369
        %v2376 = vadd.f32 %v2312, %v2371
        %v2377 = vadd.f32 %v2313, %v2371
        %s2378 = sld [smem:[#allocation3 + $0x77]]
        %v2379 = vstv %s2378
        %v2380 = vmul.f32 %v2379, %v2223
        %v2381 = vmul.f32 %v2379, %v2225
        %2384 = vrot.lane.b32.xlu0 %v2380, 126
        %v2385 = vpop.permute.xlu0 %2384
        %2386 = vrot.lane.b32.xlu0 %v2381, 126
        %v2387 = vpop.permute.xlu0 %2386
        %v2390 = vadd.f32 %v2326, %v2385
        %v2391 = vadd.f32 %v2327, %v2385
        %v2392 = vadd.f32 %v2328, %v2387
        %v2393 = vadd.f32 %v2329, %v2387
        %v2394 = vld [vmem:[%s418 + $0x10] sm:$0xff]
        %v2395 = vld [vmem:[%s418 + $0x18] sm:$0xff]
        %s2396 = sld [smem:[#allocation3 + $0x78]]
        %v2397 = vstv %s2396
        %v2398 = vmul.f32 %v2397, %v2394
        %v2399 = vmul.f32 %v2397, %v2395
        %v2402 = vrot.slane %v2398, 1
        %v2403 = vrot.slane %v2399, 1
        %v2406 = vadd.f32 %v2342, %v2402
        %v2407 = vadd.f32 %v2343, %v2403
        %v2408 = vadd.f32 %v2344, %v2402
        %v2409 = vadd.f32 %v2345, %v2403
        %s2410 = sld [smem:[#allocation3 + $0x79]]
        %v2411 = vstv %s2410
        %v2412 = vmul.f32 %v2411, %v2394
        %v2413 = vmul.f32 %v2411, %v2395
        %v2416 = vrot.slane %v2412, 1
        %v2417 = vrot.slane %v2413, 1
        %v2420 = vadd.f32 %v2358, %v2416
        %v2421 = vadd.f32 %v2359, %v2417
        %v2422 = vadd.f32 %v2360, %v2416
        %v2423 = vadd.f32 %v2361, %v2417
        %s2424 = sld [smem:[#allocation3 + $0x7a]]
        %v2425 = vstv %s2424
        %v2426 = vmul.f32 %v2425, %v2394
        %v2427 = vmul.f32 %v2425, %v2395
        %v2430 = vrot.slane %v2426, 1
        %v2431 = vrot.slane %v2427, 1
        %v2434 = vadd.f32 %v2374, %v2430
        %v2435 = vadd.f32 %v2375, %v2431
        %v2436 = vadd.f32 %v2376, %v2430
        %v2437 = vadd.f32 %v2377, %v2431
        %s2438 = sld [smem:[#allocation3 + $0x7b]]
        %v2439 = vstv %s2438
        %v2440 = vmul.f32 %v2439, %v2394
        %v2441 = vmul.f32 %v2439, %v2395
        %v2444 = vrot.slane %v2440, 1
        %v2445 = vrot.slane %v2441, 1
        %v2448 = vadd.f32 %v2390, %v2444
        %v2449 = vadd.f32 %v2391, %v2445
        %v2450 = vadd.f32 %v2392, %v2444
        %v2451 = vadd.f32 %v2393, %v2445
        %s2452 = sld [smem:[#allocation3 + $0x7c]]
        %v2453 = vstv %s2452
        %v2454 = vmul.f32 %v2453, %v2395
        %v2456 = vrot.slane %v2454, 1
        %2457 = vrot.lane.b32.xlu0 %v2456, 127
        %v2458 = vpop.permute.xlu0 %2457
        %v2460 = vadd.f32 %v2406, %v2458
        %v2461 = vadd.f32 %v2407, %v2458
        %v2462 = vadd.f32 %v2408, %v2458
        %v2463 = vadd.f32 %v2409, %v2458
        %s2464 = sld [smem:[#allocation3 + $0x7d]]
        %v2465 = vstv %s2464
        %v2466 = vmul.f32 %v2465, %v2395
        %v2468 = vrot.slane %v2466, 1
        %2469 = vrot.lane.b32.xlu0 %v2468, 127
        %v2470 = vpop.permute.xlu0 %2469
        %v2472 = vadd.f32 %v2420, %v2470
        %v2473 = vadd.f32 %v2421, %v2470
        %v2474 = vadd.f32 %v2422, %v2470
        %v2475 = vadd.f32 %v2423, %v2470
        %s2476 = sld [smem:[#allocation3 + $0x7e]]
        %v2477 = vstv %s2476
        %v2478 = vmul.f32 %v2477, %v2395
        %v2480 = vrot.slane %v2478, 1
        %2481 = vrot.lane.b32.xlu0 %v2480, 127
        %v2482 = vpop.permute.xlu0 %2481
        %v2484 = vadd.f32 %v2434, %v2482
        %v2485 = vadd.f32 %v2435, %v2482
        %v2486 = vadd.f32 %v2436, %v2482
        %v2487 = vadd.f32 %v2437, %v2482
        %s2488 = sld [smem:[#allocation3 + $0x7f]]
        %v2489 = vstv %s2488
        %v2490 = vmul.f32 %v2489, %v2395
        %v2492 = vrot.slane %v2490, 1
        %2493 = vrot.lane.b32.xlu0 %v2492, 127
        %v2494 = vpop.permute.xlu0 %2493
        %v2496 = vadd.f32 %v2448, %v2494
        %v2497 = vadd.f32 %v2449, %v2494
        %v2498 = vadd.f32 %v2450, %v2494
        %v2499 = vadd.f32 %v2451, %v2494
        %s2500 = sld [smem:[#allocation3 + $0x80]]
        %v2501 = vstv %s2500
        %v2502 = vmul.f32 %v2501, %v2395
        %v2504 = vrot.slane %v2502, 1
        %2505 = vrot.lane.b32.xlu0 %v2504, 126
        %v2506 = vpop.permute.xlu0 %2505
        %v2508 = vadd.f32 %v2460, %v2506
        %v2509 = vadd.f32 %v2461, %v2506
        %v2510 = vadd.f32 %v2462, %v2506
        %v2511 = vadd.f32 %v2463, %v2506
        %s2512 = sld [smem:[#allocation3 + $0x81]]
        %v2513 = vstv %s2512
        %v2514 = vmul.f32 %v2513, %v2395
        %v2516 = vrot.slane %v2514, 1
        %2517 = vrot.lane.b32.xlu0 %v2516, 126
        %v2518 = vpop.permute.xlu0 %2517
        %v2520 = vadd.f32 %v2472, %v2518
        %v2521 = vadd.f32 %v2473, %v2518
        %v2522 = vadd.f32 %v2474, %v2518
        %v2523 = vadd.f32 %v2475, %v2518
        %s2524 = sld [smem:[#allocation3 + $0x82]]
        %v2525 = vstv %s2524
        %v2526 = vmul.f32 %v2525, %v2395
        %v2528 = vrot.slane %v2526, 1
        %2529 = vrot.lane.b32.xlu0 %v2528, 126
        %v2530 = vpop.permute.xlu0 %2529
        %v2532 = vadd.f32 %v2484, %v2530
        %v2533 = vadd.f32 %v2485, %v2530
        %v2534 = vadd.f32 %v2486, %v2530
        %v2535 = vadd.f32 %v2487, %v2530
        %s2536 = sld [smem:[#allocation3 + $0x83]]
        %v2537 = vstv %s2536
        %v2538 = vmul.f32 %v2537, %v2395
        %v2540 = vrot.slane %v2538, 1
        %2541 = vrot.lane.b32.xlu0 %v2540, 126
        %v2542 = vpop.permute.xlu0 %2541
        %v2544 = vadd.f32 %v2496, %v2542
        %v2545 = vadd.f32 %v2497, %v2542
        %v2546 = vadd.f32 %v2498, %v2542
        %v2547 = vadd.f32 %v2499, %v2542
        %v2548 = vld [vmem:[%s418 + $0x10] sm:$0xfe]
        %v2549 = vld [vmem:[%s418 + $0x18] sm:$0xfe]
        %v2550 = vld [vmem:[%s418 + $0x20] sm:$0x1]
        %v2551 = vld [vmem:[%s418 + $0x28] sm:$0x1]
        %s2552 = sld [smem:[#allocation3 + $0x84]]
        %v2553 = vstv %s2552
        %v2554 = vmul.f32 %v2553, %v2548
        %v2555 = vmul.f32 %v2553, %v2549
        %v2556 = vmul.f32 %v2553, %v2550
        %v2557 = vmul.f32 %v2553, %v2551
        %v2562 = vrot.slane %v2554, 2
        %v2563 = vrot.slane %v2555, 2
        %v2564 = vrot.slane %v2556, 2
        %v2565 = vsel %vm827, %v2562, %v2564
        %v2566 = vrot.slane %v2557, 2
        %v2567 = vsel %vm827, %v2563, %v2566
        %v2572 = vadd.f32 %v2508, %v2562
        %v2573 = vadd.f32 %v2509, %v2563
        %v2574 = vadd.f32 %v2510, %v2565
        %v2575 = vadd.f32 %v2511, %v2567
        %s2576 = sld [smem:[#allocation3 + $0x85]]
        %v2577 = vstv %s2576
        %v2578 = vmul.f32 %v2577, %v2548
        %v2579 = vmul.f32 %v2577, %v2549
        %v2580 = vmul.f32 %v2577, %v2550
        %v2581 = vmul.f32 %v2577, %v2551
        %v2586 = vrot.slane %v2578, 2
        %v2587 = vrot.slane %v2579, 2
        %v2588 = vrot.slane %v2580, 2
        %v2589 = vsel %vm827, %v2586, %v2588
        %v2590 = vrot.slane %v2581, 2
        %v2591 = vsel %vm827, %v2587, %v2590
        %v2596 = vadd.f32 %v2520, %v2586
        %v2597 = vadd.f32 %v2521, %v2587
        %v2598 = vadd.f32 %v2522, %v2589
        %v2599 = vadd.f32 %v2523, %v2591
        %s2600 = sld [smem:[#allocation3 + $0x86]]
        %v2601 = vstv %s2600
        %v2602 = vmul.f32 %v2601, %v2548
        %v2603 = vmul.f32 %v2601, %v2549
        %v2604 = vmul.f32 %v2601, %v2550
        %v2605 = vmul.f32 %v2601, %v2551
        %v2610 = vrot.slane %v2602, 2
        %v2611 = vrot.slane %v2603, 2
        %v2612 = vrot.slane %v2604, 2
        %v2613 = vsel %vm827, %v2610, %v2612
        %v2614 = vrot.slane %v2605, 2
        %v2615 = vsel %vm827, %v2611, %v2614
        %v2620 = vadd.f32 %v2532, %v2610
        %v2621 = vadd.f32 %v2533, %v2611
        %v2622 = vadd.f32 %v2534, %v2613
        %v2623 = vadd.f32 %v2535, %v2615
        %s2624 = sld [smem:[#allocation3 + $0x87]]
        %v2625 = vstv %s2624
        %v2626 = vmul.f32 %v2625, %v2548
        %v2627 = vmul.f32 %v2625, %v2549
        %v2628 = vmul.f32 %v2625, %v2550
        %v2629 = vmul.f32 %v2625, %v2551
        %v2634 = vrot.slane %v2626, 2
        %v2635 = vrot.slane %v2627, 2
        %v2636 = vrot.slane %v2628, 2
        %v2637 = vsel %vm827, %v2634, %v2636
        %v2638 = vrot.slane %v2629, 2
        %v2639 = vsel %vm827, %v2635, %v2638
        %v2644 = vadd.f32 %v2544, %v2634
        %v2645 = vadd.f32 %v2545, %v2635
        %v2646 = vadd.f32 %v2546, %v2637
        %v2647 = vadd.f32 %v2547, %v2639
        %s2648 = sld [smem:[#allocation3 + $0x88]]
        %v2649 = vstv %s2648
        %v2650 = vmul.f32 %v2649, %v2549
        %v2651 = vmul.f32 %v2649, %v2551
        %v2654 = vrot.slane %v2650, 2
        %v2655 = vrot.slane %v2651, 2
        %v2656 = vsel %vm827, %v2654, %v2655
        %2657 = vrot.lane.b32.xlu0 %v2654, 127
        %v2658 = vpop.permute.xlu0 %2657
        %2659 = vrot.lane.b32.xlu0 %v2656, 127
        %v2660 = vpop.permute.xlu0 %2659
        %v2663 = vadd.f32 %v2572, %v2658
        %v2664 = vadd.f32 %v2573, %v2658
        %v2665 = vadd.f32 %v2574, %v2660
        %v2666 = vadd.f32 %v2575, %v2660
        %s2667 = sld [smem:[#allocation3 + $0x89]]
        %v2668 = vstv %s2667
        %v2669 = vmul.f32 %v2668, %v2549
        %v2670 = vmul.f32 %v2668, %v2551
        %v2673 = vrot.slane %v2669, 2
        %v2674 = vrot.slane %v2670, 2
        %v2675 = vsel %vm827, %v2673, %v2674
        %2676 = vrot.lane.b32.xlu0 %v2673, 127
        %v2677 = vpop.permute.xlu0 %2676
        %2678 = vrot.lane.b32.xlu0 %v2675, 127
        %v2679 = vpop.permute.xlu0 %2678
        %v2682 = vadd.f32 %v2596, %v2677
        %v2683 = vadd.f32 %v2597, %v2677
        %v2684 = vadd.f32 %v2598, %v2679
        %v2685 = vadd.f32 %v2599, %v2679
        %s2686 = sld [smem:[#allocation3 + $0x8a]]
        %v2687 = vstv %s2686
        %v2688 = vmul.f32 %v2687, %v2549
        %v2689 = vmul.f32 %v2687, %v2551
        %v2692 = vrot.slane %v2688, 2
        %v2693 = vrot.slane %v2689, 2
        %v2694 = vsel %vm827, %v2692, %v2693
        %2695 = vrot.lane.b32.xlu0 %v2692, 127
        %v2696 = vpop.permute.xlu0 %2695
        %2697 = vrot.lane.b32.xlu0 %v2694, 127
        %v2698 = vpop.permute.xlu0 %2697
        %v2701 = vadd.f32 %v2620, %v2696
        %v2702 = vadd.f32 %v2621, %v2696
        %v2703 = vadd.f32 %v2622, %v2698
        %v2704 = vadd.f32 %v2623, %v2698
        %s2705 = sld [smem:[#allocation3 + $0x8b]]
        %v2706 = vstv %s2705
        %v2707 = vmul.f32 %v2706, %v2549
        %v2708 = vmul.f32 %v2706, %v2551
        %v2711 = vrot.slane %v2707, 2
        %v2712 = vrot.slane %v2708, 2
        %v2713 = vsel %vm827, %v2711, %v2712
        %2714 = vrot.lane.b32.xlu0 %v2711, 127
        %v2715 = vpop.permute.xlu0 %2714
        %2716 = vrot.lane.b32.xlu0 %v2713, 127
        %v2717 = vpop.permute.xlu0 %2716
        %v2720 = vadd.f32 %v2644, %v2715
        %v2721 = vadd.f32 %v2645, %v2715
        %v2722 = vadd.f32 %v2646, %v2717
        %v2723 = vadd.f32 %v2647, %v2717
        %s2724 = sld [smem:[#allocation3 + $0x8c]]
        %v2725 = vstv %s2724
        %v2726 = vmul.f32 %v2725, %v2549
        %v2727 = vmul.f32 %v2725, %v2551
        %v2730 = vrot.slane %v2726, 2
        %v2731 = vrot.slane %v2727, 2
        %v2732 = vsel %vm827, %v2730, %v2731
        %2733 = vrot.lane.b32.xlu0 %v2730, 126
        %v2734 = vpop.permute.xlu0 %2733
        %2735 = vrot.lane.b32.xlu0 %v2732, 126
        %v2736 = vpop.permute.xlu0 %2735
        %v2739 = vadd.f32 %v2663, %v2734
        %v2740 = vadd.f32 %v2664, %v2734
        %v2741 = vadd.f32 %v2665, %v2736
        %v2742 = vadd.f32 %v2666, %v2736
        %s2743 = sld [smem:[#allocation3 + $0x8d]]
        %v2744 = vstv %s2743
        %v2745 = vmul.f32 %v2744, %v2549
        %v2746 = vmul.f32 %v2744, %v2551
        %v2749 = vrot.slane %v2745, 2
        %v2750 = vrot.slane %v2746, 2
        %v2751 = vsel %vm827, %v2749, %v2750
        %2752 = vrot.lane.b32.xlu0 %v2749, 126
        %v2753 = vpop.permute.xlu0 %2752
        %2754 = vrot.lane.b32.xlu0 %v2751, 126
        %v2755 = vpop.permute.xlu0 %2754
        %v2758 = vadd.f32 %v2682, %v2753
        %v2759 = vadd.f32 %v2683, %v2753
        %v2760 = vadd.f32 %v2684, %v2755
        %v2761 = vadd.f32 %v2685, %v2755
        %s2762 = sld [smem:[#allocation3 + $0x8e]]
        %v2763 = vstv %s2762
        %v2764 = vmul.f32 %v2763, %v2549
        %v2765 = vmul.f32 %v2763, %v2551
        %v2768 = vrot.slane %v2764, 2
        %v2769 = vrot.slane %v2765, 2
        %v2770 = vsel %vm827, %v2768, %v2769
        %2771 = vrot.lane.b32.xlu0 %v2768, 126
        %v2772 = vpop.permute.xlu0 %2771
        %2773 = vrot.lane.b32.xlu0 %v2770, 126
        %v2774 = vpop.permute.xlu0 %2773
        %v2777 = vadd.f32 %v2701, %v2772
        %v2778 = vadd.f32 %v2702, %v2772
        %v2779 = vadd.f32 %v2703, %v2774
        %v2780 = vadd.f32 %v2704, %v2774
        %s2781 = sld [smem:[#allocation3 + $0x8f]]
        %v2782 = vstv %s2781
        %v2783 = vmul.f32 %v2782, %v2549
        %v2784 = vmul.f32 %v2782, %v2551
        %v2787 = vrot.slane %v2783, 2
        %v2788 = vrot.slane %v2784, 2
        %v2789 = vsel %vm827, %v2787, %v2788
        %2790 = vrot.lane.b32.xlu0 %v2787, 126
        %v2791 = vpop.permute.xlu0 %2790
        %2792 = vrot.lane.b32.xlu0 %v2789, 126
        %v2793 = vpop.permute.xlu0 %2792
        %v2796 = vadd.f32 %v2720, %v2791
        %v2797 = vadd.f32 %v2721, %v2791
        %v2798 = vadd.f32 %v2722, %v2793
        %v2799 = vadd.f32 %v2723, %v2793
        %s2800 = sld [smem:[#allocation8]]
        %v2801 = vstv %s2800
        %v2802 = vadd.f32 %v2739, %v2801
        %v2803 = vadd.f32 %v2740, %v2801
        %v2804 = vadd.f32 %v2741, %v2801
        %v2805 = vadd.f32 %v2742, %v2801
        %v2806 = vmax.f32 %v2802, 0.0
        %v2807 = vmax.f32 %v2803, 0.0
        %v2808 = vmax.f32 %v2804, 0.0
        %v2809 = vmax.f32 %v2805, 0.0
        %2814 = vrot.lane.b32.xlu0 %v2806, 1
        %v2815 = vpop.permute.xlu0 %2814
        %2816 = vrot.lane.b32.xlu0 %v2807, 1
        %v2817 = vpop.permute.xlu0 %2816
        %2818 = vrot.lane.b32.xlu0 %v2808, 1
        %v2819 = vpop.permute.xlu0 %2818
        %2820 = vrot.lane.b32.xlu0 %v2809, 1
        %v2821 = vpop.permute.xlu0 %2820
        %vm2822 = vcmask 7168
        %v2823 = vsel %vm2822, %v2815, %v2817
        %v2824 = vsel %vm2822, %v2819, %v2821
        %vm2827 = vcmask 130055
        %2828 = vst.msk [vmem:[%s385 - $0x7] sm:$0x80] %vm2827, %v2823
        %vm2829 = vcmask 129024
        %2830 = vst.msk [vmem:[%s385 + $0x1] sm:$0x7f] %vm2829, %v2824
        %s2831 = sld [smem:[#allocation8 + $0x1]]
        %v2832 = vstv %s2831
        %v2833 = vadd.f32 %v2758, %v2832
        %v2834 = vadd.f32 %v2759, %v2832
        %v2835 = vadd.f32 %v2760, %v2832
        %v2836 = vadd.f32 %v2761, %v2832
        %v2837 = vmax.f32 %v2833, 0.0
        %v2838 = vmax.f32 %v2834, 0.0
        %v2839 = vmax.f32 %v2835, 0.0
        %v2840 = vmax.f32 %v2836, 0.0
        %2845 = vrot.lane.b32.xlu0 %v2837, 1
        %v2846 = vpop.permute.xlu0 %2845
        %2847 = vrot.lane.b32.xlu0 %v2838, 1
        %v2848 = vpop.permute.xlu0 %2847
        %2849 = vrot.lane.b32.xlu0 %v2839, 1
        %v2850 = vpop.permute.xlu0 %2849
        %2851 = vrot.lane.b32.xlu0 %v2840, 1
        %v2852 = vpop.permute.xlu0 %2851
        %v2853 = vsel %vm2822, %v2846, %v2848
        %v2854 = vsel %vm2822, %v2850, %v2852
        %s2857 = scalar_lea.vmem %s385, 8 [#allocation13]
        %2858 = vst.msk [vmem:[%s2857 - $0x7] sm:$0x80] %vm2827, %v2853
        %2859 = vst.msk [vmem:[%s2857 + $0x1] sm:$0x7f] %vm2829, %v2854
        %s2860 = sld [smem:[#allocation8 + $0x2]]
        %v2861 = vstv %s2860
        %v2862 = vadd.f32 %v2777, %v2861
        %v2863 = vadd.f32 %v2778, %v2861
        %v2864 = vadd.f32 %v2779, %v2861
        %v2865 = vadd.f32 %v2780, %v2861
        %v2866 = vmax.f32 %v2862, 0.0
        %v2867 = vmax.f32 %v2863, 0.0
        %v2868 = vmax.f32 %v2864, 0.0
        %v2869 = vmax.f32 %v2865, 0.0
        %2874 = vrot.lane.b32.xlu0 %v2866, 1
        %v2875 = vpop.permute.xlu0 %2874
        %2876 = vrot.lane.b32.xlu0 %v2867, 1
        %v2877 = vpop.permute.xlu0 %2876
        %2878 = vrot.lane.b32.xlu0 %v2868, 1
        %v2879 = vpop.permute.xlu0 %2878
        %2880 = vrot.lane.b32.xlu0 %v2869, 1
        %v2881 = vpop.permute.xlu0 %2880
        %v2882 = vsel %vm2822, %v2875, %v2877
        %v2883 = vsel %vm2822, %v2879, %v2881
        %s2886 = scalar_lea.vmem %s385, 16 [#allocation13]
        %2887 = vst.msk [vmem:[%s2886 - $0x7] sm:$0x80] %vm2827, %v2882
        %2888 = vst.msk [vmem:[%s2886 + $0x1] sm:$0x7f] %vm2829, %v2883
        %s2889 = sld [smem:[#allocation8 + $0x3]]
        %v2890 = vstv %s2889
        %v2891 = vadd.f32 %v2796, %v2890
        %v2892 = vadd.f32 %v2797, %v2890
        %v2893 = vadd.f32 %v2798, %v2890
        %v2894 = vadd.f32 %v2799, %v2890
        %v2895 = vmax.f32 %v2891, 0.0
        %v2896 = vmax.f32 %v2892, 0.0
        %v2897 = vmax.f32 %v2893, 0.0
        %v2898 = vmax.f32 %v2894, 0.0
        %2903 = vrot.lane.b32.xlu0 %v2895, 1
        %v2904 = vpop.permute.xlu0 %2903
        %2905 = vrot.lane.b32.xlu0 %v2896, 1
        %v2906 = vpop.permute.xlu0 %2905
        %2907 = vrot.lane.b32.xlu0 %v2897, 1
        %v2908 = vpop.permute.xlu0 %2907
        %2909 = vrot.lane.b32.xlu0 %v2898, 1
        %v2910 = vpop.permute.xlu0 %2909
        %v2911 = vsel %vm2822, %v2904, %v2906
        %v2912 = vsel %vm2822, %v2908, %v2910
        %s2915 = scalar_lea.vmem %s385, 24 [#allocation13]
        %2916 = vst.msk [vmem:[%s2915 - $0x7] sm:$0x80] %vm2827, %v2911
        %2917 = vst.msk [vmem:[%s2915 + $0x1] sm:$0x7f] %vm2829, %v2912
        %s2918 = sand.u32 %s187, 1
        %s2919 = scalar_lea.sflag [#allocation5], %s2918
        %s2920 = sand.u32 %s187, 1
        %s2921 = smul.addr %s2920, 32
        %s2922 = scalar_lea.vmem [#allocation13], %s2921
        // Predicated region
        $region77: #{tpu_custom_call.1} parent=39 // pred_check
          %p2923 = pneg %p197
        $region78: #{tpu_custom_call.1} parent=39 // pred_check_branch
          %2925 = sbr.rel (%p2923) target = $region80
        $region79: #{tpu_custom_call.1} parent=39 // pred_region
          %s2927 = ssub.s32 512, 512
          %2928 = vsyncadd %s2919, %s2927
          %s2929 = smul.addr %s31, 8
          %s2930 = sadd.s32 %s32, %s2929
          %s2931 = smul.addr %s2930, 128
          %s2932 = scalar_lea.hbm %s5, %s2931
          %s2933 = sshll.u32 %s2922, 4
          %s2934 = int_to_ptr.vmem [resolvable:$true] %s2933
          %2939 = dma.vmem_to_hbm [thread:$0]  %s2934, 512, %s2932, %s2919, 128, 256, 8
        $region80: #{tpu_custom_call.1} parent=39 // pred_fallthru
          _
      $region40: #{tpu_custom_call.1} parent=5 // pred_fallthru
        _
      %p2940 = scmp.le.s32.totalorder 2, %s22
      // Predicated region
      $region81: #{tpu_custom_call.1} parent=5 // pred_check
        %p2941 = pneg %p2940
      $region82: #{tpu_custom_call.1} parent=5 // pred_check_branch
        %2943 = sbr.rel (%p2941) target = $region84
      $region83: #{tpu_custom_call.1} parent=5 // pred_region
        %s2944 = ssub.s32 %s22, 2
        // Predicated region
        $region85: #{tpu_custom_call.1} parent=83 // pred_check
          %p2945 = pneg %p203
        $region86: #{tpu_custom_call.1} parent=83 // pred_check_branch
          %2947 = sbr.rel (%p2945) target = $region88
        $region87: #{tpu_custom_call.1} parent=83 // pred_region
          %s2948 = sand.u32 %s188, 1
          %s2949 = scalar_lea.sflag [#allocation5], %s2948
          %s2950 = sand.u32 %s188, 1
          %s2951 = smul.addr %s2950, 32
          %s2952 = scalar_lea.vmem [#allocation13], %s2951
          %2953 = dma.done %s2949, 512
        $region88: #{tpu_custom_call.1} parent=83 // pred_fallthru
          _
      $region84: #{tpu_custom_call.1} parent=5 // pred_fallthru
        _
    $region6: #{tpu_custom_call.1} parent=1 // loop_footer
      %s26 = sadd.s32 1, %s22
    $region7: #{tpu_custom_call.1} parent=1 // loop_footer_branch
      %21 = sbr.rel target = $region3
    $region8: #{tpu_custom_call.1} parent=1 // loop_exit
      _
    %2954 = vsyncpa [#allocation4], 1
    %s2955 = scalar_lea.sflag [#allocation4], 1
    %2956 = vsyncpa %s2955, 1
    %2957 = vsyncpa [#allocation11], 1
    %s2958 = scalar_lea.sflag [#allocation11], 1
    %2959 = vsyncpa %s2958, 1
    %2960 = vsyncpa [#allocation5], 1
    %s2961 = scalar_lea.sflag [#allocation5], 1
    %2962 = vsyncpa %s2961, 1
    %2963 = vsyncpa [#allocation6], 1
    %s2964 = scalar_lea.sflag [#allocation6], 1
    %2965 = vsyncpa %s2964, 1
    %2966 = vsyncpa [#allocation7], 1
    %s2967 = scalar_lea.sflag [#allocation7], 1
    %2968 = vsyncpa %s2967, 1

</llo_original>
